<compile_context>
chip_gen: v7x
topology: tpu7x:2x2x1
jax: 0.10.0
libtpu: 0.0.40
codegen_flags: <defaults>
</compile_context>

<pallas_src>
import math
from functools import partial

import jax
import jax.numpy as jnp
from jax.experimental import pallas as pl
from jax.experimental.pallas import tpu as pltpu

D_MODEL = 32
N_HEAD = 8
HEAD_DIM = D_MODEL // N_HEAD
DIM_FF = 64
NUM_LAYERS = 2
LN_EPS = 1e-5  # PyTorch nn.LayerNorm default

_VMEM = pl.BlockSpec(memory_space=pltpu.MemorySpace.VMEM)


# ----------------------------- in-kernel helpers ----------------------------

def _layer_norm(x, gamma, beta):
    # One-pass statistics: sum(x) and sum(x*x) are data-independent reductions
    # and overlap in the XLU pipeline (vs. the serial two-pass chain).
    mean = jnp.mean(x, axis=-1, keepdims=True)
    mean_sq = jnp.mean(x * x, axis=-1, keepdims=True)
    var = mean_sq - mean * mean
    return (x - mean) * jax.lax.rsqrt(var + LN_EPS) * gamma + beta


def _mha(xq, xkv, wqkv, bqkv, wo, bo, mask_nd, mask_dn, B, S):
    """Multi-head cross attention on flat (B*S, D) activations.

    The 1/sqrt(head_dim) score scale is pre-folded into the Q columns of
    wqkv/bqkv, so no explicit scale multiply appears here.
    """
    BS = B * S
    N = N_HEAD * S  # expanded (head, key) axis

    # Fused QKV projection: one (2*B*S, D) x (D, 3D) matmul.  ~50% of the
    # projections are unused at these sizes; a single MXU push is still
    # cheaper than two.  Split into Q / KV matmuls if D_MODEL or S grows.
    xcat = jnp.concatenate([xq, xkv], axis=0)                        # (2BS, D)
    qkv = jnp.dot(xcat, wqkv, preferred_element_type=jnp.float32) + bqkv
    q = qkv[:BS, 0:D_MODEL].reshape(B, S, D_MODEL)                   # query tokens
    k = qkv[BS:, D_MODEL:2 * D_MODEL].reshape(B, S, D_MODEL)         # kv tokens
    v = qkv[BS:, 2 * D_MODEL:3 * D_MODEL].reshape(B, S, D_MODEL)

    # Head expansion.  K is transposed once (small tensor) and tiled along the
    # LANE axis so the score matmul needs no in-matmul relayout; row/col
    # n = h*S + key carries key `key` masked to head h's feature columns.
    k_t = jnp.transpose(k, (0, 2, 1))                                # (B, D, S)
    k_exp_t = jnp.tile(k_t, (1, 1, N_HEAD)) * mask_dn[None]          # (B, D, N)
    v_exp = jnp.tile(v, (1, N_HEAD, 1)) * mask_nd[None]              # (B, N, D)

    s = jnp.einsum('bqd,bdn->bqn', q, k_exp_t,
                   preferred_element_type=jnp.float32)               # (B, S, N)
    # Row-global max is constant within each per-head segment -> valid
    # stabilizer for the segment-wise softmax.
    s = s - jnp.max(s, axis=-1, keepdims=True)
    p = jnp.exp(s)                                                   # un-normalized

    # Per-head softmax denominators broadcast to that head's feature columns:
    # one (BS, N) x (N, D) matmul against the head-ownership mask.
    denom = jnp.dot(p.reshape(BS, N), mask_nd,
                    preferred_element_type=jnp.float32)              # (BS, D)

    # TODO(synk): attention-prob dropout skipped (eval-mode identity).
    o = jnp.einsum('bqn,bnd->bqd', p, v_exp,
                   preferred_element_type=jnp.float32).reshape(BS, D_MODEL)
    o = o * pl.reciprocal(denom, approx=True)                        # normalize
    return jnp.dot(o, wo, preferred_element_type=jnp.float32) + bo


def _ffn(x, w1, b1, w2, b2):
    h = jnp.dot(x, w1, preferred_element_type=jnp.float32) + b1
    h = jnp.maximum(h, 0.0)
    return jnp.dot(h, w2, preferred_element_type=jnp.float32) + b2


# ----------------------------- fused kernel ---------------------------------

def fused_kernel(x1_ref, x2_ref, pe_ref, masknd_ref, maskdn_ref,
                 wqkv_ref, bqkv_ref, wo_ref, bo_ref, gca_ref, bca_ref,
                 w1_ref, b1_ref, w2_ref, b2_ref, gff_ref, bff_ref,
                 out1_ref, out2_ref, *, B, S):
    pe = pe_ref[...]
    x1 = x1_ref[...].astype(jnp.float32) + pe        # (B*S, D) + pos. encoding
    x2 = x2_ref[...].astype(jnp.float32) + pe
    mask_nd = masknd_ref[...]                        # (H*S, D)
    mask_dn = maskdn_ref[...]                        # (D, H*S)

    for l in range(NUM_LAYERS):                      # static unroll; the same
        wqkv, bqkv = wqkv_ref[l], bqkv_ref[l]        # layer weights are reused
        wo, bo = wo_ref[l], bo_ref[l]                # for both directions, as
        gca, bca = gca_ref[l], bca_ref[l]            # in the PyTorch reference.
        w1, b1 = w1_ref[l], b1_ref[l]
        w2, b2 = w2_ref[l], b2_ref[l]
        gff, bff = gff_ref[l], bff_ref[l]

        # x1 = CA_l(query=x2, key=value=x1); residual on the query, then LN.
        x1 = _layer_norm(x2 + _mha(x2, x1, wqkv, bqkv, wo, bo,
                                   mask_nd, mask_dn, B, S), gca, bca)
        # x1 = norm_l(x1 + FF_l(x1))
        x1 = _layer_norm(x1 + _ffn(x1, w1, b1, w2, b2), gff, bff)
        # x2 = CA_l(query=x1 (already updated), key=value=x2)
        x2 = _layer_norm(x1 + _mha(x1, x2, wqkv, bqkv, wo, bo,
                                   mask_nd, mask_dn, B, S), gca, bca)
        # x2 = norm_l(x2 + FF_l(x2))
        x2 = _layer_norm(x2 + _ffn(x2, w1, b1, w2, b2), gff, bff)

    out1_ref[...] = x1.astype(out1_ref.dtype)
    out2_ref[...] = x2.astype(out2_ref.dtype)


# ----------------------------- wrapper ---------------------------------------

def _on_v7x():
    try:
        return "v7" in jax.devices()[0].device_kind.lower()
    except Exception:
        return False


# v7x has 2 TensorCores/chip -> shard the (independent) batch axis there.
# On single-TC v5e/v6e a grid is just a serial loop; keep one fused invocation.
_USE_BATCH_GRID = _on_v7x()


def transformer_cross_attn(x1, x2, params, consts):
    """Matches TransformerCrossAttn.forward (dropout = identity, eval mode)."""
    B, S, D = x1.shape
    assert D == D_MODEL
    pe_flat, mask_nd, mask_dn = consts
    args = (x1.reshape(B * S, D), x2.reshape(B * S, D),
            pe_flat, mask_nd, mask_dn,
            params['wqkv'], params['bqkv'], params['wo'], params['bo'],
            params['ln_ca_g'], params['ln_ca_b'],
            params['w1'], params['b1'], params['w2'], params['b2'],
            params['ln_ff_g'], params['ln_ff_b'])
    out_shape = (jax.ShapeDtypeStruct((B * S, D), x1.dtype),
                 jax.ShapeDtypeStruct((B * S, D), x2.dtype))

    if _USE_BATCH_GRID and B > 1:
        # v7x: batch-parallel grid across both TensorCores.
        act_spec = pl.BlockSpec((S, D), lambda b: (b, 0))

        def resident(a):  # whole array resident (block index constant)
            nd = a.ndim
            return pl.BlockSpec(a.shape, lambda b, _nd=nd: (0,) * _nd)

        in_specs = [act_spec, act_spec, act_spec] + [resident(a) for a in args[3:]]
        out1, out2 = pl.pallas_call(
            partial(fused_kernel, B=1, S=S),
            grid=(B,),
            out_shape=out_shape,
            in_specs=in_specs,
            out_specs=(act_spec, act_spec),
            compiler_params=pltpu.CompilerParams(
                dimension_semantics=("parallel",)),
        )(*args)
    else:
        # v5e/v6e: single fused invocation, everything resident in VMEM.
        out1, out2 = pl.pallas_call(
            partial(fused_kernel, B=B, S=S),
            out_shape=out_shape,
            in_specs=[_VMEM] * len(args),
            out_specs=(_VMEM, _VMEM),
        )(*args)
    return out1.reshape(B, S, D), out2.reshape(B, S, D)


transformer_cross_attn = jax.jit(transformer_cross_attn)


# ----------------------------- setup-time constants --------------------------

def positional_encoding(seq_len, d_model):
    position = jnp.arange(seq_len, dtype=jnp.float32)[:, None]
    div_term = jnp.exp(jnp.arange(0, d_model, 2, dtype=jnp.float32)
                       * (-math.log(10000.0) / d_model))
    pe = jnp.zeros((seq_len, d_model), jnp.float32)
    pe = pe.at[:, 0::2].set(jnp.sin(position * div_term))
    pe = pe.at[:, 1::2].set(jnp.cos(position * div_term))
    return pe  # (S, D)


def make_constants(B, S):
    """Computed once per (B, S); passed to the kernel as VMEM constants."""
    pe_flat = jnp.tile(positional_encoding(S, D_MODEL), (B, 1))   # (B*S, D)
    head_of_n = jnp.arange(N_HEAD * S) // S        # head owning expanded row n
    head_of_d = jnp.arange(D_MODEL) // HEAD_DIM    # head owning feature col d
    mask_nd = (head_of_n[:, None] == head_of_d[None, :]).astype(jnp.float32)
    mask_dn = mask_nd.T                                            # (D, H*S)
    return pe_flat, mask_nd, mask_dn


# ----------------------------- parameter init --------------------------------

def _init_linear(key, n_in, n_out):
    w = jax.random.normal(key, (n_in, n_out), jnp.float32) * 0.05
    b = jnp.zeros((1, n_out), jnp.float32)
    return w, b


def init_params(key):
    names = ('wqkv', 'bqkv', 'wo', 'bo', 'ln_ca_g', 'ln_ca_b',
             'w1', 'b1', 'w2', 'b2', 'ln_ff_g', 'ln_ff_b')
    per = {k: [] for k in names}
    scale = 1.0 / math.sqrt(HEAD_DIM)
    for i in range(NUM_LAYERS):
        keys = jax.random.split(jax.random.fold_in(key, i), 6)
        wq, bq = _init_linear(keys[0], D_MODEL, D_MODEL)
        wk, bk = _init_linear(keys[1], D_MODEL, D_MODEL)
        wv, bv = _init_linear(keys[2], D_MODEL, D_MODEL)
        wo, bo = _init_linear(keys[3], D_MODEL, D_MODEL)
        w1, b1 = _init_linear(keys[4], D_MODEL, DIM_FF)
        w2, b2 = _init_linear(keys[5], DIM_FF, D_MODEL)
        # Fold the 1/sqrt(head_dim) attention score scale into the Q projection.
        wq, bq = wq * scale, bq * scale
        per['wqkv'].append(jnp.concatenate([wq, wk, wv], axis=1))  # (D, 3D)
        per['bqkv'].append(jnp.concatenate([bq, bk, bv], axis=1))  # (1, 3D)
        per['wo'].append(wo)
        per['bo'].append(bo)
        per['ln_ca_g'].append(jnp.ones((1, D_MODEL), jnp.float32))
        per['ln_ca_b'].append(jnp.zeros((1, D_MODEL), jnp.float32))
        per['w1'].append(w1)
        per['b1'].append(b1)
        per['w2'].append(w2)
        per['b2'].append(b2)
        per['ln_ff_g'].append(jnp.ones((1, D_MODEL), jnp.float32))
        per['ln_ff_b'].append(jnp.zeros((1, D_MODEL), jnp.float32))
    return {k: jnp.stack(v, axis=0) for k, v in per.items()}


# ----------------------------- pure-JAX reference ----------------------------

def _reference(x1, x2, params):
    """Mirror of the PyTorch forward (eval mode, dropout = identity).
    Note: params already carry 1/sqrt(head_dim) folded into the Q projection,
    so the explicit score divide is omitted (mathematically identical)."""
    B, S, D = x1.shape
    pe = positional_encoding(S, D)[None]
    x1 = x1 + pe
    x2 = x2 + pe

    def layer_norm(x, g, b):
        m = jnp.mean(x, axis=-1, keepdims=True)
        v = jnp.mean((x - m) ** 2, axis=-1, keepdims=True)
        return (x - m) / jnp.sqrt(v + LN_EPS) * g + b

    def mha(q_in, kv_in, wqkv, bqkv, wo, bo):
        wq, wk, wv = jnp.split(wqkv, 3, axis=1)
        bq, bk, bv = jnp.split(bqkv, 3, axis=1)
        q = (q_in @ wq + bq).reshape(B, S, N_HEAD, HEAD_DIM).transpose(0, 2, 1, 3)
        k = (kv_in @ wk + bk).reshape(B, S, N_HEAD, HEAD_DIM).transpose(0, 2, 1, 3)
        v = (kv_in @ wv + bv).reshape(B, S, N_HEAD, HEAD_DIM).transpose(0, 2, 1, 3)
        s = jnp.einsum('bhqd,bhkd->bhqk', q, k)
        p = jax.nn.softmax(s, axis=-1)
        o = jnp.einsum('bhqk,bhkd->bhqd', p, v)
        o = o.transpose(0, 2, 1, 3).reshape(B, S, D)
        return o @ wo + bo

    def ffn(x, w1, b1, w2, b2):
        return jnp.maximum(x @ w1 + b1, 0.0) @ w2 + b2

    for l in range(NUM_LAYERS):
        wqkv, bqkv = params['wqkv'][l], params['bqkv'][l]
        wo, bo = params['wo'][l], params['bo'][l]
        gca, bca = params['ln_ca_g'][l], params['ln_ca_b'][l]
        w1, b1 = params['w1'][l], params['b1'][l]
        w2, b2 = params['w2'][l], params['b2'][l]
        gff, bff = params['ln_ff_g'][l], params['ln_ff_b'][l]

        x1 = layer_norm(x2 + mha(x2, x1, wqkv, bqkv, wo, bo), gca, bca)
        x1 = layer_norm(x1 + ffn(x1, w1, b1, w2, b2), gff, bff)
        x2 = layer_norm(x1 + mha(x1, x2, wqkv, bqkv, wo, bo), gca, bca)
        x2 = layer_norm(x2 + ffn(x2, w1, b1, w2, b2), gff, bff)
    return x1, x2


# ----------------------------- main -------------------------------------------

if __name__ == "__main__":
    key = jax.random.PRNGKey(0)
    k1, k2, kp = jax.random.split(key, 3)
    B, S = 2, 8
    x1 = jax.random.normal(k1, (B, S, D_MODEL), jnp.float32)
    x2 = jax.random.normal(k2, (B, S, D_MODEL), jnp.float32)
    params = init_params(kp)
    consts = make_constants(B, S)

    y1, y2 = transformer_cross_attn(x1, x2, params, consts)
    jax.block_until_ready((y1, y2))
    assert y1.shape == (B, S, D_MODEL) and y2.shape == (B, S, D_MODEL)
    assert bool(jnp.all(jnp.isfinite(y1))) and bool(jnp.all(jnp.isfinite(y2)))

    # Correctness vs. a pure-JAX mirror of the PyTorch forward (loose tolerance
    # covers the approximate EUP reciprocal and one-pass LayerNorm statistics).
    r1, r2 = _reference(x1, x2, params)
    assert bool(jnp.allclose(y1, r1, rtol=5e-2, atol=5e-2))
    assert bool(jnp.allclose(y2, r2, rtol=5e-2, atol=5e-2))
    print("KERNEL_OK")
</pallas_src>

<mosaic_0001>
module attributes {stable_mosaic.version = 11 : i64} {
  func.func @fused_kernel(%arg0: memref<16x32xf32, #tpu.memory_space<vmem>>, %arg1: memref<16x32xf32, #tpu.memory_space<vmem>>, %arg2: memref<16x32xf32, #tpu.memory_space<vmem>>, %arg3: memref<64x32xf32, #tpu.memory_space<vmem>>, %arg4: memref<32x64xf32, #tpu.memory_space<vmem>>, %arg5: memref<2x32x96xf32, #tpu.memory_space<vmem>>, %arg6: memref<2x1x96xf32, #tpu.memory_space<vmem>>, %arg7: memref<2x32x32xf32, #tpu.memory_space<vmem>>, %arg8: memref<2x1x32xf32, #tpu.memory_space<vmem>>, %arg9: memref<2x1x32xf32, #tpu.memory_space<vmem>>, %arg10: memref<2x1x32xf32, #tpu.memory_space<vmem>>, %arg11: memref<2x32x64xf32, #tpu.memory_space<vmem>>, %arg12: memref<2x1x64xf32, #tpu.memory_space<vmem>>, %arg13: memref<2x64x32xf32, #tpu.memory_space<vmem>>, %arg14: memref<2x1x32xf32, #tpu.memory_space<vmem>>, %arg15: memref<2x1x32xf32, #tpu.memory_space<vmem>>, %arg16: memref<2x1x32xf32, #tpu.memory_space<vmem>>, %arg17: memref<16x32xf32, #tpu.memory_space<vmem>>, %arg18: memref<16x32xf32, #tpu.memory_space<vmem>>) attributes {dimension_semantics = [], scalar_prefetch = 0 : i64, scratch_operands = 0 : i64, tpu.core_type = #tpu.core_type<tc>} {
    %c0 = arith.constant 0 : index
    %c0_0 = arith.constant 0 : index
    %0 = vector.load %arg2[%c0, %c0_0] : memref<16x32xf32, #tpu.memory_space<vmem>>, vector<16x32xf32>
    %c0_1 = arith.constant 0 : index
    %c0_2 = arith.constant 0 : index
    %1 = vector.load %arg0[%c0_1, %c0_2] : memref<16x32xf32, #tpu.memory_space<vmem>>, vector<16x32xf32>
    %2 = arith.addf %1, %0 : vector<16x32xf32>
    %c0_3 = arith.constant 0 : index
    %c0_4 = arith.constant 0 : index
    %3 = vector.load %arg1[%c0_3, %c0_4] : memref<16x32xf32, #tpu.memory_space<vmem>>, vector<16x32xf32>
    %4 = arith.addf %3, %0 : vector<16x32xf32>
    %c0_5 = arith.constant 0 : index
    %c0_6 = arith.constant 0 : index
    %5 = vector.load %arg3[%c0_5, %c0_6] : memref<64x32xf32, #tpu.memory_space<vmem>>, vector<64x32xf32>
    %c0_7 = arith.constant 0 : index
    %c0_8 = arith.constant 0 : index
    %6 = vector.load %arg4[%c0_7, %c0_8] : memref<32x64xf32, #tpu.memory_space<vmem>>, vector<32x64xf32>
    %c0_9 = arith.constant 0 : index
    %c0_10 = arith.constant 0 : index
    %c0_11 = arith.constant 0 : index
    %7 = vector.load %arg5[%c0_9, %c0_10, %c0_11] : memref<2x32x96xf32, #tpu.memory_space<vmem>>, vector<1x32x96xf32>
    %8 = vector.shape_cast %7 : vector<1x32x96xf32> to vector<32x96xf32>
    %c0_12 = arith.constant 0 : index
    %c0_13 = arith.constant 0 : index
    %c0_14 = arith.constant 0 : index
    %9 = vector.load %arg6[%c0_12, %c0_13, %c0_14] : memref<2x1x96xf32, #tpu.memory_space<vmem>>, vector<1x1x96xf32>
    %10 = vector.shape_cast %9 : vector<1x1x96xf32> to vector<1x96xf32>
    %c0_15 = arith.constant 0 : index
    %c0_16 = arith.constant 0 : index
    %c0_17 = arith.constant 0 : index
    %11 = vector.load %arg7[%c0_15, %c0_16, %c0_17] : memref<2x32x32xf32, #tpu.memory_space<vmem>>, vector<1x32x32xf32>
    %12 = vector.shape_cast %11 : vector<1x32x32xf32> to vector<32x32xf32>
    %c0_18 = arith.constant 0 : index
    %c0_19 = arith.constant 0 : index
    %c0_20 = arith.constant 0 : index
    %13 = vector.load %arg8[%c0_18, %c0_19, %c0_20] : memref<2x1x32xf32, #tpu.memory_space<vmem>>, vector<1x1x32xf32>
    %14 = vector.shape_cast %13 : vector<1x1x32xf32> to vector<1x32xf32>
    %c0_21 = arith.constant 0 : index
    %c0_22 = arith.constant 0 : index
    %c0_23 = arith.constant 0 : index
    %15 = vector.load %arg9[%c0_21, %c0_22, %c0_23] : memref<2x1x32xf32, #tpu.memory_space<vmem>>, vector<1x1x32xf32>
    %16 = vector.shape_cast %15 : vector<1x1x32xf32> to vector<1x32xf32>
    %c0_24 = arith.constant 0 : index
    %c0_25 = arith.constant 0 : index
    %c0_26 = arith.constant 0 : index
    %17 = vector.load %arg10[%c0_24, %c0_25, %c0_26] : memref<2x1x32xf32, #tpu.memory_space<vmem>>, vector<1x1x32xf32>
    %18 = vector.shape_cast %17 : vector<1x1x32xf32> to vector<1x32xf32>
    %c0_27 = arith.constant 0 : index
    %c0_28 = arith.constant 0 : index
    %c0_29 = arith.constant 0 : index
    %19 = vector.load %arg11[%c0_27, %c0_28, %c0_29] : memref<2x32x64xf32, #tpu.memory_space<vmem>>, vector<1x32x64xf32>
    %20 = vector.shape_cast %19 : vector<1x32x64xf32> to vector<32x64xf32>
    %c0_30 = arith.constant 0 : index
    %c0_31 = arith.constant 0 : index
    %c0_32 = arith.constant 0 : index
    %21 = vector.load %arg12[%c0_30, %c0_31, %c0_32] : memref<2x1x64xf32, #tpu.memory_space<vmem>>, vector<1x1x64xf32>
    %22 = vector.shape_cast %21 : vector<1x1x64xf32> to vector<1x64xf32>
    %c0_33 = arith.constant 0 : index
    %c0_34 = arith.constant 0 : index
    %c0_35 = arith.constant 0 : index
    %23 = vector.load %arg13[%c0_33, %c0_34, %c0_35] : memref<2x64x32xf32, #tpu.memory_space<vmem>>, vector<1x64x32xf32>
    %24 = vector.shape_cast %23 : vector<1x64x32xf32> to vector<64x32xf32>
    %c0_36 = arith.constant 0 : index
    %c0_37 = arith.constant 0 : index
    %c0_38 = arith.constant 0 : index
    %25 = vector.load %arg14[%c0_36, %c0_37, %c0_38] : memref<2x1x32xf32, #tpu.memory_space<vmem>>, vector<1x1x32xf32>
    %26 = vector.shape_cast %25 : vector<1x1x32xf32> to vector<1x32xf32>
    %c0_39 = arith.constant 0 : index
    %c0_40 = arith.constant 0 : index
    %c0_41 = arith.constant 0 : index
    %27 = vector.load %arg15[%c0_39, %c0_40, %c0_41] : memref<2x1x32xf32, #tpu.memory_space<vmem>>, vector<1x1x32xf32>
    %28 = vector.shape_cast %27 : vector<1x1x32xf32> to vector<1x32xf32>
    %c0_42 = arith.constant 0 : index
    %c0_43 = arith.constant 0 : index
    %c0_44 = arith.constant 0 : index
    %29 = vector.load %arg16[%c0_42, %c0_43, %c0_44] : memref<2x1x32xf32, #tpu.memory_space<vmem>>, vector<1x1x32xf32>
    %30 = vector.shape_cast %29 : vector<1x1x32xf32> to vector<1x32xf32>
    %31 = tpu.concatenate %4, %2 in 0 : vector<16x32xf32>, vector<16x32xf32> -> vector<32x32xf32>
    %cst = arith.constant dense<0.000000e+00> : vector<32x96xf32>
    %32 = tpu.matmul %31, %8, %cst {dimension_numbers = #tpu.dot_dimension_numbers<[1], [0], [0], [1], [0, 0, 1, 1], [], []>} : vector<32x32xf32>, vector<32x96xf32>, vector<32x96xf32> -> vector<32x96xf32>
    %33 = vector.broadcast %10 : vector<1x96xf32> to vector<32x96xf32>
    %34 = arith.addf %32, %33 : vector<32x96xf32>
    %35 = vector.extract_strided_slice %34 {offsets = [0, 0], sizes = [16, 32], strides = [1, 1]} : vector<32x96xf32> to vector<16x32xf32>
    %36 = vector.shape_cast %35 : vector<16x32xf32> to vector<2x8x32xf32>
    %37 = vector.extract_strided_slice %34 {offsets = [16, 32], sizes = [16, 32], strides = [1, 1]} : vector<32x96xf32> to vector<16x32xf32>
    %38 = vector.shape_cast %37 : vector<16x32xf32> to vector<2x8x32xf32>
    %39 = vector.extract_strided_slice %34 {offsets = [16, 64], sizes = [16, 32], strides = [1, 1]} : vector<32x96xf32> to vector<16x32xf32>
    %40 = vector.shape_cast %39 : vector<16x32xf32> to vector<2x8x32xf32>
    %41 = tpu.transpose %38, [0, 2, 1] : vector<2x8x32xf32> -> vector<2x32x8xf32>
    %42 = tpu.concatenate %41, %41, %41, %41, %41, %41, %41, %41 in 2 : vector<2x32x8xf32>, vector<2x32x8xf32>, vector<2x32x8xf32>, vector<2x32x8xf32>, vector<2x32x8xf32>, vector<2x32x8xf32>, vector<2x32x8xf32>, vector<2x32x8xf32> -> vector<2x32x64xf32>
    %43 = vector.shape_cast %6 : vector<32x64xf32> to vector<1x32x64xf32>
    %44 = vector.broadcast %43 : vector<1x32x64xf32> to vector<2x32x64xf32>
    %45 = arith.mulf %42, %44 : vector<2x32x64xf32>
    %46 = tpu.concatenate %40, %40, %40, %40, %40, %40, %40, %40 in 1 : vector<2x8x32xf32>, vector<2x8x32xf32>, vector<2x8x32xf32>, vector<2x8x32xf32>, vector<2x8x32xf32>, vector<2x8x32xf32>, vector<2x8x32xf32>, vector<2x8x32xf32> -> vector<2x64x32xf32>
    %47 = vector.shape_cast %5 : vector<64x32xf32> to vector<1x64x32xf32>
    %48 = vector.broadcast %47 : vector<1x64x32xf32> to vector<2x64x32xf32>
    %49 = arith.mulf %46, %48 : vector<2x64x32xf32>
    "tpu.trace_start"() <{level = 10 : i32, message = "bqd,bdn->bqn"}> : () -> ()
    %cst_45 = arith.constant dense<0.000000e+00> : vector<2x8x64xf32>
    %50 = tpu.matmul %36, %45, %cst_45 {dimension_numbers = #tpu.dot_dimension_numbers<[2], [1], [1], [2], [0, 0, 0, 1, 1, 2], [0], [0]>} : vector<2x8x32xf32>, vector<2x32x64xf32>, vector<2x8x64xf32> -> vector<2x8x64xf32>
    "tpu.trace_stop"() : () -> ()
    %cst_46 = arith.constant dense<0xFF800000> : vector<2x8xf32>
    %51 = vector.multi_reduction <maximumf>, %50, %cst_46 [2] : vector<2x8x64xf32> to vector<2x8xf32>
    %52 = vector.shape_cast %51 : vector<2x8xf32> to vector<2x8x1xf32>
    %53 = vector.broadcast %52 : vector<2x8x1xf32> to vector<2x8x64xf32>
    %54 = arith.subf %50, %53 : vector<2x8x64xf32>
    %55 = math.exp %54 : vector<2x8x64xf32>
    %56 = vector.shape_cast %55 : vector<2x8x64xf32> to vector<16x64xf32>
    %cst_47 = arith.constant dense<0.000000e+00> : vector<16x32xf32>
    %57 = tpu.matmul %56, %5, %cst_47 {dimension_numbers = #tpu.dot_dimension_numbers<[1], [0], [0], [1], [0, 0, 1, 1], [], []>} : vector<16x64xf32>, vector<64x32xf32>, vector<16x32xf32> -> vector<16x32xf32>
    "tpu.trace_start"() <{level = 10 : i32, message = "bqn,bnd->bqd"}> : () -> ()
    %cst_48 = arith.constant dense<0.000000e+00> : vector<2x8x32xf32>
    %58 = tpu.matmul %55, %49, %cst_48 {dimension_numbers = #tpu.dot_dimension_numbers<[2], [1], [1], [2], [0, 0, 0, 1, 1, 2], [0], [0]>} : vector<2x8x64xf32>, vector<2x64x32xf32>, vector<2x8x32xf32> -> vector<2x8x32xf32>
    "tpu.trace_stop"() : () -> ()
    %59 = vector.shape_cast %58 : vector<2x8x32xf32> to vector<16x32xf32>
    %60 = tpu.reciprocal %57 {approx = true} : vector<16x32xf32> -> vector<16x32xf32>
    %61 = arith.mulf %59, %60 : vector<16x32xf32>
    %cst_49 = arith.constant dense<0.000000e+00> : vector<16x32xf32>
    %62 = tpu.matmul %61, %12, %cst_49 {dimension_numbers = #tpu.dot_dimension_numbers<[1], [0], [0], [1], [0, 0, 1, 1], [], []>} : vector<16x32xf32>, vector<32x32xf32>, vector<16x32xf32> -> vector<16x32xf32>
    %63 = vector.broadcast %14 : vector<1x32xf32> to vector<16x32xf32>
    %64 = arith.addf %62, %63 : vector<16x32xf32>
    %65 = arith.addf %4, %64 : vector<16x32xf32>
    %cst_50 = arith.constant dense<0.000000e+00> : vector<16xf32>
    %66 = vector.multi_reduction <add>, %65, %cst_50 [1] : vector<16x32xf32> to vector<16xf32>
    %67 = vector.shape_cast %66 : vector<16xf32> to vector<16x1xf32>
    %cst_51 = arith.constant 3.200000e+01 : f32
    %68 = vector.broadcast %cst_51 : f32 to vector<16x1xf32>
    %69 = arith.divf %67, %68 : vector<16x1xf32>
    %70 = arith.mulf %65, %65 : vector<16x32xf32>
    %cst_52 = arith.constant dense<0.000000e+00> : vector<16xf32>
    %71 = vector.multi_reduction <add>, %70, %cst_52 [1] : vector<16x32xf32> to vector<16xf32>
    %72 = vector.shape_cast %71 : vector<16xf32> to vector<16x1xf32>
    %cst_53 = arith.constant 3.200000e+01 : f32
    %73 = vector.broadcast %cst_53 : f32 to vector<16x1xf32>
    %74 = arith.divf %72, %73 : vector<16x1xf32>
    %75 = arith.mulf %69, %69 : vector<16x1xf32>
    %76 = arith.subf %74, %75 : vector<16x1xf32>
    %77 = vector.broadcast %69 : vector<16x1xf32> to vector<16x32xf32>
    %78 = arith.subf %65, %77 : vector<16x32xf32>
    %cst_54 = arith.constant 9.99999974E-6 : f32
    %79 = vector.broadcast %cst_54 : f32 to vector<16x1xf32>
    %80 = arith.addf %76, %79 : vector<16x1xf32>
    %81 = math.rsqrt %80 : vector<16x1xf32>
    %82 = vector.broadcast %81 : vector<16x1xf32> to vector<16x32xf32>
    %83 = arith.mulf %78, %82 : vector<16x32xf32>
    %84 = vector.broadcast %16 : vector<1x32xf32> to vector<16x32xf32>
    %85 = arith.mulf %83, %84 : vector<16x32xf32>
    %86 = vector.broadcast %18 : vector<1x32xf32> to vector<16x32xf32>
    %87 = arith.addf %85, %86 : vector<16x32xf32>
    %cst_55 = arith.constant dense<0.000000e+00> : vector<16x64xf32>
    %88 = tpu.matmul %87, %20, %cst_55 {dimension_numbers = #tpu.dot_dimension_numbers<[1], [0], [0], [1], [0, 0, 1, 1], [], []>} : vector<16x32xf32>, vector<32x64xf32>, vector<16x64xf32> -> vector<16x64xf32>
    %89 = vector.broadcast %22 : vector<1x64xf32> to vector<16x64xf32>
    %90 = arith.addf %88, %89 : vector<16x64xf32>
    %cst_56 = arith.constant 0.000000e+00 : f32
    %91 = vector.broadcast %cst_56 : f32 to vector<16x64xf32>
    %92 = arith.maximumf %90, %91 : vector<16x64xf32>
    %cst_57 = arith.constant dense<0.000000e+00> : vector<16x32xf32>
    %93 = tpu.matmul %92, %24, %cst_57 {dimension_numbers = #tpu.dot_dimension_numbers<[1], [0], [0], [1], [0, 0, 1, 1], [], []>} : vector<16x64xf32>, vector<64x32xf32>, vector<16x32xf32> -> vector<16x32xf32>
    %94 = vector.broadcast %26 : vector<1x32xf32> to vector<16x32xf32>
    %95 = arith.addf %93, %94 : vector<16x32xf32>
    %96 = arith.addf %87, %95 : vector<16x32xf32>
    %cst_58 = arith.constant dense<0.000000e+00> : vector<16xf32>
    %97 = vector.multi_reduction <add>, %96, %cst_58 [1] : vector<16x32xf32> to vector<16xf32>
    %98 = vector.shape_cast %97 : vector<16xf32> to vector<16x1xf32>
    %cst_59 = arith.constant 3.200000e+01 : f32
    %99 = vector.broadcast %cst_59 : f32 to vector<16x1xf32>
    %100 = arith.divf %98, %99 : vector<16x1xf32>
    %101 = arith.mulf %96, %96 : vector<16x32xf32>
    %cst_60 = arith.constant dense<0.000000e+00> : vector<16xf32>
    %102 = vector.multi_reduction <add>, %101, %cst_60 [1] : vector<16x32xf32> to vector<16xf32>
    %103 = vector.shape_cast %102 : vector<16xf32> to vector<16x1xf32>
    %cst_61 = arith.constant 3.200000e+01 : f32
    %104 = vector.broadcast %cst_61 : f32 to vector<16x1xf32>
    %105 = arith.divf %103, %104 : vector<16x1xf32>
    %106 = arith.mulf %100, %100 : vector<16x1xf32>
    %107 = arith.subf %105, %106 : vector<16x1xf32>
    %108 = vector.broadcast %100 : vector<16x1xf32> to vector<16x32xf32>
    %109 = arith.subf %96, %108 : vector<16x32xf32>
    %cst_62 = arith.constant 9.99999974E-6 : f32
    %110 = vector.broadcast %cst_62 : f32 to vector<16x1xf32>
    %111 = arith.addf %107, %110 : vector<16x1xf32>
    %112 = math.rsqrt %111 : vector<16x1xf32>
    %113 = vector.broadcast %112 : vector<16x1xf32> to vector<16x32xf32>
    %114 = arith.mulf %109, %113 : vector<16x32xf32>
    %115 = vector.broadcast %28 : vector<1x32xf32> to vector<16x32xf32>
    %116 = arith.mulf %114, %115 : vector<16x32xf32>
    %117 = vector.broadcast %30 : vector<1x32xf32> to vector<16x32xf32>
    %118 = arith.addf %116, %117 : vector<16x32xf32>
    %119 = tpu.concatenate %118, %4 in 0 : vector<16x32xf32>, vector<16x32xf32> -> vector<32x32xf32>
    %cst_63 = arith.constant dense<0.000000e+00> : vector<32x96xf32>
    %120 = tpu.matmul %119, %8, %cst_63 {dimension_numbers = #tpu.dot_dimension_numbers<[1], [0], [0], [1], [0, 0, 1, 1], [], []>} : vector<32x32xf32>, vector<32x96xf32>, vector<32x96xf32> -> vector<32x96xf32>
    %121 = vector.broadcast %10 : vector<1x96xf32> to vector<32x96xf32>
    %122 = arith.addf %120, %121 : vector<32x96xf32>
    %123 = vector.extract_strided_slice %122 {offsets = [0, 0], sizes = [16, 32], strides = [1, 1]} : vector<32x96xf32> to vector<16x32xf32>
    %124 = vector.shape_cast %123 : vector<16x32xf32> to vector<2x8x32xf32>
    %125 = vector.extract_strided_slice %122 {offsets = [16, 32], sizes = [16, 32], strides = [1, 1]} : vector<32x96xf32> to vector<16x32xf32>
    %126 = vector.shape_cast %125 : vector<16x32xf32> to vector<2x8x32xf32>
    %127 = vector.extract_strided_slice %122 {offsets = [16, 64], sizes = [16, 32], strides = [1, 1]} : vector<32x96xf32> to vector<16x32xf32>
    %128 = vector.shape_cast %127 : vector<16x32xf32> to vector<2x8x32xf32>
    %129 = tpu.transpose %126, [0, 2, 1] : vector<2x8x32xf32> -> vector<2x32x8xf32>
    %130 = tpu.concatenate %129, %129, %129, %129, %129, %129, %129, %129 in 2 : vector<2x32x8xf32>, vector<2x32x8xf32>, vector<2x32x8xf32>, vector<2x32x8xf32>, vector<2x32x8xf32>, vector<2x32x8xf32>, vector<2x32x8xf32>, vector<2x32x8xf32> -> vector<2x32x64xf32>
    %131 = vector.shape_cast %6 : vector<32x64xf32> to vector<1x32x64xf32>
    %132 = vector.broadcast %131 : vector<1x32x64xf32> to vector<2x32x64xf32>
    %133 = arith.mulf %130, %132 : vector<2x32x64xf32>
    %134 = tpu.concatenate %128, %128, %128, %128, %128, %128, %128, %128 in 1 : vector<2x8x32xf32>, vector<2x8x32xf32>, vector<2x8x32xf32>, vector<2x8x32xf32>, vector<2x8x32xf32>, vector<2x8x32xf32>, vector<2x8x32xf32>, vector<2x8x32xf32> -> vector<2x64x32xf32>
    %135 = vector.shape_cast %5 : vector<64x32xf32> to vector<1x64x32xf32>
    %136 = vector.broadcast %135 : vector<1x64x32xf32> to vector<2x64x32xf32>
    %137 = arith.mulf %134, %136 : vector<2x64x32xf32>
    "tpu.trace_start"() <{level = 10 : i32, message = "bqd,bdn->bqn"}> : () -> ()
    %cst_64 = arith.constant dense<0.000000e+00> : vector<2x8x64xf32>
    %138 = tpu.matmul %124, %133, %cst_64 {dimension_numbers = #tpu.dot_dimension_numbers<[2], [1], [1], [2], [0, 0, 0, 1, 1, 2], [0], [0]>} : vector<2x8x32xf32>, vector<2x32x64xf32>, vector<2x8x64xf32> -> vector<2x8x64xf32>
    "tpu.trace_stop"() : () -> ()
    %cst_65 = arith.constant dense<0xFF800000> : vector<2x8xf32>
    %139 = vector.multi_reduction <maximumf>, %138, %cst_65 [2] : vector<2x8x64xf32> to vector<2x8xf32>
    %140 = vector.shape_cast %139 : vector<2x8xf32> to vector<2x8x1xf32>
    %141 = vector.broadcast %140 : vector<2x8x1xf32> to vector<2x8x64xf32>
    %142 = arith.subf %138, %141 : vector<2x8x64xf32>
    %143 = math.exp %142 : vector<2x8x64xf32>
    %144 = vector.shape_cast %143 : vector<2x8x64xf32> to vector<16x64xf32>
    %cst_66 = arith.constant dense<0.000000e+00> : vector<16x32xf32>
    %145 = tpu.matmul %144, %5, %cst_66 {dimension_numbers = #tpu.dot_dimension_numbers<[1], [0], [0], [1], [0, 0, 1, 1], [], []>} : vector<16x64xf32>, vector<64x32xf32>, vector<16x32xf32> -> vector<16x32xf32>
    "tpu.trace_start"() <{level = 10 : i32, message = "bqn,bnd->bqd"}> : () -> ()
    %cst_67 = arith.constant dense<0.000000e+00> : vector<2x8x32xf32>
    %146 = tpu.matmul %143, %137, %cst_67 {dimension_numbers = #tpu.dot_dimension_numbers<[2], [1], [1], [2], [0, 0, 0, 1, 1, 2], [0], [0]>} : vector<2x8x64xf32>, vector<2x64x32xf32>, vector<2x8x32xf32> -> vector<2x8x32xf32>
    "tpu.trace_stop"() : () -> ()
    %147 = vector.shape_cast %146 : vector<2x8x32xf32> to vector<16x32xf32>
    %148 = tpu.reciprocal %145 {approx = true} : vector<16x32xf32> -> vector<16x32xf32>
    %149 = arith.mulf %147, %148 : vector<16x32xf32>
    %cst_68 = arith.constant dense<0.000000e+00> : vector<16x32xf32>
    %150 = tpu.matmul %149, %12, %cst_68 {dimension_numbers = #tpu.dot_dimension_numbers<[1], [0], [0], [1], [0, 0, 1, 1], [], []>} : vector<16x32xf32>, vector<32x32xf32>, vector<16x32xf32> -> vector<16x32xf32>
    %151 = vector.broadcast %14 : vector<1x32xf32> to vector<16x32xf32>
    %152 = arith.addf %150, %151 : vector<16x32xf32>
    %153 = arith.addf %118, %152 : vector<16x32xf32>
    %cst_69 = arith.constant dense<0.000000e+00> : vector<16xf32>
    %154 = vector.multi_reduction <add>, %153, %cst_69 [1] : vector<16x32xf32> to vector<16xf32>
    %155 = vector.shape_cast %154 : vector<16xf32> to vector<16x1xf32>
    %cst_70 = arith.constant 3.200000e+01 : f32
    %156 = vector.broadcast %cst_70 : f32 to vector<16x1xf32>
    %157 = arith.divf %155, %156 : vector<16x1xf32>
    %158 = arith.mulf %153, %153 : vector<16x32xf32>
    %cst_71 = arith.constant dense<0.000000e+00> : vector<16xf32>
    %159 = vector.multi_reduction <add>, %158, %cst_71 [1] : vector<16x32xf32> to vector<16xf32>
    %160 = vector.shape_cast %159 : vector<16xf32> to vector<16x1xf32>
    %cst_72 = arith.constant 3.200000e+01 : f32
    %161 = vector.broadcast %cst_72 : f32 to vector<16x1xf32>
    %162 = arith.divf %160, %161 : vector<16x1xf32>
    %163 = arith.mulf %157, %157 : vector<16x1xf32>
    %164 = arith.subf %162, %163 : vector<16x1xf32>
    %165 = vector.broadcast %157 : vector<16x1xf32> to vector<16x32xf32>
    %166 = arith.subf %153, %165 : vector<16x32xf32>
    %cst_73 = arith.constant 9.99999974E-6 : f32
    %167 = vector.broadcast %cst_73 : f32 to vector<16x1xf32>
    %168 = arith.addf %164, %167 : vector<16x1xf32>
    %169 = math.rsqrt %168 : vector<16x1xf32>
    %170 = vector.broadcast %169 : vector<16x1xf32> to vector<16x32xf32>
    %171 = arith.mulf %166, %170 : vector<16x32xf32>
    %172 = vector.broadcast %16 : vector<1x32xf32> to vector<16x32xf32>
    %173 = arith.mulf %171, %172 : vector<16x32xf32>
    %174 = vector.broadcast %18 : vector<1x32xf32> to vector<16x32xf32>
    %175 = arith.addf %173, %174 : vector<16x32xf32>
    %cst_74 = arith.constant dense<0.000000e+00> : vector<16x64xf32>
    %176 = tpu.matmul %175, %20, %cst_74 {dimension_numbers = #tpu.dot_dimension_numbers<[1], [0], [0], [1], [0, 0, 1, 1], [], []>} : vector<16x32xf32>, vector<32x64xf32>, vector<16x64xf32> -> vector<16x64xf32>
    %177 = vector.broadcast %22 : vector<1x64xf32> to vector<16x64xf32>
    %178 = arith.addf %176, %177 : vector<16x64xf32>
    %cst_75 = arith.constant 0.000000e+00 : f32
    %179 = vector.broadcast %cst_75 : f32 to vector<16x64xf32>
    %180 = arith.maximumf %178, %179 : vector<16x64xf32>
    %cst_76 = arith.constant dense<0.000000e+00> : vector<16x32xf32>
    %181 = tpu.matmul %180, %24, %cst_76 {dimension_numbers = #tpu.dot_dimension_numbers<[1], [0], [0], [1], [0, 0, 1, 1], [], []>} : vector<16x64xf32>, vector<64x32xf32>, vector<16x32xf32> -> vector<16x32xf32>
    %182 = vector.broadcast %26 : vector<1x32xf32> to vector<16x32xf32>
    %183 = arith.addf %181, %182 : vector<16x32xf32>
    %184 = arith.addf %175, %183 : vector<16x32xf32>
    %cst_77 = arith.constant dense<0.000000e+00> : vector<16xf32>
    %185 = vector.multi_reduction <add>, %184, %cst_77 [1] : vector<16x32xf32> to vector<16xf32>
    %186 = vector.shape_cast %185 : vector<16xf32> to vector<16x1xf32>
    %cst_78 = arith.constant 3.200000e+01 : f32
    %187 = vector.broadcast %cst_78 : f32 to vector<16x1xf32>
    %188 = arith.divf %186, %187 : vector<16x1xf32>
    %189 = arith.mulf %184, %184 : vector<16x32xf32>
    %cst_79 = arith.constant dense<0.000000e+00> : vector<16xf32>
    %190 = vector.multi_reduction <add>, %189, %cst_79 [1] : vector<16x32xf32> to vector<16xf32>
    %191 = vector.shape_cast %190 : vector<16xf32> to vector<16x1xf32>
    %cst_80 = arith.constant 3.200000e+01 : f32
    %192 = vector.broadcast %cst_80 : f32 to vector<16x1xf32>
    %193 = arith.divf %191, %192 : vector<16x1xf32>
    %194 = arith.mulf %188, %188 : vector<16x1xf32>
    %195 = arith.subf %193, %194 : vector<16x1xf32>
    %196 = vector.broadcast %188 : vector<16x1xf32> to vector<16x32xf32>
    %197 = arith.subf %184, %196 : vector<16x32xf32>
    %cst_81 = arith.constant 9.99999974E-6 : f32
    %198 = vector.broadcast %cst_81 : f32 to vector<16x1xf32>
    %199 = arith.addf %195, %198 : vector<16x1xf32>
    %200 = math.rsqrt %199 : vector<16x1xf32>
    %201 = vector.broadcast %200 : vector<16x1xf32> to vector<16x32xf32>
    %202 = arith.mulf %197, %201 : vector<16x32xf32>
    %203 = vector.broadcast %28 : vector<1x32xf32> to vector<16x32xf32>
    %204 = arith.mulf %202, %203 : vector<16x32xf32>
    %205 = vector.broadcast %30 : vector<1x32xf32> to vector<16x32xf32>
    %206 = arith.addf %204, %205 : vector<16x32xf32>
    %c1 = arith.constant 1 : index
    %c0_82 = arith.constant 0 : index
    %c0_83 = arith.constant 0 : index
    %207 = vector.load %arg5[%c1, %c0_82, %c0_83] : memref<2x32x96xf32, #tpu.memory_space<vmem>>, vector<1x32x96xf32>
    %208 = vector.shape_cast %207 : vector<1x32x96xf32> to vector<32x96xf32>
    %c1_84 = arith.constant 1 : index
    %c0_85 = arith.constant 0 : index
    %c0_86 = arith.constant 0 : index
    %209 = vector.load %arg6[%c1_84, %c0_85, %c0_86] : memref<2x1x96xf32, #tpu.memory_space<vmem>>, vector<1x1x96xf32>
    %210 = vector.shape_cast %209 : vector<1x1x96xf32> to vector<1x96xf32>
    %c1_87 = arith.constant 1 : index
    %c0_88 = arith.constant 0 : index
    %c0_89 = arith.constant 0 : index
    %211 = vector.load %arg7[%c1_87, %c0_88, %c0_89] : memref<2x32x32xf32, #tpu.memory_space<vmem>>, vector<1x32x32xf32>
    %212 = vector.shape_cast %211 : vector<1x32x32xf32> to vector<32x32xf32>
    %c1_90 = arith.constant 1 : index
    %c0_91 = arith.constant 0 : index
    %c0_92 = arith.constant 0 : index
    %213 = vector.load %arg8[%c1_90, %c0_91, %c0_92] : memref<2x1x32xf32, #tpu.memory_space<vmem>>, vector<1x1x32xf32>
    %214 = vector.shape_cast %213 : vector<1x1x32xf32> to vector<1x32xf32>
    %c1_93 = arith.constant 1 : index
    %c0_94 = arith.constant 0 : index
    %c0_95 = arith.constant 0 : index
    %215 = vector.load %arg9[%c1_93, %c0_94, %c0_95] : memref<2x1x32xf32, #tpu.memory_space<vmem>>, vector<1x1x32xf32>
    %216 = vector.shape_cast %215 : vector<1x1x32xf32> to vector<1x32xf32>
    %c1_96 = arith.constant 1 : index
    %c0_97 = arith.constant 0 : index
    %c0_98 = arith.constant 0 : index
    %217 = vector.load %arg10[%c1_96, %c0_97, %c0_98] : memref<2x1x32xf32, #tpu.memory_space<vmem>>, vector<1x1x32xf32>
    %218 = vector.shape_cast %217 : vector<1x1x32xf32> to vector<1x32xf32>
    %c1_99 = arith.constant 1 : index
    %c0_100 = arith.constant 0 : index
    %c0_101 = arith.constant 0 : index
    %219 = vector.load %arg11[%c1_99, %c0_100, %c0_101] : memref<2x32x64xf32, #tpu.memory_space<vmem>>, vector<1x32x64xf32>
    %220 = vector.shape_cast %219 : vector<1x32x64xf32> to vector<32x64xf32>
    %c1_102 = arith.constant 1 : index
    %c0_103 = arith.constant 0 : index
    %c0_104 = arith.constant 0 : index
    %221 = vector.load %arg12[%c1_102, %c0_103, %c0_104] : memref<2x1x64xf32, #tpu.memory_space<vmem>>, vector<1x1x64xf32>
    %222 = vector.shape_cast %221 : vector<1x1x64xf32> to vector<1x64xf32>
    %c1_105 = arith.constant 1 : index
    %c0_106 = arith.constant 0 : index
    %c0_107 = arith.constant 0 : index
    %223 = vector.load %arg13[%c1_105, %c0_106, %c0_107] : memref<2x64x32xf32, #tpu.memory_space<vmem>>, vector<1x64x32xf32>
    %224 = vector.shape_cast %223 : vector<1x64x32xf32> to vector<64x32xf32>
    %c1_108 = arith.constant 1 : index
    %c0_109 = arith.constant 0 : index
    %c0_110 = arith.constant 0 : index
    %225 = vector.load %arg14[%c1_108, %c0_109, %c0_110] : memref<2x1x32xf32, #tpu.memory_space<vmem>>, vector<1x1x32xf32>
    %226 = vector.shape_cast %225 : vector<1x1x32xf32> to vector<1x32xf32>
    %c1_111 = arith.constant 1 : index
    %c0_112 = arith.constant 0 : index
    %c0_113 = arith.constant 0 : index
    %227 = vector.load %arg15[%c1_111, %c0_112, %c0_113] : memref<2x1x32xf32, #tpu.memory_space<vmem>>, vector<1x1x32xf32>
    %228 = vector.shape_cast %227 : vector<1x1x32xf32> to vector<1x32xf32>
    %c1_114 = arith.constant 1 : index
    %c0_115 = arith.constant 0 : index
    %c0_116 = arith.constant 0 : index
    %229 = vector.load %arg16[%c1_114, %c0_115, %c0_116] : memref<2x1x32xf32, #tpu.memory_space<vmem>>, vector<1x1x32xf32>
    %230 = vector.shape_cast %229 : vector<1x1x32xf32> to vector<1x32xf32>
    %231 = tpu.concatenate %206, %118 in 0 : vector<16x32xf32>, vector<16x32xf32> -> vector<32x32xf32>
    %cst_117 = arith.constant dense<0.000000e+00> : vector<32x96xf32>
    %232 = tpu.matmul %231, %208, %cst_117 {dimension_numbers = #tpu.dot_dimension_numbers<[1], [0], [0], [1], [0, 0, 1, 1], [], []>} : vector<32x32xf32>, vector<32x96xf32>, vector<32x96xf32> -> vector<32x96xf32>
    %233 = vector.broadcast %210 : vector<1x96xf32> to vector<32x96xf32>
    %234 = arith.addf %232, %233 : vector<32x96xf32>
    %235 = vector.extract_strided_slice %234 {offsets = [0, 0], sizes = [16, 32], strides = [1, 1]} : vector<32x96xf32> to vector<16x32xf32>
    %236 = vector.shape_cast %235 : vector<16x32xf32> to vector<2x8x32xf32>
    %237 = vector.extract_strided_slice %234 {offsets = [16, 32], sizes = [16, 32], strides = [1, 1]} : vector<32x96xf32> to vector<16x32xf32>
    %238 = vector.shape_cast %237 : vector<16x32xf32> to vector<2x8x32xf32>
    %239 = vector.extract_strided_slice %234 {offsets = [16, 64], sizes = [16, 32], strides = [1, 1]} : vector<32x96xf32> to vector<16x32xf32>
    %240 = vector.shape_cast %239 : vector<16x32xf32> to vector<2x8x32xf32>
    %241 = tpu.transpose %238, [0, 2, 1] : vector<2x8x32xf32> -> vector<2x32x8xf32>
    %242 = tpu.concatenate %241, %241, %241, %241, %241, %241, %241, %241 in 2 : vector<2x32x8xf32>, vector<2x32x8xf32>, vector<2x32x8xf32>, vector<2x32x8xf32>, vector<2x32x8xf32>, vector<2x32x8xf32>, vector<2x32x8xf32>, vector<2x32x8xf32> -> vector<2x32x64xf32>
    %243 = vector.shape_cast %6 : vector<32x64xf32> to vector<1x32x64xf32>
    %244 = vector.broadcast %243 : vector<1x32x64xf32> to vector<2x32x64xf32>
    %245 = arith.mulf %242, %244 : vector<2x32x64xf32>
    %246 = tpu.concatenate %240, %240, %240, %240, %240, %240, %240, %240 in 1 : vector<2x8x32xf32>, vector<2x8x32xf32>, vector<2x8x32xf32>, vector<2x8x32xf32>, vector<2x8x32xf32>, vector<2x8x32xf32>, vector<2x8x32xf32>, vector<2x8x32xf32> -> vector<2x64x32xf32>
    %247 = vector.shape_cast %5 : vector<64x32xf32> to vector<1x64x32xf32>
    %248 = vector.broadcast %247 : vector<1x64x32xf32> to vector<2x64x32xf32>
    %249 = arith.mulf %246, %248 : vector<2x64x32xf32>
    "tpu.trace_start"() <{level = 10 : i32, message = "bqd,bdn->bqn"}> : () -> ()
    %cst_118 = arith.constant dense<0.000000e+00> : vector<2x8x64xf32>
    %250 = tpu.matmul %236, %245, %cst_118 {dimension_numbers = #tpu.dot_dimension_numbers<[2], [1], [1], [2], [0, 0, 0, 1, 1, 2], [0], [0]>} : vector<2x8x32xf32>, vector<2x32x64xf32>, vector<2x8x64xf32> -> vector<2x8x64xf32>
    "tpu.trace_stop"() : () -> ()
    %cst_119 = arith.constant dense<0xFF800000> : vector<2x8xf32>
    %251 = vector.multi_reduction <maximumf>, %250, %cst_119 [2] : vector<2x8x64xf32> to vector<2x8xf32>
    %252 = vector.shape_cast %251 : vector<2x8xf32> to vector<2x8x1xf32>
    %253 = vector.broadcast %252 : vector<2x8x1xf32> to vector<2x8x64xf32>
    %254 = arith.subf %250, %253 : vector<2x8x64xf32>
    %255 = math.exp %254 : vector<2x8x64xf32>
    %256 = vector.shape_cast %255 : vector<2x8x64xf32> to vector<16x64xf32>
    %cst_120 = arith.constant dense<0.000000e+00> : vector<16x32xf32>
    %257 = tpu.matmul %256, %5, %cst_120 {dimension_numbers = #tpu.dot_dimension_numbers<[1], [0], [0], [1], [0, 0, 1, 1], [], []>} : vector<16x64xf32>, vector<64x32xf32>, vector<16x32xf32> -> vector<16x32xf32>
    "tpu.trace_start"() <{level = 10 : i32, message = "bqn,bnd->bqd"}> : () -> ()
    %cst_121 = arith.constant dense<0.000000e+00> : vector<2x8x32xf32>
    %258 = tpu.matmul %255, %249, %cst_121 {dimension_numbers = #tpu.dot_dimension_numbers<[2], [1], [1], [2], [0, 0, 0, 1, 1, 2], [0], [0]>} : vector<2x8x64xf32>, vector<2x64x32xf32>, vector<2x8x32xf32> -> vector<2x8x32xf32>
    "tpu.trace_stop"() : () -> ()
    %259 = vector.shape_cast %258 : vector<2x8x32xf32> to vector<16x32xf32>
    %260 = tpu.reciprocal %257 {approx = true} : vector<16x32xf32> -> vector<16x32xf32>
    %261 = arith.mulf %259, %260 : vector<16x32xf32>
    %cst_122 = arith.constant dense<0.000000e+00> : vector<16x32xf32>
    %262 = tpu.matmul %261, %212, %cst_122 {dimension_numbers = #tpu.dot_dimension_numbers<[1], [0], [0], [1], [0, 0, 1, 1], [], []>} : vector<16x32xf32>, vector<32x32xf32>, vector<16x32xf32> -> vector<16x32xf32>
    %263 = vector.broadcast %214 : vector<1x32xf32> to vector<16x32xf32>
    %264 = arith.addf %262, %263 : vector<16x32xf32>
    %265 = arith.addf %206, %264 : vector<16x32xf32>
    %cst_123 = arith.constant dense<0.000000e+00> : vector<16xf32>
    %266 = vector.multi_reduction <add>, %265, %cst_123 [1] : vector<16x32xf32> to vector<16xf32>
    %267 = vector.shape_cast %266 : vector<16xf32> to vector<16x1xf32>
    %cst_124 = arith.constant 3.200000e+01 : f32
    %268 = vector.broadcast %cst_124 : f32 to vector<16x1xf32>
    %269 = arith.divf %267, %268 : vector<16x1xf32>
    %270 = arith.mulf %265, %265 : vector<16x32xf32>
    %cst_125 = arith.constant dense<0.000000e+00> : vector<16xf32>
    %271 = vector.multi_reduction <add>, %270, %cst_125 [1] : vector<16x32xf32> to vector<16xf32>
    %272 = vector.shape_cast %271 : vector<16xf32> to vector<16x1xf32>
    %cst_126 = arith.constant 3.200000e+01 : f32
    %273 = vector.broadcast %cst_126 : f32 to vector<16x1xf32>
    %274 = arith.divf %272, %273 : vector<16x1xf32>
    %275 = arith.mulf %269, %269 : vector<16x1xf32>
    %276 = arith.subf %274, %275 : vector<16x1xf32>
    %277 = vector.broadcast %269 : vector<16x1xf32> to vector<16x32xf32>
    %278 = arith.subf %265, %277 : vector<16x32xf32>
    %cst_127 = arith.constant 9.99999974E-6 : f32
    %279 = vector.broadcast %cst_127 : f32 to vector<16x1xf32>
    %280 = arith.addf %276, %279 : vector<16x1xf32>
    %281 = math.rsqrt %280 : vector<16x1xf32>
    %282 = vector.broadcast %281 : vector<16x1xf32> to vector<16x32xf32>
    %283 = arith.mulf %278, %282 : vector<16x32xf32>
    %284 = vector.broadcast %216 : vector<1x32xf32> to vector<16x32xf32>
    %285 = arith.mulf %283, %284 : vector<16x32xf32>
    %286 = vector.broadcast %218 : vector<1x32xf32> to vector<16x32xf32>
    %287 = arith.addf %285, %286 : vector<16x32xf32>
    %cst_128 = arith.constant dense<0.000000e+00> : vector<16x64xf32>
    %288 = tpu.matmul %287, %220, %cst_128 {dimension_numbers = #tpu.dot_dimension_numbers<[1], [0], [0], [1], [0, 0, 1, 1], [], []>} : vector<16x32xf32>, vector<32x64xf32>, vector<16x64xf32> -> vector<16x64xf32>
    %289 = vector.broadcast %222 : vector<1x64xf32> to vector<16x64xf32>
    %290 = arith.addf %288, %289 : vector<16x64xf32>
    %cst_129 = arith.constant 0.000000e+00 : f32
    %291 = vector.broadcast %cst_129 : f32 to vector<16x64xf32>
    %292 = arith.maximumf %290, %291 : vector<16x64xf32>
    %cst_130 = arith.constant dense<0.000000e+00> : vector<16x32xf32>
    %293 = tpu.matmul %292, %224, %cst_130 {dimension_numbers = #tpu.dot_dimension_numbers<[1], [0], [0], [1], [0, 0, 1, 1], [], []>} : vector<16x64xf32>, vector<64x32xf32>, vector<16x32xf32> -> vector<16x32xf32>
    %294 = vector.broadcast %226 : vector<1x32xf32> to vector<16x32xf32>
    %295 = arith.addf %293, %294 : vector<16x32xf32>
    %296 = arith.addf %287, %295 : vector<16x32xf32>
    %cst_131 = arith.constant dense<0.000000e+00> : vector<16xf32>
    %297 = vector.multi_reduction <add>, %296, %cst_131 [1] : vector<16x32xf32> to vector<16xf32>
    %298 = vector.shape_cast %297 : vector<16xf32> to vector<16x1xf32>
    %cst_132 = arith.constant 3.200000e+01 : f32
    %299 = vector.broadcast %cst_132 : f32 to vector<16x1xf32>
    %300 = arith.divf %298, %299 : vector<16x1xf32>
    %301 = arith.mulf %296, %296 : vector<16x32xf32>
    %cst_133 = arith.constant dense<0.000000e+00> : vector<16xf32>
    %302 = vector.multi_reduction <add>, %301, %cst_133 [1] : vector<16x32xf32> to vector<16xf32>
    %303 = vector.shape_cast %302 : vector<16xf32> to vector<16x1xf32>
    %cst_134 = arith.constant 3.200000e+01 : f32
    %304 = vector.broadcast %cst_134 : f32 to vector<16x1xf32>
    %305 = arith.divf %303, %304 : vector<16x1xf32>
    %306 = arith.mulf %300, %300 : vector<16x1xf32>
    %307 = arith.subf %305, %306 : vector<16x1xf32>
    %308 = vector.broadcast %300 : vector<16x1xf32> to vector<16x32xf32>
    %309 = arith.subf %296, %308 : vector<16x32xf32>
    %cst_135 = arith.constant 9.99999974E-6 : f32
    %310 = vector.broadcast %cst_135 : f32 to vector<16x1xf32>
    %311 = arith.addf %307, %310 : vector<16x1xf32>
    %312 = math.rsqrt %311 : vector<16x1xf32>
    %313 = vector.broadcast %312 : vector<16x1xf32> to vector<16x32xf32>
    %314 = arith.mulf %309, %313 : vector<16x32xf32>
    %315 = vector.broadcast %228 : vector<1x32xf32> to vector<16x32xf32>
    %316 = arith.mulf %314, %315 : vector<16x32xf32>
    %317 = vector.broadcast %230 : vector<1x32xf32> to vector<16x32xf32>
    %318 = arith.addf %316, %317 : vector<16x32xf32>
    %319 = tpu.concatenate %318, %206 in 0 : vector<16x32xf32>, vector<16x32xf32> -> vector<32x32xf32>
    %cst_136 = arith.constant dense<0.000000e+00> : vector<32x96xf32>
    %320 = tpu.matmul %319, %208, %cst_136 {dimension_numbers = #tpu.dot_dimension_numbers<[1], [0], [0], [1], [0, 0, 1, 1], [], []>} : vector<32x32xf32>, vector<32x96xf32>, vector<32x96xf32> -> vector<32x96xf32>
    %321 = vector.broadcast %210 : vector<1x96xf32> to vector<32x96xf32>
    %322 = arith.addf %320, %321 : vector<32x96xf32>
    %323 = vector.extract_strided_slice %322 {offsets = [0, 0], sizes = [16, 32], strides = [1, 1]} : vector<32x96xf32> to vector<16x32xf32>
    %324 = vector.shape_cast %323 : vector<16x32xf32> to vector<2x8x32xf32>
    %325 = vector.extract_strided_slice %322 {offsets = [16, 32], sizes = [16, 32], strides = [1, 1]} : vector<32x96xf32> to vector<16x32xf32>
    %326 = vector.shape_cast %325 : vector<16x32xf32> to vector<2x8x32xf32>
    %327 = vector.extract_strided_slice %322 {offsets = [16, 64], sizes = [16, 32], strides = [1, 1]} : vector<32x96xf32> to vector<16x32xf32>
    %328 = vector.shape_cast %327 : vector<16x32xf32> to vector<2x8x32xf32>
    %329 = tpu.transpose %326, [0, 2, 1] : vector<2x8x32xf32> -> vector<2x32x8xf32>
    %330 = tpu.concatenate %329, %329, %329, %329, %329, %329, %329, %329 in 2 : vector<2x32x8xf32>, vector<2x32x8xf32>, vector<2x32x8xf32>, vector<2x32x8xf32>, vector<2x32x8xf32>, vector<2x32x8xf32>, vector<2x32x8xf32>, vector<2x32x8xf32> -> vector<2x32x64xf32>
    %331 = vector.shape_cast %6 : vector<32x64xf32> to vector<1x32x64xf32>
    %332 = vector.broadcast %331 : vector<1x32x64xf32> to vector<2x32x64xf32>
    %333 = arith.mulf %330, %332 : vector<2x32x64xf32>
    %334 = tpu.concatenate %328, %328, %328, %328, %328, %328, %328, %328 in 1 : vector<2x8x32xf32>, vector<2x8x32xf32>, vector<2x8x32xf32>, vector<2x8x32xf32>, vector<2x8x32xf32>, vector<2x8x32xf32>, vector<2x8x32xf32>, vector<2x8x32xf32> -> vector<2x64x32xf32>
    %335 = vector.shape_cast %5 : vector<64x32xf32> to vector<1x64x32xf32>
    %336 = vector.broadcast %335 : vector<1x64x32xf32> to vector<2x64x32xf32>
    %337 = arith.mulf %334, %336 : vector<2x64x32xf32>
    "tpu.trace_start"() <{level = 10 : i32, message = "bqd,bdn->bqn"}> : () -> ()
    %cst_137 = arith.constant dense<0.000000e+00> : vector<2x8x64xf32>
    %338 = tpu.matmul %324, %333, %cst_137 {dimension_numbers = #tpu.dot_dimension_numbers<[2], [1], [1], [2], [0, 0, 0, 1, 1, 2], [0], [0]>} : vector<2x8x32xf32>, vector<2x32x64xf32>, vector<2x8x64xf32> -> vector<2x8x64xf32>
    "tpu.trace_stop"() : () -> ()
    %cst_138 = arith.constant dense<0xFF800000> : vector<2x8xf32>
    %339 = vector.multi_reduction <maximumf>, %338, %cst_138 [2] : vector<2x8x64xf32> to vector<2x8xf32>
    %340 = vector.shape_cast %339 : vector<2x8xf32> to vector<2x8x1xf32>
    %341 = vector.broadcast %340 : vector<2x8x1xf32> to vector<2x8x64xf32>
    %342 = arith.subf %338, %341 : vector<2x8x64xf32>
    %343 = math.exp %342 : vector<2x8x64xf32>
    %344 = vector.shape_cast %343 : vector<2x8x64xf32> to vector<16x64xf32>
    %cst_139 = arith.constant dense<0.000000e+00> : vector<16x32xf32>
    %345 = tpu.matmul %344, %5, %cst_139 {dimension_numbers = #tpu.dot_dimension_numbers<[1], [0], [0], [1], [0, 0, 1, 1], [], []>} : vector<16x64xf32>, vector<64x32xf32>, vector<16x32xf32> -> vector<16x32xf32>
    "tpu.trace_start"() <{level = 10 : i32, message = "bqn,bnd->bqd"}> : () -> ()
    %cst_140 = arith.constant dense<0.000000e+00> : vector<2x8x32xf32>
    %346 = tpu.matmul %343, %337, %cst_140 {dimension_numbers = #tpu.dot_dimension_numbers<[2], [1], [1], [2], [0, 0, 0, 1, 1, 2], [0], [0]>} : vector<2x8x64xf32>, vector<2x64x32xf32>, vector<2x8x32xf32> -> vector<2x8x32xf32>
    "tpu.trace_stop"() : () -> ()
    %347 = vector.shape_cast %346 : vector<2x8x32xf32> to vector<16x32xf32>
    %348 = tpu.reciprocal %345 {approx = true} : vector<16x32xf32> -> vector<16x32xf32>
    %349 = arith.mulf %347, %348 : vector<16x32xf32>
    %cst_141 = arith.constant dense<0.000000e+00> : vector<16x32xf32>
    %350 = tpu.matmul %349, %212, %cst_141 {dimension_numbers = #tpu.dot_dimension_numbers<[1], [0], [0], [1], [0, 0, 1, 1], [], []>} : vector<16x32xf32>, vector<32x32xf32>, vector<16x32xf32> -> vector<16x32xf32>
    %351 = vector.broadcast %214 : vector<1x32xf32> to vector<16x32xf32>
    %352 = arith.addf %350, %351 : vector<16x32xf32>
    %353 = arith.addf %318, %352 : vector<16x32xf32>
    %cst_142 = arith.constant dense<0.000000e+00> : vector<16xf32>
    %354 = vector.multi_reduction <add>, %353, %cst_142 [1] : vector<16x32xf32> to vector<16xf32>
    %355 = vector.shape_cast %354 : vector<16xf32> to vector<16x1xf32>
    %cst_143 = arith.constant 3.200000e+01 : f32
    %356 = vector.broadcast %cst_143 : f32 to vector<16x1xf32>
    %357 = arith.divf %355, %356 : vector<16x1xf32>
    %358 = arith.mulf %353, %353 : vector<16x32xf32>
    %cst_144 = arith.constant dense<0.000000e+00> : vector<16xf32>
    %359 = vector.multi_reduction <add>, %358, %cst_144 [1] : vector<16x32xf32> to vector<16xf32>
    %360 = vector.shape_cast %359 : vector<16xf32> to vector<16x1xf32>
    %cst_145 = arith.constant 3.200000e+01 : f32
    %361 = vector.broadcast %cst_145 : f32 to vector<16x1xf32>
    %362 = arith.divf %360, %361 : vector<16x1xf32>
    %363 = arith.mulf %357, %357 : vector<16x1xf32>
    %364 = arith.subf %362, %363 : vector<16x1xf32>
    %365 = vector.broadcast %357 : vector<16x1xf32> to vector<16x32xf32>
    %366 = arith.subf %353, %365 : vector<16x32xf32>
    %cst_146 = arith.constant 9.99999974E-6 : f32
    %367 = vector.broadcast %cst_146 : f32 to vector<16x1xf32>
    %368 = arith.addf %364, %367 : vector<16x1xf32>
    %369 = math.rsqrt %368 : vector<16x1xf32>
    %370 = vector.broadcast %369 : vector<16x1xf32> to vector<16x32xf32>
    %371 = arith.mulf %366, %370 : vector<16x32xf32>
    %372 = vector.broadcast %216 : vector<1x32xf32> to vector<16x32xf32>
    %373 = arith.mulf %371, %372 : vector<16x32xf32>
    %374 = vector.broadcast %218 : vector<1x32xf32> to vector<16x32xf32>
    %375 = arith.addf %373, %374 : vector<16x32xf32>
    %cst_147 = arith.constant dense<0.000000e+00> : vector<16x64xf32>
    %376 = tpu.matmul %375, %220, %cst_147 {dimension_numbers = #tpu.dot_dimension_numbers<[1], [0], [0], [1], [0, 0, 1, 1], [], []>} : vector<16x32xf32>, vector<32x64xf32>, vector<16x64xf32> -> vector<16x64xf32>
    %377 = vector.broadcast %222 : vector<1x64xf32> to vector<16x64xf32>
    %378 = arith.addf %376, %377 : vector<16x64xf32>
    %cst_148 = arith.constant 0.000000e+00 : f32
    %379 = vector.broadcast %cst_148 : f32 to vector<16x64xf32>
    %380 = arith.maximumf %378, %379 : vector<16x64xf32>
    %cst_149 = arith.constant dense<0.000000e+00> : vector<16x32xf32>
    %381 = tpu.matmul %380, %224, %cst_149 {dimension_numbers = #tpu.dot_dimension_numbers<[1], [0], [0], [1], [0, 0, 1, 1], [], []>} : vector<16x64xf32>, vector<64x32xf32>, vector<16x32xf32> -> vector<16x32xf32>
    %382 = vector.broadcast %226 : vector<1x32xf32> to vector<16x32xf32>
    %383 = arith.addf %381, %382 : vector<16x32xf32>
    %384 = arith.addf %375, %383 : vector<16x32xf32>
    %cst_150 = arith.constant dense<0.000000e+00> : vector<16xf32>
    %385 = vector.multi_reduction <add>, %384, %cst_150 [1] : vector<16x32xf32> to vector<16xf32>
    %386 = vector.shape_cast %385 : vector<16xf32> to vector<16x1xf32>
    %cst_151 = arith.constant 3.200000e+01 : f32
    %387 = vector.broadcast %cst_151 : f32 to vector<16x1xf32>
    %388 = arith.divf %386, %387 : vector<16x1xf32>
    %389 = arith.mulf %384, %384 : vector<16x32xf32>
    %cst_152 = arith.constant dense<0.000000e+00> : vector<16xf32>
    %390 = vector.multi_reduction <add>, %389, %cst_152 [1] : vector<16x32xf32> to vector<16xf32>
    %391 = vector.shape_cast %390 : vector<16xf32> to vector<16x1xf32>
    %cst_153 = arith.constant 3.200000e+01 : f32
    %392 = vector.broadcast %cst_153 : f32 to vector<16x1xf32>
    %393 = arith.divf %391, %392 : vector<16x1xf32>
    %394 = arith.mulf %388, %388 : vector<16x1xf32>
    %395 = arith.subf %393, %394 : vector<16x1xf32>
    %396 = vector.broadcast %388 : vector<16x1xf32> to vector<16x32xf32>
    %397 = arith.subf %384, %396 : vector<16x32xf32>
    %cst_154 = arith.constant 9.99999974E-6 : f32
    %398 = vector.broadcast %cst_154 : f32 to vector<16x1xf32>
    %399 = arith.addf %395, %398 : vector<16x1xf32>
    %400 = math.rsqrt %399 : vector<16x1xf32>
    %401 = vector.broadcast %400 : vector<16x1xf32> to vector<16x32xf32>
    %402 = arith.mulf %397, %401 : vector<16x32xf32>
    %403 = vector.broadcast %228 : vector<1x32xf32> to vector<16x32xf32>
    %404 = arith.mulf %402, %403 : vector<16x32xf32>
    %405 = vector.broadcast %230 : vector<1x32xf32> to vector<16x32xf32>
    %406 = arith.addf %404, %405 : vector<16x32xf32>
    %c0_155 = arith.constant 0 : index
    %c0_156 = arith.constant 0 : index
    %407 = vector.load %arg17[%c0_155, %c0_156] : memref<16x32xf32, #tpu.memory_space<vmem>>, vector<16x32xf32>
    tpu.vector_store %arg17[%c0_155, %c0_156], %318 {strides = array<i32>} : memref<16x32xf32, #tpu.memory_space<vmem>>, vector<16x32xf32>,
    %c0_157 = arith.constant 0 : index
    %c0_158 = arith.constant 0 : index
    %408 = vector.load %arg18[%c0_157, %c0_158] : memref<16x32xf32, #tpu.memory_space<vmem>>, vector<16x32xf32>
    tpu.vector_store %arg18[%c0_157, %c0_158], %406 {strides = array<i32>} : memref<16x32xf32, #tpu.memory_space<vmem>>, vector<16x32xf32>,
    return
  }
}

</mosaic_0001>

<llo_original>
// kernel: transformer_cross_attn.1
$region0: #{transformer_cross_attn.1}
  #allocation0 [shape = 'u32[]', space=smem, size = 0x4, offset = 0x4, fixed_abs, tag = 'smem constant byte address 0x4 - core index']
  #allocation1 [shape = 'u32[144,128]{1,0:T(1,128)}', space=vmem, size = 0x12000, scoped, tag = 'internal scratch']
  %s0 = inlined_call_operand.vmem [shape: f32[16,32], index: 0, kind: input, shape index: {}]
  %s1 = inlined_call_operand.hbm [shape: f32[16,32], index: 1, kind: input, shape index: {}]
  %s2 = inlined_call_operand.vmem [shape: f32[16,32], index: 2, kind: input, shape index: {}]
  %s3 = inlined_call_operand.vmem [shape: f32[64,32], index: 3, kind: input, shape index: {}]
  %s4 = inlined_call_operand.vmem [shape: f32[32,64], index: 4, kind: input, shape index: {}]
  %s5 = inlined_call_operand.vmem [shape: f32[2,32,96], index: 5, kind: input, shape index: {}]
  %s6 = inlined_call_operand.hbm [shape: f32[2,1,96], index: 6, kind: input, shape index: {}]
  %s7 = inlined_call_operand.vmem [shape: f32[2,32,32], index: 7, kind: input, shape index: {}]
  %s8 = inlined_call_operand.hbm [shape: f32[2,1,32], index: 8, kind: input, shape index: {}]
  %s9 = inlined_call_operand.hbm [shape: f32[2,1,32], index: 9, kind: input, shape index: {}]
  %s10 = inlined_call_operand.hbm [shape: f32[2,1,32], index: 10, kind: input, shape index: {}]
  %s11 = inlined_call_operand.vmem [shape: f32[2,32,64], index: 11, kind: input, shape index: {}]
  %s12 = inlined_call_operand.hbm [shape: f32[2,1,64], index: 12, kind: input, shape index: {}]
  %s13 = inlined_call_operand.vmem [shape: f32[2,64,32], index: 13, kind: input, shape index: {}]
  %s14 = inlined_call_operand.hbm [shape: f32[2,1,32], index: 14, kind: input, shape index: {}]
  %s15 = inlined_call_operand.hbm [shape: f32[2,1,32], index: 15, kind: input, shape index: {}]
  %s16 = inlined_call_operand.hbm [shape: f32[2,1,32], index: 16, kind: input, shape index: {}]
  %s17 = inlined_call_operand.hbm [shape: f32[16,32], index: 17, kind: output, shape index: {0}]
  %s18 = inlined_call_operand.hbm [shape: f32[16,32], index: 18, kind: output, shape index: {1}]
  %19 = xla_tuple %s17, %s18
  %s20 = sld [smem:[#allocation0]]
  $region122: #{transformer_cross_attn.1} parent=0
    _
  %s22 = ssub.s32 1, %s20
  %s23 = scalar_select 0, %s22, %s20
  $region1: #{transformer_cross_attn.1} parent=0
    #allocation2 [shape = 'u8[8192]{0}', space=vmem, size = 0x2000, scoped, tag = 'input window, operand 1, single buffered']
    #allocation3 [shape = 's32[1]{0}', space=sflag, size = 0x4, scoped, tag = 'scoped memory for transformer_cross_attn.1']
    #allocation4 [shape = 's32[1]{0}', space=sflag, size = 0x4, scoped, tag = 'scoped memory for transformer_cross_attn.1']
    #allocation5 [shape = 'u8[1024]{0}', space=vmem, size = 0x400, scoped, tag = 'input window, operand 6, single buffered']
    #allocation6 [shape = 's32[1]{0}', space=sflag, size = 0x4, scoped, tag = 'scoped memory for transformer_cross_attn.1']
    #allocation7 [shape = 'u8[1024]{0}', space=vmem, size = 0x400, scoped, tag = 'input window, operand 8, single buffered']
    #allocation8 [shape = 'u8[1024]{0}', space=vmem, size = 0x400, scoped, tag = 'input window, operand 9, single buffered']
    #allocation9 [shape = 's32[1]{0}', space=sflag, size = 0x4, scoped, tag = 'scoped memory for transformer_cross_attn.1']
    #allocation10 [shape = 'u8[1024]{0}', space=vmem, size = 0x400, scoped, tag = 'input window, operand 10, single buffered']
    #allocation11 [shape = 'u8[1024]{0}', space=vmem, size = 0x400, scoped, tag = 'input window, operand 12, single buffered']
    #allocation12 [shape = 's32[1]{0}', space=sflag, size = 0x4, scoped, tag = 'scoped memory for transformer_cross_attn.1']
    #allocation13 [shape = 'u8[1024]{0}', space=vmem, size = 0x400, scoped, tag = 'input window, operand 14, single buffered']
    #allocation14 [shape = 'u8[1024]{0}', space=vmem, size = 0x400, scoped, tag = 'input window, operand 15, single buffered']
    #allocation15 [shape = 's32[1]{0}', space=sflag, size = 0x4, scoped, tag = 'scoped memory for transformer_cross_attn.1']
    #allocation16 [shape = 'u8[1024]{0}', space=vmem, size = 0x400, scoped, tag = 'input window, operand 16, single buffered']
    #allocation17 [shape = 'u8[8192]{0}', space=vmem, size = 0x2000, scoped, tag = 'output window, operand 0, single buffered']
    #allocation18 [shape = 'u8[8192]{0}', space=vmem, size = 0x2000, scoped, tag = 'output window, operand 1, single buffered']
    #allocation19 [shape = 's32[1]{0}', space=sflag, size = 0x4, scoped, tag = 'scoped memory for transformer_cross_attn.1']
    %24 = vsyncpa [#allocation3], 0
    %25 = vsyncpa [#allocation6], 0
    %26 = vsyncpa [#allocation9], 0
    %27 = vsyncpa [#allocation12], 0
    %28 = vsyncpa [#allocation15], 0
    %29 = vsyncpa [#allocation4], 0
    %30 = vsyncpa [#allocation19], 0
    // Predicated region
    $region2: #{transformer_cross_attn.1} parent=1 // pred_check
      _
    $region3: #{transformer_cross_attn.1} parent=1 // pred_check_branch
      %32 = sbr.rel (0) target = $region5
    $region4: #{transformer_cross_attn.1} parent=1 // pred_region
      _
    $region5: #{transformer_cross_attn.1} parent=1 // pred_fallthru
      _
    // Predicated region
    $region6: #{transformer_cross_attn.1} parent=1 // pred_check
      _
    $region7: #{transformer_cross_attn.1} parent=1 // pred_check_branch
      %34 = sbr.rel (0) target = $region9
    $region8: #{transformer_cross_attn.1} parent=1 // pred_region
      %s36 = ssub.s32 256, 256
      %37 = vsyncadd [#allocation3], %s36
      %s38 = sshll.u32 [#allocation2], 4
      %s39 = int_to_ptr.vmem [resolvable:$true] %s38
      %44 = dma.hbm_to_vmem [thread:$0]  %s1, 256, %s39, [#allocation3], 128, 128, 8
    $region9: #{transformer_cross_attn.1} parent=1 // pred_fallthru
      _
    // Predicated region
    $region10: #{transformer_cross_attn.1} parent=1 // pred_check
      _
    $region11: #{transformer_cross_attn.1} parent=1 // pred_check_branch
      %46 = sbr.rel (0) target = $region13
    $region12: #{transformer_cross_attn.1} parent=1 // pred_region
      _
    $region13: #{transformer_cross_attn.1} parent=1 // pred_fallthru
      _
    // Predicated region
    $region14: #{transformer_cross_attn.1} parent=1 // pred_check
      _
    $region15: #{transformer_cross_attn.1} parent=1 // pred_check_branch
      %48 = sbr.rel (0) target = $region17
    $region16: #{transformer_cross_attn.1} parent=1 // pred_region
      _
    $region17: #{transformer_cross_attn.1} parent=1 // pred_fallthru
      _
    // Predicated region
    $region18: #{transformer_cross_attn.1} parent=1 // pred_check
      _
    $region19: #{transformer_cross_attn.1} parent=1 // pred_check_branch
      %50 = sbr.rel (0) target = $region21
    $region20: #{transformer_cross_attn.1} parent=1 // pred_region
      _
    $region21: #{transformer_cross_attn.1} parent=1 // pred_fallthru
      _
    // Predicated region
    $region22: #{transformer_cross_attn.1} parent=1 // pred_check
      _
    $region23: #{transformer_cross_attn.1} parent=1 // pred_check_branch
      %52 = sbr.rel (0) target = $region25
    $region24: #{transformer_cross_attn.1} parent=1 // pred_region
      _
    $region25: #{transformer_cross_attn.1} parent=1 // pred_fallthru
      _
    // Predicated region
    $region26: #{transformer_cross_attn.1} parent=1 // pred_check
      _
    $region27: #{transformer_cross_attn.1} parent=1 // pred_check_branch
      %54 = sbr.rel (0) target = $region29
    $region28: #{transformer_cross_attn.1} parent=1 // pred_region
      %s56 = ssub.s32 32, 32
      %57 = vsyncadd [#allocation6], %s56
      %s58 = sshll.u32 [#allocation5], 4
      %s59 = int_to_ptr.vmem [resolvable:$true] %s58
      %64 = dma.hbm_to_vmem [thread:$0]  %s6, 32, %s59, [#allocation6], 16, 16, 1
    $region29: #{transformer_cross_attn.1} parent=1 // pred_fallthru
      _
    // Predicated region
    $region30: #{transformer_cross_attn.1} parent=1 // pred_check
      _
    $region31: #{transformer_cross_attn.1} parent=1 // pred_check_branch
      %66 = sbr.rel (0) target = $region33
    $region32: #{transformer_cross_attn.1} parent=1 // pred_region
      _
    $region33: #{transformer_cross_attn.1} parent=1 // pred_fallthru
      _
    // Predicated region
    $region34: #{transformer_cross_attn.1} parent=1 // pred_check
      _
    $region35: #{transformer_cross_attn.1} parent=1 // pred_check_branch
      %68 = sbr.rel (0) target = $region37
    $region36: #{transformer_cross_attn.1} parent=1 // pred_region
      %s70 = ssub.s32 32, 32
      %71 = vsyncadd [#allocation6], %s70
      %s72 = sshll.u32 [#allocation7], 4
      %s73 = int_to_ptr.vmem [resolvable:$true] %s72
      %78 = dma.hbm_to_vmem [thread:$0]  %s8, 32, %s73, [#allocation6], 16, 16, 1
    $region37: #{transformer_cross_attn.1} parent=1 // pred_fallthru
      _
    // Predicated region
    $region38: #{transformer_cross_attn.1} parent=1 // pred_check
      _
    $region39: #{transformer_cross_attn.1} parent=1 // pred_check_branch
      %80 = sbr.rel (0) target = $region41
    $region40: #{transformer_cross_attn.1} parent=1 // pred_region
      %s82 = ssub.s32 32, 32
      %83 = vsyncadd [#allocation9], %s82
      %s84 = sshll.u32 [#allocation8], 4
      %s85 = int_to_ptr.vmem [resolvable:$true] %s84
      %90 = dma.hbm_to_vmem [thread:$0]  %s9, 32, %s85, [#allocation9], 16, 16, 1
    $region41: #{transformer_cross_attn.1} parent=1 // pred_fallthru
      _
    // Predicated region
    $region42: #{transformer_cross_attn.1} parent=1 // pred_check
      _
    $region43: #{transformer_cross_attn.1} parent=1 // pred_check_branch
      %92 = sbr.rel (0) target = $region45
    $region44: #{transformer_cross_attn.1} parent=1 // pred_region
      %s94 = ssub.s32 32, 32
      %95 = vsyncadd [#allocation9], %s94
      %s96 = sshll.u32 [#allocation10], 4
      %s97 = int_to_ptr.vmem [resolvable:$true] %s96
      %102 = dma.hbm_to_vmem [thread:$0]  %s10, 32, %s97, [#allocation9], 16, 16, 1
    $region45: #{transformer_cross_attn.1} parent=1 // pred_fallthru
      _
    // Predicated region
    $region46: #{transformer_cross_attn.1} parent=1 // pred_check
      _
    $region47: #{transformer_cross_attn.1} parent=1 // pred_check_branch
      %104 = sbr.rel (0) target = $region49
    $region48: #{transformer_cross_attn.1} parent=1 // pred_region
      _
    $region49: #{transformer_cross_attn.1} parent=1 // pred_fallthru
      _
    // Predicated region
    $region50: #{transformer_cross_attn.1} parent=1 // pred_check
      _
    $region51: #{transformer_cross_attn.1} parent=1 // pred_check_branch
      %106 = sbr.rel (0) target = $region53
    $region52: #{transformer_cross_attn.1} parent=1 // pred_region
      %s108 = ssub.s32 32, 32
      %109 = vsyncadd [#allocation12], %s108
      %s110 = sshll.u32 [#allocation11], 4
      %s111 = int_to_ptr.vmem [resolvable:$true] %s110
      %116 = dma.hbm_to_vmem [thread:$0]  %s12, 32, %s111, [#allocation12], 16, 16, 1
    $region53: #{transformer_cross_attn.1} parent=1 // pred_fallthru
      _
    // Predicated region
    $region54: #{transformer_cross_attn.1} parent=1 // pred_check
      _
    $region55: #{transformer_cross_attn.1} parent=1 // pred_check_branch
      %118 = sbr.rel (0) target = $region57
    $region56: #{transformer_cross_attn.1} parent=1 // pred_region
      _
    $region57: #{transformer_cross_attn.1} parent=1 // pred_fallthru
      _
    // Predicated region
    $region58: #{transformer_cross_attn.1} parent=1 // pred_check
      _
    $region59: #{transformer_cross_attn.1} parent=1 // pred_check_branch
      %120 = sbr.rel (0) target = $region61
    $region60: #{transformer_cross_attn.1} parent=1 // pred_region
      %s122 = ssub.s32 32, 32
      %123 = vsyncadd [#allocation12], %s122
      %s124 = sshll.u32 [#allocation13], 4
      %s125 = int_to_ptr.vmem [resolvable:$true] %s124
      %130 = dma.hbm_to_vmem [thread:$0]  %s14, 32, %s125, [#allocation12], 16, 16, 1
    $region61: #{transformer_cross_attn.1} parent=1 // pred_fallthru
      _
    // Predicated region
    $region62: #{transformer_cross_attn.1} parent=1 // pred_check
      _
    $region63: #{transformer_cross_attn.1} parent=1 // pred_check_branch
      %132 = sbr.rel (0) target = $region65
    $region64: #{transformer_cross_attn.1} parent=1 // pred_region
      %s134 = ssub.s32 32, 32
      %135 = vsyncadd [#allocation15], %s134
      %s136 = sshll.u32 [#allocation14], 4
      %s137 = int_to_ptr.vmem [resolvable:$true] %s136
      %142 = dma.hbm_to_vmem [thread:$0]  %s15, 32, %s137, [#allocation15], 16, 16, 1
    $region65: #{transformer_cross_attn.1} parent=1 // pred_fallthru
      _
    // Predicated region
    $region66: #{transformer_cross_attn.1} parent=1 // pred_check
      _
    $region67: #{transformer_cross_attn.1} parent=1 // pred_check_branch
      %144 = sbr.rel (0) target = $region69
    $region68: #{transformer_cross_attn.1} parent=1 // pred_region
      %s146 = ssub.s32 32, 32
      %147 = vsyncadd [#allocation15], %s146
      %s148 = sshll.u32 [#allocation16], 4
      %s149 = int_to_ptr.vmem [resolvable:$true] %s148
      %154 = dma.hbm_to_vmem [thread:$0]  %s16, 32, %s149, [#allocation15], 16, 16, 1
    $region69: #{transformer_cross_attn.1} parent=1 // pred_fallthru
      _
    // Predicated region
    $region70: #{transformer_cross_attn.1} parent=1 // pred_check
      _
    $region71: #{transformer_cross_attn.1} parent=1 // pred_check_branch
      %156 = sbr.rel (0) target = $region73
    $region72: #{transformer_cross_attn.1} parent=1 // pred_region
      %157 = dma.done [#allocation3], 256
    $region73: #{transformer_cross_attn.1} parent=1 // pred_fallthru
      _
    // Predicated region
    $region74: #{transformer_cross_attn.1} parent=1 // pred_check
      _
    $region75: #{transformer_cross_attn.1} parent=1 // pred_check_branch
      %159 = sbr.rel (0) target = $region77
    $region76: #{transformer_cross_attn.1} parent=1 // pred_region
      %160 = dma.done [#allocation6], 32
    $region77: #{transformer_cross_attn.1} parent=1 // pred_fallthru
      _
    // Predicated region
    $region78: #{transformer_cross_attn.1} parent=1 // pred_check
      _
    $region79: #{transformer_cross_attn.1} parent=1 // pred_check_branch
      %162 = sbr.rel (0) target = $region81
    $region80: #{transformer_cross_attn.1} parent=1 // pred_region
      %163 = dma.done [#allocation6], 32
    $region81: #{transformer_cross_attn.1} parent=1 // pred_fallthru
      _
    // Predicated region
    $region82: #{transformer_cross_attn.1} parent=1 // pred_check
      _
    $region83: #{transformer_cross_attn.1} parent=1 // pred_check_branch
      %165 = sbr.rel (0) target = $region85
    $region84: #{transformer_cross_attn.1} parent=1 // pred_region
      %166 = dma.done [#allocation9], 32
    $region85: #{transformer_cross_attn.1} parent=1 // pred_fallthru
      _
    // Predicated region
    $region86: #{transformer_cross_attn.1} parent=1 // pred_check
      _
    $region87: #{transformer_cross_attn.1} parent=1 // pred_check_branch
      %168 = sbr.rel (0) target = $region89
    $region88: #{transformer_cross_attn.1} parent=1 // pred_region
      %169 = dma.done [#allocation9], 32
    $region89: #{transformer_cross_attn.1} parent=1 // pred_fallthru
      _
    // Predicated region
    $region90: #{transformer_cross_attn.1} parent=1 // pred_check
      _
    $region91: #{transformer_cross_attn.1} parent=1 // pred_check_branch
      %171 = sbr.rel (0) target = $region93
    $region92: #{transformer_cross_attn.1} parent=1 // pred_region
      %172 = dma.done [#allocation12], 32
    $region93: #{transformer_cross_attn.1} parent=1 // pred_fallthru
      _
    // Predicated region
    $region94: #{transformer_cross_attn.1} parent=1 // pred_check
      _
    $region95: #{transformer_cross_attn.1} parent=1 // pred_check_branch
      %174 = sbr.rel (0) target = $region97
    $region96: #{transformer_cross_attn.1} parent=1 // pred_region
      %175 = dma.done [#allocation12], 32
    $region97: #{transformer_cross_attn.1} parent=1 // pred_fallthru
      _
    // Predicated region
    $region98: #{transformer_cross_attn.1} parent=1 // pred_check
      _
    $region99: #{transformer_cross_attn.1} parent=1 // pred_check_branch
      %177 = sbr.rel (0) target = $region101
    $region100: #{transformer_cross_attn.1} parent=1 // pred_region
      %178 = dma.done [#allocation15], 32
    $region101: #{transformer_cross_attn.1} parent=1 // pred_fallthru
      _
    // Predicated region
    $region102: #{transformer_cross_attn.1} parent=1 // pred_check
      _
    $region103: #{transformer_cross_attn.1} parent=1 // pred_check_branch
      %180 = sbr.rel (0) target = $region105
    $region104: #{transformer_cross_attn.1} parent=1 // pred_region
      %181 = dma.done [#allocation15], 32
    $region105: #{transformer_cross_attn.1} parent=1 // pred_fallthru
      _
    %v182 = vld [vmem:[%s2] sm:$0xff]
    %v183 = vld [vmem:[%s2 + $0x8] sm:$0xff]
    %v184 = vld [vmem:[%s0] sm:$0xff]
    %v185 = vld [vmem:[%s0 + $0x8] sm:$0xff]
    %v186 = vadd.f32 %v184, %v182
    %v187 = vadd.f32 %v185, %v183
    %v188 = vld [vmem:[#allocation2] sm:$0xff]
    %v189 = vld [vmem:[#allocation2 + $0x8] sm:$0xff]
    %v190 = vadd.f32 %v188, %v182
    %v191 = vadd.f32 %v189, %v183
    %v192 = vld [vmem:[%s3] sm:$0xff]
    %v193 = vld [vmem:[%s3 + $0x8] sm:$0xff]
    %v194 = vld [vmem:[%s3 + $0x10] sm:$0xff]
    %v195 = vld [vmem:[%s3 + $0x18] sm:$0xff]
    %v196 = vld [vmem:[%s3 + $0x20] sm:$0xff]
    %v197 = vld [vmem:[%s3 + $0x28] sm:$0xff]
    %v198 = vld [vmem:[%s3 + $0x30] sm:$0xff]
    %v199 = vld [vmem:[%s3 + $0x38] sm:$0xff]
    %v200 = vld [vmem:[%s4] sm:$0xff]
    %v201 = vld [vmem:[%s4 + $0x8] sm:$0xff]
    %v202 = vld [vmem:[%s4 + $0x10] sm:$0xff]
    %v203 = vld [vmem:[%s4 + $0x18] sm:$0xff]
    %v204 = vld [vmem:[%s5] sm:$0xff]
    %v205 = vld [vmem:[%s5 + $0x8] sm:$0xff]
    %v206 = vld [vmem:[%s5 + $0x10] sm:$0xff]
    %v207 = vld [vmem:[%s5 + $0x18] sm:$0xff]
    %v208 = vld [vmem:[#allocation5] sm:$0x1]
    %v209 = vld [vmem:[%s7] sm:$0xff]
    %v210 = vld [vmem:[%s7 + $0x8] sm:$0xff]
    %v211 = vld [vmem:[%s7 + $0x10] sm:$0xff]
    %v212 = vld [vmem:[%s7 + $0x18] sm:$0xff]
    %v213 = vld [vmem:[#allocation7] sm:$0x1]
    %v214 = vld [vmem:[#allocation8] sm:$0x1]
    %v215 = vld [vmem:[#allocation10] sm:$0x1]
    %v216 = vld [vmem:[%s11] sm:$0xff]
    %v217 = vld [vmem:[%s11 + $0x8] sm:$0xff]
    %v218 = vld [vmem:[%s11 + $0x10] sm:$0xff]
    %v219 = vld [vmem:[%s11 + $0x18] sm:$0xff]
    %v220 = vld [vmem:[#allocation11] sm:$0x1]
    %v221 = vld [vmem:[%s13] sm:$0xff]
    %v222 = vld [vmem:[%s13 + $0x8] sm:$0xff]
    %v223 = vld [vmem:[%s13 + $0x10] sm:$0xff]
    %v224 = vld [vmem:[%s13 + $0x18] sm:$0xff]
    %v225 = vld [vmem:[%s13 + $0x20] sm:$0xff]
    %v226 = vld [vmem:[%s13 + $0x28] sm:$0xff]
    %v227 = vld [vmem:[%s13 + $0x30] sm:$0xff]
    %v228 = vld [vmem:[%s13 + $0x38] sm:$0xff]
    %v229 = vld [vmem:[#allocation13] sm:$0x1]
    %v230 = vld [vmem:[#allocation14] sm:$0x1]
    %v231 = vld [vmem:[#allocation16] sm:$0x1]
    %v233 = vlaneseq
    %v234 = vshrl.u32 %v233, 7
    %v235 = vsub.s32 0, %v234
    %v236 = vrot.slane %v208, %v235
    %vm238 = vcmask 261120
    %v240 = vsel %vm238, %v190, 0
    %v243 = vsel %vm238, %v191, 0
    %v246 = vsel %vm238, %v186, 0
    %v249 = vsel %vm238, %v187, 0
    %251 = vmatprep.subr.mxu0 0.0
    %252 = vmatpush1.msra.mxu0 %v204
    %253 = vmatprep.subr.mxu0 0.0
    %254 = vmatpush1.msra.mxu0 %v205
    %255 = vmatprep.subr.mxu0 0.0
    %256 = vmatpush1.msra.mxu0 %v206
    %257 = vmatprep.subr.mxu0 0.0
    %258 = vmatpush1.msra.mxu0 %v207
    %259 = vmatprep.subr.mxu0 0.0
    %260 = vmatpush1.msra.mxu0 0.0
    %261 = vmatprep.subr.mxu0 0.0
    %262 = vmatpush1.msra.mxu0 0.0
    %263 = vmatprep.subr.mxu0 0.0
    %264 = vmatpush1.msra.mxu0 0.0
    %265 = vmatprep.subr.mxu0 0.0
    %266 = vmatpush1.msra.mxu0 0.0
    %267 = vmatprep.subr.mxu0 0.0
    %268 = vmatpush1.msra.mxu0 0.0
    %269 = vmatprep.subr.mxu0 0.0
    %270 = vmatpush1.msra.mxu0 0.0
    %271 = vmatprep.subr.mxu0 0.0
    %272 = vmatpush1.msra.mxu0 0.0
    %273 = vmatprep.subr.mxu0 0.0
    %274 = vmatpush1.msra.mxu0 0.0
    %275 = vmatprep.subr.mxu0 0.0
    %276 = vmatpush1.msra.mxu0 0.0
    %277 = vmatprep.subr.mxu0 0.0
    %278 = vmatpush1.msra.mxu0 0.0
    %279 = vmatprep.subr.mxu0 0.0
    %280 = vmatpush1.msra.mxu0 0.0
    %281 = vmatprep.subr.mxu0 0.0
    %282 = vmatpush1.msra.mxu0 0.0
    %283 = vmatprep.subr.mxu0 0.0
    %284 = vmatpush1.msra.mxu0 0.0
    %285 = vmatprep.subr.mxu0 0.0
    %286 = vmatpush1.msra.mxu0 0.0
    %287 = vmatprep.subr.mxu0 0.0
    %288 = vmatpush1.msra.mxu0 0.0
    %289 = vmatprep.subr.mxu0 0.0
    %290 = vmatpush1.msra.mxu0 0.0
    %291 = vmatprep.subr.mxu0 0.0
    %292 = vmatpush1.msra.mxu0 0.0
    %293 = vmatprep.subr.mxu0 0.0
    %294 = vmatpush1.msra.mxu0 0.0
    %295 = vmatprep.subr.mxu0 0.0
    %296 = vmatpush1.msra.mxu0 0.0
    %297 = vmatprep.subr.mxu0 0.0
    %298 = vmatpush1.msra.mxu0 0.0
    %299 = vmatprep.subr.mxu0 0.0
    %300 = vmatpush1.msra.mxu0 0.0
    %301 = vmatprep.subr.mxu0 0.0
    %302 = vmatpush1.msra.mxu0 0.0
    %303 = vmatprep.subr.mxu0 0.0
    %304 = vmatpush1.msra.mxu0 0.0
    %305 = vmatprep.subr.mxu0 0.0
    %306 = vmatpush1.msra.mxu0 0.0
    %307 = vmatprep.subr.mxu0 0.0
    %308 = vmatpush1.msra.mxu0 0.0
    %309 = vmatprep.subr.mxu0 0.0
    %310 = vmatpush1.msra.mxu0 0.0
    %311 = vmatprep.subr.mxu0 0.0
    %312 = vmatpush1.msra.mxu0 0.0
    %313 = vmatprep.subr.mxu0 0.0
    %314 = vmatpush1.msra.mxu0 0.0
    %315 = vmatprep.mubr.f32.mxu0 0.0
    %316 = vmatmul.mubr.f32.gmra.mrb[0].mxu0 %v240
    %v317 = vpop.f32.mrb[0].mxu0
    %v318 = vadd.f32 %v236, %v317
    %v319 = vpop.f32.mrb[0].mxu0
    %320 = vmatprep.mubr.f32.mxu0 0.0
    %321 = vmatmul.mubr.f32.gmra.mrb[0].mxu0 %v243
    %v322 = vpop.f32.mrb[0].mxu0
    %v323 = vadd.f32 %v236, %v322
    %v324 = vpop.f32.mrb[0].mxu0
    %325 = vmatprep.mubr.f32.mxu0 0.0
    %326 = vmatmul.mubr.f32.gmra.mrb[0].mxu0 %v246
    %v327 = vpop.f32.mrb[0].mxu0
    %v328 = vadd.f32 %v236, %v327
    %v329 = vpop.f32.mrb[0].mxu0
    %330 = vmatprep.mubr.f32.mxu0 0.0
    %331 = vmatmul.mubr.f32.gmra.mrb[0].mxu0 %v249
    %v332 = vpop.f32.mrb[0].mxu0
    %v333 = vadd.f32 %v236, %v332
    %v334 = vpop.f32.mrb[0].mxu0
    %335 = vdwg.mxu0
    %338 = vrot.lane.b32.xlu0 %v328, 96
    %v339 = vpop.permute.xlu0 %338
    %340 = vrot.lane.b32.xlu0 %v333, 96
    %v341 = vpop.permute.xlu0 %340
    %344 = vxpose.xlu0.b32.start [1/16] %v339, 128
    %345 = vxpose.xlu0.b32.cont [2/16] 0.0, 128
    %346 = vxpose.xlu0.b32.cont [3/16] 0.0, 128
    %347 = vxpose.xlu0.b32.cont [4/16] 0.0, 128
    %348 = vxpose.xlu0.b32.cont [5/16] 0.0, 128
    %349 = vxpose.xlu0.b32.cont [6/16] 0.0, 128
    %350 = vxpose.xlu0.b32.cont [7/16] 0.0, 128
    %351 = vxpose.xlu0.b32.cont [8/16] 0.0, 128
    %352 = vxpose.xlu0.b32.cont [9/16] 0.0, 128
    %353 = vxpose.xlu0.b32.cont [10/16] 0.0, 128
    %354 = vxpose.xlu0.b32.cont [11/16] 0.0, 128
    %355 = vxpose.xlu0.b32.cont [12/16] 0.0, 128
    %356 = vxpose.xlu0.b32.cont [13/16] 0.0, 128
    %357 = vxpose.xlu0.b32.cont [14/16] 0.0, 128
    %358 = vxpose.xlu0.b32.cont [15/16] 0.0, 128
    %359 = vxpose.xlu0.b32.end [16/16] 0.0, 128
    %v360 = vpop.trf.xlu0
    %v361 = vpop.trf.xlu0
    %v362 = vpop.trf.xlu0
    %v363 = vpop.trf.xlu0
    %v364 = vpop.trf.xlu0
    %v365 = vpop.trf.xlu0
    %v366 = vpop.trf.xlu0
    %v367 = vpop.trf.xlu0
    %v368 = vpop.trf.xlu0
    %v369 = vpop.trf.xlu0
    %v370 = vpop.trf.xlu0
    %v371 = vpop.trf.xlu0
    %v372 = vpop.trf.xlu0
    %v373 = vpop.trf.xlu0
    %v374 = vpop.trf.xlu0
    %v375 = vpop.trf.xlu0
    %376 = vxpose.xlu0.b32.start [1/16] %v341, 128
    %377 = vxpose.xlu0.b32.cont [2/16] 0.0, 128
    %378 = vxpose.xlu0.b32.cont [3/16] 0.0, 128
    %379 = vxpose.xlu0.b32.cont [4/16] 0.0, 128
    %380 = vxpose.xlu0.b32.cont [5/16] 0.0, 128
    %381 = vxpose.xlu0.b32.cont [6/16] 0.0, 128
    %382 = vxpose.xlu0.b32.cont [7/16] 0.0, 128
    %383 = vxpose.xlu0.b32.cont [8/16] 0.0, 128
    %384 = vxpose.xlu0.b32.cont [9/16] 0.0, 128
    %385 = vxpose.xlu0.b32.cont [10/16] 0.0, 128
    %386 = vxpose.xlu0.b32.cont [11/16] 0.0, 128
    %387 = vxpose.xlu0.b32.cont [12/16] 0.0, 128
    %388 = vxpose.xlu0.b32.cont [13/16] 0.0, 128
    %389 = vxpose.xlu0.b32.cont [14/16] 0.0, 128
    %390 = vxpose.xlu0.b32.cont [15/16] 0.0, 128
    %391 = vxpose.xlu0.b32.end [16/16] 0.0, 128
    %v392 = vpop.trf.xlu0
    %v393 = vpop.trf.xlu0
    %v394 = vpop.trf.xlu0
    %v395 = vpop.trf.xlu0
    %v396 = vpop.trf.xlu0
    %v397 = vpop.trf.xlu0
    %v398 = vpop.trf.xlu0
    %v399 = vpop.trf.xlu0
    %v400 = vpop.trf.xlu0
    %v401 = vpop.trf.xlu0
    %v402 = vpop.trf.xlu0
    %v403 = vpop.trf.xlu0
    %v404 = vpop.trf.xlu0
    %v405 = vpop.trf.xlu0
    %v406 = vpop.trf.xlu0
    %v407 = vpop.trf.xlu0
    %416 = vrot.lane.b32.xlu0 %v360, 8
    %v417 = vpop.permute.xlu0 %416
    %418 = vrot.lane.b32.xlu0 %v361, 8
    %v419 = vpop.permute.xlu0 %418
    %420 = vrot.lane.b32.xlu0 %v362, 8
    %v421 = vpop.permute.xlu0 %420
    %422 = vrot.lane.b32.xlu0 %v363, 8
    %v423 = vpop.permute.xlu0 %422
    %424 = vrot.lane.b32.xlu0 %v392, 8
    %v425 = vpop.permute.xlu0 %424
    %426 = vrot.lane.b32.xlu0 %v393, 8
    %v427 = vpop.permute.xlu0 %426
    %428 = vrot.lane.b32.xlu0 %v394, 8
    %v429 = vpop.permute.xlu0 %428
    %430 = vrot.lane.b32.xlu0 %v395, 8
    %v431 = vpop.permute.xlu0 %430
    %440 = vrot.lane.b32.xlu0 %v360, 16
    %v441 = vpop.permute.xlu0 %440
    %442 = vrot.lane.b32.xlu0 %v361, 16
    %v443 = vpop.permute.xlu0 %442
    %444 = vrot.lane.b32.xlu0 %v362, 16
    %v445 = vpop.permute.xlu0 %444
    %446 = vrot.lane.b32.xlu0 %v363, 16
    %v447 = vpop.permute.xlu0 %446
    %448 = vrot.lane.b32.xlu0 %v392, 16
    %v449 = vpop.permute.xlu0 %448
    %450 = vrot.lane.b32.xlu0 %v393, 16
    %v451 = vpop.permute.xlu0 %450
    %452 = vrot.lane.b32.xlu0 %v394, 16
    %v453 = vpop.permute.xlu0 %452
    %454 = vrot.lane.b32.xlu0 %v395, 16
    %v455 = vpop.permute.xlu0 %454
    %464 = vrot.lane.b32.xlu0 %v360, 24
    %v465 = vpop.permute.xlu0 %464
    %466 = vrot.lane.b32.xlu0 %v361, 24
    %v467 = vpop.permute.xlu0 %466
    %468 = vrot.lane.b32.xlu0 %v362, 24
    %v469 = vpop.permute.xlu0 %468
    %470 = vrot.lane.b32.xlu0 %v363, 24
    %v471 = vpop.permute.xlu0 %470
    %472 = vrot.lane.b32.xlu0 %v392, 24
    %v473 = vpop.permute.xlu0 %472
    %474 = vrot.lane.b32.xlu0 %v393, 24
    %v475 = vpop.permute.xlu0 %474
    %476 = vrot.lane.b32.xlu0 %v394, 24
    %v477 = vpop.permute.xlu0 %476
    %478 = vrot.lane.b32.xlu0 %v395, 24
    %v479 = vpop.permute.xlu0 %478
    %488 = vrot.lane.b32.xlu0 %v360, 32
    %v489 = vpop.permute.xlu0 %488
    %490 = vrot.lane.b32.xlu0 %v361, 32
    %v491 = vpop.permute.xlu0 %490
    %492 = vrot.lane.b32.xlu0 %v362, 32
    %v493 = vpop.permute.xlu0 %492
    %494 = vrot.lane.b32.xlu0 %v363, 32
    %v495 = vpop.permute.xlu0 %494
    %496 = vrot.lane.b32.xlu0 %v392, 32
    %v497 = vpop.permute.xlu0 %496
    %498 = vrot.lane.b32.xlu0 %v393, 32
    %v499 = vpop.permute.xlu0 %498
    %500 = vrot.lane.b32.xlu0 %v394, 32
    %v501 = vpop.permute.xlu0 %500
    %502 = vrot.lane.b32.xlu0 %v395, 32
    %v503 = vpop.permute.xlu0 %502
    %512 = vrot.lane.b32.xlu0 %v360, 40
    %v513 = vpop.permute.xlu0 %512
    %514 = vrot.lane.b32.xlu0 %v361, 40
    %v515 = vpop.permute.xlu0 %514
    %516 = vrot.lane.b32.xlu0 %v362, 40
    %v517 = vpop.permute.xlu0 %516
    %518 = vrot.lane.b32.xlu0 %v363, 40
    %v519 = vpop.permute.xlu0 %518
    %520 = vrot.lane.b32.xlu0 %v392, 40
    %v521 = vpop.permute.xlu0 %520
    %522 = vrot.lane.b32.xlu0 %v393, 40
    %v523 = vpop.permute.xlu0 %522
    %524 = vrot.lane.b32.xlu0 %v394, 40
    %v525 = vpop.permute.xlu0 %524
    %526 = vrot.lane.b32.xlu0 %v395, 40
    %v527 = vpop.permute.xlu0 %526
    %536 = vrot.lane.b32.xlu0 %v360, 48
    %v537 = vpop.permute.xlu0 %536
    %538 = vrot.lane.b32.xlu0 %v361, 48
    %v539 = vpop.permute.xlu0 %538
    %540 = vrot.lane.b32.xlu0 %v362, 48
    %v541 = vpop.permute.xlu0 %540
    %542 = vrot.lane.b32.xlu0 %v363, 48
    %v543 = vpop.permute.xlu0 %542
    %544 = vrot.lane.b32.xlu0 %v392, 48
    %v545 = vpop.permute.xlu0 %544
    %546 = vrot.lane.b32.xlu0 %v393, 48
    %v547 = vpop.permute.xlu0 %546
    %548 = vrot.lane.b32.xlu0 %v394, 48
    %v549 = vpop.permute.xlu0 %548
    %550 = vrot.lane.b32.xlu0 %v395, 48
    %v551 = vpop.permute.xlu0 %550
    %560 = vrot.lane.b32.xlu0 %v360, 56
    %v561 = vpop.permute.xlu0 %560
    %562 = vrot.lane.b32.xlu0 %v361, 56
    %v563 = vpop.permute.xlu0 %562
    %564 = vrot.lane.b32.xlu0 %v362, 56
    %v565 = vpop.permute.xlu0 %564
    %566 = vrot.lane.b32.xlu0 %v363, 56
    %v567 = vpop.permute.xlu0 %566
    %568 = vrot.lane.b32.xlu0 %v392, 56
    %v569 = vpop.permute.xlu0 %568
    %570 = vrot.lane.b32.xlu0 %v393, 56
    %v571 = vpop.permute.xlu0 %570
    %572 = vrot.lane.b32.xlu0 %v394, 56
    %v573 = vpop.permute.xlu0 %572
    %574 = vrot.lane.b32.xlu0 %v395, 56
    %v575 = vpop.permute.xlu0 %574
    %vm584 = vcmask 64512
    %v585 = vsel %vm584, %v360, %v417
    %v586 = vsel %vm584, %v361, %v419
    %v587 = vsel %vm584, %v362, %v421
    %v588 = vsel %vm584, %v363, %v423
    %v589 = vsel %vm584, %v392, %v425
    %v590 = vsel %vm584, %v393, %v427
    %v591 = vsel %vm584, %v394, %v429
    %v592 = vsel %vm584, %v395, %v431
    %vm593 = vcmask 130048
    %v594 = vsel %vm593, %v585, %v441
    %v595 = vsel %vm593, %v586, %v443
    %v596 = vsel %vm593, %v587, %v445
    %v597 = vsel %vm593, %v588, %v447
    %v598 = vsel %vm593, %v589, %v449
    %v599 = vsel %vm593, %v590, %v451
    %v600 = vsel %vm593, %v591, %v453
    %v601 = vsel %vm593, %v592, %v455
    %vm602 = vcmask 195584
    %v603 = vsel %vm602, %v594, %v465
    %v604 = vsel %vm602, %v595, %v467
    %v605 = vsel %vm602, %v596, %v469
    %v606 = vsel %vm602, %v597, %v471
    %v607 = vsel %vm602, %v598, %v473
    %v608 = vsel %vm602, %v599, %v475
    %v609 = vsel %vm602, %v600, %v477
    %v610 = vsel %vm602, %v601, %v479
    %v611 = vsel %vm238, %v603, %v489
    %v612 = vsel %vm238, %v604, %v491
    %v613 = vsel %vm238, %v605, %v493
    %v614 = vsel %vm238, %v606, %v495
    %v615 = vsel %vm238, %v607, %v497
    %v616 = vsel %vm238, %v608, %v499
    %v617 = vsel %vm238, %v609, %v501
    %v618 = vsel %vm238, %v610, %v503
    %vm619 = vcmask 326656
    %v620 = vsel %vm619, %v611, %v513
    %v621 = vsel %vm619, %v612, %v515
    %v622 = vsel %vm619, %v613, %v517
    %v623 = vsel %vm619, %v614, %v519
    %v624 = vsel %vm619, %v615, %v521
    %v625 = vsel %vm619, %v616, %v523
    %v626 = vsel %vm619, %v617, %v525
    %v627 = vsel %vm619, %v618, %v527
    %vm628 = vcmask 392192
    %v629 = vsel %vm628, %v620, %v537
    %v630 = vsel %vm628, %v621, %v539
    %v631 = vsel %vm628, %v622, %v541
    %v632 = vsel %vm628, %v623, %v543
    %v633 = vsel %vm628, %v624, %v545
    %v634 = vsel %vm628, %v625, %v547
    %v635 = vsel %vm628, %v626, %v549
    %v636 = vsel %vm628, %v627, %v551
    %vm637 = vcmask 457728
    %v638 = vsel %vm637, %v629, %v561
    %v639 = vsel %vm637, %v630, %v563
    %v640 = vsel %vm637, %v631, %v565
    %v641 = vsel %vm637, %v632, %v567
    %v642 = vsel %vm637, %v633, %v569
    %v643 = vsel %vm637, %v634, %v571
    %v644 = vsel %vm637, %v635, %v573
    %v645 = vsel %vm637, %v636, %v575
    %v646 = vmul.f32 %v638, %v200
    %v647 = vmul.f32 %v639, %v201
    %v648 = vmul.f32 %v640, %v202
    %v649 = vmul.f32 %v641, %v203
    %v650 = vmul.f32 %v642, %v200
    %v651 = vmul.f32 %v643, %v201
    %v652 = vmul.f32 %v644, %v202
    %v653 = vmul.f32 %v645, %v203
    %662 = vrot.lane.b32.xlu0 %v192, 64
    %v663 = vpop.permute.xlu0 %662
    %664 = vrot.lane.b32.xlu0 %v193, 64
    %v665 = vpop.permute.xlu0 %664
    %666 = vrot.lane.b32.xlu0 %v194, 64
    %v667 = vpop.permute.xlu0 %666
    %668 = vrot.lane.b32.xlu0 %v195, 64
    %v669 = vpop.permute.xlu0 %668
    %670 = vrot.lane.b32.xlu0 %v196, 64
    %v671 = vpop.permute.xlu0 %670
    %672 = vrot.lane.b32.xlu0 %v197, 64
    %v673 = vpop.permute.xlu0 %672
    %674 = vrot.lane.b32.xlu0 %v198, 64
    %v675 = vpop.permute.xlu0 %674
    %676 = vrot.lane.b32.xlu0 %v199, 64
    %v677 = vpop.permute.xlu0 %676
    %v686 = vmul.f32 %v328, %v663
    %v687 = vmul.f32 %v328, %v665
    %v688 = vmul.f32 %v328, %v667
    %v689 = vmul.f32 %v328, %v669
    %v690 = vmul.f32 %v328, %v671
    %v691 = vmul.f32 %v328, %v673
    %v692 = vmul.f32 %v328, %v675
    %v693 = vmul.f32 %v328, %v677
    %v694 = vmul.f32 %v333, %v663
    %v695 = vmul.f32 %v333, %v665
    %v696 = vmul.f32 %v333, %v667
    %v697 = vmul.f32 %v333, %v669
    %v698 = vmul.f32 %v333, %v671
    %v699 = vmul.f32 %v333, %v673
    %v700 = vmul.f32 %v333, %v675
    %v701 = vmul.f32 %v333, %v677
    %v703 = vsel %vm238, %v318, 0
    %705 = vmatprep.subr.mxu0 0.0
    %706 = vmatpush1.msra.mxu0 %v646
    %707 = vmatprep.subr.mxu0 0.0
    %708 = vmatpush1.msra.mxu0 %v647
    %709 = vmatprep.subr.mxu0 0.0
    %710 = vmatpush1.msra.mxu0 %v648
    %711 = vmatprep.subr.mxu0 0.0
    %712 = vmatpush1.msra.mxu0 %v649
    %713 = vmatprep.subr.mxu0 0.0
    %714 = vmatpush1.msra.mxu0 0.0
    %715 = vmatprep.subr.mxu0 0.0
    %716 = vmatpush1.msra.mxu0 0.0
    %717 = vmatprep.subr.mxu0 0.0
    %718 = vmatpush1.msra.mxu0 0.0
    %719 = vmatprep.subr.mxu0 0.0
    %720 = vmatpush1.msra.mxu0 0.0
    %721 = vmatprep.subr.mxu0 0.0
    %722 = vmatpush1.msra.mxu0 0.0
    %723 = vmatprep.subr.mxu0 0.0
    %724 = vmatpush1.msra.mxu0 0.0
    %725 = vmatprep.subr.mxu0 0.0
    %726 = vmatpush1.msra.mxu0 0.0
    %727 = vmatprep.subr.mxu0 0.0
    %728 = vmatpush1.msra.mxu0 0.0
    %729 = vmatprep.subr.mxu0 0.0
    %730 = vmatpush1.msra.mxu0 0.0
    %731 = vmatprep.subr.mxu0 0.0
    %732 = vmatpush1.msra.mxu0 0.0
    %733 = vmatprep.subr.mxu0 0.0
    %734 = vmatpush1.msra.mxu0 0.0
    %735 = vmatprep.subr.mxu0 0.0
    %736 = vmatpush1.msra.mxu0 0.0
    %737 = vmatprep.subr.mxu0 0.0
    %738 = vmatpush1.msra.mxu0 0.0
    %739 = vmatprep.subr.mxu0 0.0
    %740 = vmatpush1.msra.mxu0 0.0
    %741 = vmatprep.subr.mxu0 0.0
    %742 = vmatpush1.msra.mxu0 0.0
    %743 = vmatprep.subr.mxu0 0.0
    %744 = vmatpush1.msra.mxu0 0.0
    %745 = vmatprep.subr.mxu0 0.0
    %746 = vmatpush1.msra.mxu0 0.0
    %747 = vmatprep.subr.mxu0 0.0
    %748 = vmatpush1.msra.mxu0 0.0
    %749 = vmatprep.subr.mxu0 0.0
    %750 = vmatpush1.msra.mxu0 0.0
    %751 = vmatprep.subr.mxu0 0.0
    %752 = vmatpush1.msra.mxu0 0.0
    %753 = vmatprep.subr.mxu0 0.0
    %754 = vmatpush1.msra.mxu0 0.0
    %755 = vmatprep.subr.mxu0 0.0
    %756 = vmatpush1.msra.mxu0 0.0
    %757 = vmatprep.subr.mxu0 0.0
    %758 = vmatpush1.msra.mxu0 0.0
    %759 = vmatprep.subr.mxu0 0.0
    %760 = vmatpush1.msra.mxu0 0.0
    %761 = vmatprep.subr.mxu0 0.0
    %762 = vmatpush1.msra.mxu0 0.0
    %763 = vmatprep.subr.mxu0 0.0
    %764 = vmatpush1.msra.mxu0 0.0
    %765 = vmatprep.subr.mxu0 0.0
    %766 = vmatpush1.msra.mxu0 0.0
    %767 = vmatprep.subr.mxu0 0.0
    %768 = vmatpush1.msra.mxu0 0.0
    %769 = vmatprep.mubr.f32.mxu0 0.0
    %770 = vmatmul.mubr.f32.gmra.mrb[0].mxu0 %v703
    %v771 = vpop.f32.mrb[0].mxu0
    %v772 = vadd.f32 0.0, %v771
    %v773 = vpop.f32.mrb[0].mxu0
    %774 = vdwg.mxu0
    %v776 = vsel %vm238, %v323, 0
    %778 = vmatprep.subr.mxu0 0.0
    %779 = vmatpush1.msra.mxu0 %v650
    %780 = vmatprep.subr.mxu0 0.0
    %781 = vmatpush1.msra.mxu0 %v651
    %782 = vmatprep.subr.mxu0 0.0
    %783 = vmatpush1.msra.mxu0 %v652
    %784 = vmatprep.subr.mxu0 0.0
    %785 = vmatpush1.msra.mxu0 %v653
    %786 = vmatprep.subr.mxu0 0.0
    %787 = vmatpush1.msra.mxu0 0.0
    %788 = vmatprep.subr.mxu0 0.0
    %789 = vmatpush1.msra.mxu0 0.0
    %790 = vmatprep.subr.mxu0 0.0
    %791 = vmatpush1.msra.mxu0 0.0
    %792 = vmatprep.subr.mxu0 0.0
    %793 = vmatpush1.msra.mxu0 0.0
    %794 = vmatprep.subr.mxu0 0.0
    %795 = vmatpush1.msra.mxu0 0.0
    %796 = vmatprep.subr.mxu0 0.0
    %797 = vmatpush1.msra.mxu0 0.0
    %798 = vmatprep.subr.mxu0 0.0
    %799 = vmatpush1.msra.mxu0 0.0
    %800 = vmatprep.subr.mxu0 0.0
    %801 = vmatpush1.msra.mxu0 0.0
    %802 = vmatprep.subr.mxu0 0.0
    %803 = vmatpush1.msra.mxu0 0.0
    %804 = vmatprep.subr.mxu0 0.0
    %805 = vmatpush1.msra.mxu0 0.0
    %806 = vmatprep.subr.mxu0 0.0
    %807 = vmatpush1.msra.mxu0 0.0
    %808 = vmatprep.subr.mxu0 0.0
    %809 = vmatpush1.msra.mxu0 0.0
    %810 = vmatprep.subr.mxu0 0.0
    %811 = vmatpush1.msra.mxu0 0.0
    %812 = vmatprep.subr.mxu0 0.0
    %813 = vmatpush1.msra.mxu0 0.0
    %814 = vmatprep.subr.mxu0 0.0
    %815 = vmatpush1.msra.mxu0 0.0
    %816 = vmatprep.subr.mxu0 0.0
    %817 = vmatpush1.msra.mxu0 0.0
    %818 = vmatprep.subr.mxu0 0.0
    %819 = vmatpush1.msra.mxu0 0.0
    %820 = vmatprep.subr.mxu0 0.0
    %821 = vmatpush1.msra.mxu0 0.0
    %822 = vmatprep.subr.mxu0 0.0
    %823 = vmatpush1.msra.mxu0 0.0
    %824 = vmatprep.subr.mxu0 0.0
    %825 = vmatpush1.msra.mxu0 0.0
    %826 = vmatprep.subr.mxu0 0.0
    %827 = vmatpush1.msra.mxu0 0.0
    %828 = vmatprep.subr.mxu0 0.0
    %829 = vmatpush1.msra.mxu0 0.0
    %830 = vmatprep.subr.mxu0 0.0
    %831 = vmatpush1.msra.mxu0 0.0
    %832 = vmatprep.subr.mxu0 0.0
    %833 = vmatpush1.msra.mxu0 0.0
    %834 = vmatprep.subr.mxu0 0.0
    %835 = vmatpush1.msra.mxu0 0.0
    %836 = vmatprep.subr.mxu0 0.0
    %837 = vmatpush1.msra.mxu0 0.0
    %838 = vmatprep.subr.mxu0 0.0
    %839 = vmatpush1.msra.mxu0 0.0
    %840 = vmatprep.subr.mxu0 0.0
    %841 = vmatpush1.msra.mxu0 0.0
    %842 = vmatprep.mubr.f32.mxu0 0.0
    %843 = vmatmul.mubr.f32.gmra.mrb[0].mxu0 %v776
    %v844 = vpop.f32.mrb[0].mxu0
    %v845 = vadd.f32 0.0, %v844
    %v846 = vpop.f32.mrb[0].mxu0
    %847 = vdwg.mxu0
    %vm848 = vcmask 523264
    %v849 = vsel %vm848, %v772, -inf
    %850 = vmax.xlane.f32.xlu0 %v849
    %v851 = vpop.xlane.xlu0 %850
    %v852 = vsel %vm848, %v845, -inf
    %853 = vmax.xlane.f32.xlu0 %v852
    %v854 = vpop.xlane.xlu0 %853
    %v855 = vsub.f32 %v772, %v851
    %v856 = vsub.f32 %v845, %v854
    %v857 = vmul.f32 %v855, 1.442695
    %v858 = vpow.pop %v857
    %v859 = vmul.f32 %v856, 1.442695
    %v860 = vpow.pop %v859
    %v862 = vsel %vm848, %v858, 0
    %v865 = vsel %vm848, %v860, 0
    %867 = vmatprep.subr.mxu0 0.0
    %868 = vmatpush1.msra.mxu0 %v192
    %869 = vmatprep.subr.mxu0 0.0
    %870 = vmatpush1.msra.mxu0 %v193
    %871 = vmatprep.subr.mxu0 0.0
    %872 = vmatpush1.msra.mxu0 %v194
    %873 = vmatprep.subr.mxu0 0.0
    %874 = vmatpush1.msra.mxu0 %v195
    %875 = vmatprep.subr.mxu0 0.0
    %876 = vmatpush1.msra.mxu0 %v196
    %877 = vmatprep.subr.mxu0 0.0
    %878 = vmatpush1.msra.mxu0 %v197
    %879 = vmatprep.subr.mxu0 0.0
    %880 = vmatpush1.msra.mxu0 %v198
    %881 = vmatprep.subr.mxu0 0.0
    %882 = vmatpush1.msra.mxu0 %v199
    %883 = vmatprep.subr.mxu0 0.0
    %884 = vmatpush1.msra.mxu0 0.0
    %885 = vmatprep.subr.mxu0 0.0
    %886 = vmatpush1.msra.mxu0 0.0
    %887 = vmatprep.subr.mxu0 0.0
    %888 = vmatpush1.msra.mxu0 0.0
    %889 = vmatprep.subr.mxu0 0.0
    %890 = vmatpush1.msra.mxu0 0.0
    %891 = vmatprep.subr.mxu0 0.0
    %892 = vmatpush1.msra.mxu0 0.0
    %893 = vmatprep.subr.mxu0 0.0
    %894 = vmatpush1.msra.mxu0 0.0
    %895 = vmatprep.subr.mxu0 0.0
    %896 = vmatpush1.msra.mxu0 0.0
    %897 = vmatprep.subr.mxu0 0.0
    %898 = vmatpush1.msra.mxu0 0.0
    %899 = vmatprep.subr.mxu0 0.0
    %900 = vmatpush1.msra.mxu0 0.0
    %901 = vmatprep.subr.mxu0 0.0
    %902 = vmatpush1.msra.mxu0 0.0
    %903 = vmatprep.subr.mxu0 0.0
    %904 = vmatpush1.msra.mxu0 0.0
    %905 = vmatprep.subr.mxu0 0.0
    %906 = vmatpush1.msra.mxu0 0.0
    %907 = vmatprep.subr.mxu0 0.0
    %908 = vmatpush1.msra.mxu0 0.0
    %909 = vmatprep.subr.mxu0 0.0
    %910 = vmatpush1.msra.mxu0 0.0
    %911 = vmatprep.subr.mxu0 0.0
    %912 = vmatpush1.msra.mxu0 0.0
    %913 = vmatprep.subr.mxu0 0.0
    %914 = vmatpush1.msra.mxu0 0.0
    %915 = vmatprep.subr.mxu0 0.0
    %916 = vmatpush1.msra.mxu0 0.0
    %917 = vmatprep.subr.mxu0 0.0
    %918 = vmatpush1.msra.mxu0 0.0
    %919 = vmatprep.subr.mxu0 0.0
    %920 = vmatpush1.msra.mxu0 0.0
    %921 = vmatprep.subr.mxu0 0.0
    %922 = vmatpush1.msra.mxu0 0.0
    %923 = vmatprep.subr.mxu0 0.0
    %924 = vmatpush1.msra.mxu0 0.0
    %925 = vmatprep.subr.mxu0 0.0
    %926 = vmatpush1.msra.mxu0 0.0
    %927 = vmatprep.subr.mxu0 0.0
    %928 = vmatpush1.msra.mxu0 0.0
    %929 = vmatprep.subr.mxu0 0.0
    %930 = vmatpush1.msra.mxu0 0.0
    %931 = vmatprep.mubr.f32.mxu0 0.0
    %932 = vmatmul.mubr.f32.gmra.mrb[0].mxu0 %v862
    %v933 = vpop.f32.mrb[0].mxu0
    %v934 = vadd.f32 0.0, %v933
    %v935 = vpop.f32.mrb[0].mxu0
    %936 = vmatprep.mubr.f32.mxu0 0.0
    %937 = vmatmul.mubr.f32.gmra.mrb[0].mxu0 %v865
    %v938 = vpop.f32.mrb[0].mxu0
    %v939 = vadd.f32 0.0, %v938
    %v940 = vpop.f32.mrb[0].mxu0
    %941 = vdwg.mxu0
    %950 = vrot.lane.b32.xlu0 %v686, 64
    %v951 = vpop.permute.xlu0 %950
    %952 = vrot.lane.b32.xlu0 %v687, 64
    %v953 = vpop.permute.xlu0 %952
    %954 = vrot.lane.b32.xlu0 %v688, 64
    %v955 = vpop.permute.xlu0 %954
    %956 = vrot.lane.b32.xlu0 %v689, 64
    %v957 = vpop.permute.xlu0 %956
    %958 = vrot.lane.b32.xlu0 %v690, 64
    %v959 = vpop.permute.xlu0 %958
    %960 = vrot.lane.b32.xlu0 %v691, 64
    %v961 = vpop.permute.xlu0 %960
    %962 = vrot.lane.b32.xlu0 %v692, 64
    %v963 = vpop.permute.xlu0 %962
    %964 = vrot.lane.b32.xlu0 %v693, 64
    %v965 = vpop.permute.xlu0 %964
    %974 = vmatprep.subr.mxu0 0.0
    %975 = vmatpush1.msra.mxu0 %v951
    %976 = vmatprep.subr.mxu0 0.0
    %977 = vmatpush1.msra.mxu0 %v953
    %978 = vmatprep.subr.mxu0 0.0
    %979 = vmatpush1.msra.mxu0 %v955
    %980 = vmatprep.subr.mxu0 0.0
    %981 = vmatpush1.msra.mxu0 %v957
    %982 = vmatprep.subr.mxu0 0.0
    %983 = vmatpush1.msra.mxu0 %v959
    %984 = vmatprep.subr.mxu0 0.0
    %985 = vmatpush1.msra.mxu0 %v961
    %986 = vmatprep.subr.mxu0 0.0
    %987 = vmatpush1.msra.mxu0 %v963
    %988 = vmatprep.subr.mxu0 0.0
    %989 = vmatpush1.msra.mxu0 %v965
    %990 = vmatprep.subr.mxu0 0.0
    %991 = vmatpush1.msra.mxu0 0.0
    %992 = vmatprep.subr.mxu0 0.0
    %993 = vmatpush1.msra.mxu0 0.0
    %994 = vmatprep.subr.mxu0 0.0
    %995 = vmatpush1.msra.mxu0 0.0
    %996 = vmatprep.subr.mxu0 0.0
    %997 = vmatpush1.msra.mxu0 0.0
    %998 = vmatprep.subr.mxu0 0.0
    %999 = vmatpush1.msra.mxu0 0.0
    %1000 = vmatprep.subr.mxu0 0.0
    %1001 = vmatpush1.msra.mxu0 0.0
    %1002 = vmatprep.subr.mxu0 0.0
    %1003 = vmatpush1.msra.mxu0 0.0
    %1004 = vmatprep.subr.mxu0 0.0
    %1005 = vmatpush1.msra.mxu0 0.0
    %1006 = vmatprep.subr.mxu0 0.0
    %1007 = vmatpush1.msra.mxu0 0.0
    %1008 = vmatprep.subr.mxu0 0.0
    %1009 = vmatpush1.msra.mxu0 0.0
    %1010 = vmatprep.subr.mxu0 0.0
    %1011 = vmatpush1.msra.mxu0 0.0
    %1012 = vmatprep.subr.mxu0 0.0
    %1013 = vmatpush1.msra.mxu0 0.0
    %1014 = vmatprep.subr.mxu0 0.0
    %1015 = vmatpush1.msra.mxu0 0.0
    %1016 = vmatprep.subr.mxu0 0.0
    %1017 = vmatpush1.msra.mxu0 0.0
    %1018 = vmatprep.subr.mxu0 0.0
    %1019 = vmatpush1.msra.mxu0 0.0
    %1020 = vmatprep.subr.mxu0 0.0
    %1021 = vmatpush1.msra.mxu0 0.0
    %1022 = vmatprep.subr.mxu0 0.0
    %1023 = vmatpush1.msra.mxu0 0.0
    %1024 = vmatprep.subr.mxu0 0.0
    %1025 = vmatpush1.msra.mxu0 0.0
    %1026 = vmatprep.subr.mxu0 0.0
    %1027 = vmatpush1.msra.mxu0 0.0
    %1028 = vmatprep.subr.mxu0 0.0
    %1029 = vmatpush1.msra.mxu0 0.0
    %1030 = vmatprep.subr.mxu0 0.0
    %1031 = vmatpush1.msra.mxu0 0.0
    %1032 = vmatprep.subr.mxu0 0.0
    %1033 = vmatpush1.msra.mxu0 0.0
    %1034 = vmatprep.subr.mxu0 0.0
    %1035 = vmatpush1.msra.mxu0 0.0
    %1036 = vmatprep.subr.mxu0 0.0
    %1037 = vmatpush1.msra.mxu0 0.0
    %1038 = vmatprep.mubr.f32.mxu0 0.0
    %1039 = vmatmul.mubr.f32.gmra.mrb[0].mxu0 %v862
    %v1040 = vpop.f32.mrb[0].mxu0
    %v1041 = vadd.f32 0.0, %v1040
    %v1042 = vpop.f32.mrb[0].mxu0
    %1043 = vdwg.mxu0
    %1052 = vrot.lane.b32.xlu0 %v694, 64
    %v1053 = vpop.permute.xlu0 %1052
    %1054 = vrot.lane.b32.xlu0 %v695, 64
    %v1055 = vpop.permute.xlu0 %1054
    %1056 = vrot.lane.b32.xlu0 %v696, 64
    %v1057 = vpop.permute.xlu0 %1056
    %1058 = vrot.lane.b32.xlu0 %v697, 64
    %v1059 = vpop.permute.xlu0 %1058
    %1060 = vrot.lane.b32.xlu0 %v698, 64
    %v1061 = vpop.permute.xlu0 %1060
    %1062 = vrot.lane.b32.xlu0 %v699, 64
    %v1063 = vpop.permute.xlu0 %1062
    %1064 = vrot.lane.b32.xlu0 %v700, 64
    %v1065 = vpop.permute.xlu0 %1064
    %1066 = vrot.lane.b32.xlu0 %v701, 64
    %v1067 = vpop.permute.xlu0 %1066
    %1076 = vmatprep.subr.mxu0 0.0
    %1077 = vmatpush1.msra.mxu0 %v1053
    %1078 = vmatprep.subr.mxu0 0.0
    %1079 = vmatpush1.msra.mxu0 %v1055
    %1080 = vmatprep.subr.mxu0 0.0
    %1081 = vmatpush1.msra.mxu0 %v1057
    %1082 = vmatprep.subr.mxu0 0.0
    %1083 = vmatpush1.msra.mxu0 %v1059
    %1084 = vmatprep.subr.mxu0 0.0
    %1085 = vmatpush1.msra.mxu0 %v1061
    %1086 = vmatprep.subr.mxu0 0.0
    %1087 = vmatpush1.msra.mxu0 %v1063
    %1088 = vmatprep.subr.mxu0 0.0
    %1089 = vmatpush1.msra.mxu0 %v1065
    %1090 = vmatprep.subr.mxu0 0.0
    %1091 = vmatpush1.msra.mxu0 %v1067
    %1092 = vmatprep.subr.mxu0 0.0
    %1093 = vmatpush1.msra.mxu0 0.0
    %1094 = vmatprep.subr.mxu0 0.0
    %1095 = vmatpush1.msra.mxu0 0.0
    %1096 = vmatprep.subr.mxu0 0.0
    %1097 = vmatpush1.msra.mxu0 0.0
    %1098 = vmatprep.subr.mxu0 0.0
    %1099 = vmatpush1.msra.mxu0 0.0
    %1100 = vmatprep.subr.mxu0 0.0
    %1101 = vmatpush1.msra.mxu0 0.0
    %1102 = vmatprep.subr.mxu0 0.0
    %1103 = vmatpush1.msra.mxu0 0.0
    %1104 = vmatprep.subr.mxu0 0.0
    %1105 = vmatpush1.msra.mxu0 0.0
    %1106 = vmatprep.subr.mxu0 0.0
    %1107 = vmatpush1.msra.mxu0 0.0
    %1108 = vmatprep.subr.mxu0 0.0
    %1109 = vmatpush1.msra.mxu0 0.0
    %1110 = vmatprep.subr.mxu0 0.0
    %1111 = vmatpush1.msra.mxu0 0.0
    %1112 = vmatprep.subr.mxu0 0.0
    %1113 = vmatpush1.msra.mxu0 0.0
    %1114 = vmatprep.subr.mxu0 0.0
    %1115 = vmatpush1.msra.mxu0 0.0
    %1116 = vmatprep.subr.mxu0 0.0
    %1117 = vmatpush1.msra.mxu0 0.0
    %1118 = vmatprep.subr.mxu0 0.0
    %1119 = vmatpush1.msra.mxu0 0.0
    %1120 = vmatprep.subr.mxu0 0.0
    %1121 = vmatpush1.msra.mxu0 0.0
    %1122 = vmatprep.subr.mxu0 0.0
    %1123 = vmatpush1.msra.mxu0 0.0
    %1124 = vmatprep.subr.mxu0 0.0
    %1125 = vmatpush1.msra.mxu0 0.0
    %1126 = vmatprep.subr.mxu0 0.0
    %1127 = vmatpush1.msra.mxu0 0.0
    %1128 = vmatprep.subr.mxu0 0.0
    %1129 = vmatpush1.msra.mxu0 0.0
    %1130 = vmatprep.subr.mxu0 0.0
    %1131 = vmatpush1.msra.mxu0 0.0
    %1132 = vmatprep.subr.mxu0 0.0
    %1133 = vmatpush1.msra.mxu0 0.0
    %1134 = vmatprep.subr.mxu0 0.0
    %1135 = vmatpush1.msra.mxu0 0.0
    %1136 = vmatprep.subr.mxu0 0.0
    %1137 = vmatpush1.msra.mxu0 0.0
    %1138 = vmatprep.subr.mxu0 0.0
    %1139 = vmatpush1.msra.mxu0 0.0
    %1140 = vmatprep.mubr.f32.mxu0 0.0
    %1141 = vmatmul.mubr.f32.gmra.mrb[0].mxu0 %v865
    %v1142 = vpop.f32.mrb[0].mxu0
    %v1143 = vadd.f32 0.0, %v1142
    %v1144 = vpop.f32.mrb[0].mxu0
    %1145 = vdwg.mxu0
    %v1146 = vrcp.pop %v934
    %v1147 = vrcp.pop %v939
    %v1148 = vmul.f32 %v1041, %v1146
    %v1149 = vmul.f32 %v1143, %v1147
    %v1151 = vlaneseq
    %v1152 = vshrl.u32 %v1151, 7
    %v1153 = vsub.s32 0, %v1152
    %v1154 = vrot.slane %v213, %v1153
    %v1157 = vsel %vm238, %v1148, 0
    %v1160 = vsel %vm238, %v1149, 0
    %1162 = vmatprep.subr.mxu0 0.0
    %1163 = vmatpush1.msra.mxu0 %v209
    %1164 = vmatprep.subr.mxu0 0.0
    %1165 = vmatpush1.msra.mxu0 %v210
    %1166 = vmatprep.subr.mxu0 0.0
    %1167 = vmatpush1.msra.mxu0 %v211
    %1168 = vmatprep.subr.mxu0 0.0
    %1169 = vmatpush1.msra.mxu0 %v212
    %1170 = vmatprep.subr.mxu0 0.0
    %1171 = vmatpush1.msra.mxu0 0.0
    %1172 = vmatprep.subr.mxu0 0.0
    %1173 = vmatpush1.msra.mxu0 0.0
    %1174 = vmatprep.subr.mxu0 0.0
    %1175 = vmatpush1.msra.mxu0 0.0
    %1176 = vmatprep.subr.mxu0 0.0
    %1177 = vmatpush1.msra.mxu0 0.0
    %1178 = vmatprep.subr.mxu0 0.0
    %1179 = vmatpush1.msra.mxu0 0.0
    %1180 = vmatprep.subr.mxu0 0.0
    %1181 = vmatpush1.msra.mxu0 0.0
    %1182 = vmatprep.subr.mxu0 0.0
    %1183 = vmatpush1.msra.mxu0 0.0
    %1184 = vmatprep.subr.mxu0 0.0
    %1185 = vmatpush1.msra.mxu0 0.0
    %1186 = vmatprep.subr.mxu0 0.0
    %1187 = vmatpush1.msra.mxu0 0.0
    %1188 = vmatprep.subr.mxu0 0.0
    %1189 = vmatpush1.msra.mxu0 0.0
    %1190 = vmatprep.subr.mxu0 0.0
    %1191 = vmatpush1.msra.mxu0 0.0
    %1192 = vmatprep.subr.mxu0 0.0
    %1193 = vmatpush1.msra.mxu0 0.0
    %1194 = vmatprep.subr.mxu0 0.0
    %1195 = vmatpush1.msra.mxu0 0.0
    %1196 = vmatprep.subr.mxu0 0.0
    %1197 = vmatpush1.msra.mxu0 0.0
    %1198 = vmatprep.subr.mxu0 0.0
    %1199 = vmatpush1.msra.mxu0 0.0
    %1200 = vmatprep.subr.mxu0 0.0
    %1201 = vmatpush1.msra.mxu0 0.0
    %1202 = vmatprep.subr.mxu0 0.0
    %1203 = vmatpush1.msra.mxu0 0.0
    %1204 = vmatprep.subr.mxu0 0.0
    %1205 = vmatpush1.msra.mxu0 0.0
    %1206 = vmatprep.subr.mxu0 0.0
    %1207 = vmatpush1.msra.mxu0 0.0
    %1208 = vmatprep.subr.mxu0 0.0
    %1209 = vmatpush1.msra.mxu0 0.0
    %1210 = vmatprep.subr.mxu0 0.0
    %1211 = vmatpush1.msra.mxu0 0.0
    %1212 = vmatprep.subr.mxu0 0.0
    %1213 = vmatpush1.msra.mxu0 0.0
    %1214 = vmatprep.subr.mxu0 0.0
    %1215 = vmatpush1.msra.mxu0 0.0
    %1216 = vmatprep.subr.mxu0 0.0
    %1217 = vmatpush1.msra.mxu0 0.0
    %1218 = vmatprep.subr.mxu0 0.0
    %1219 = vmatpush1.msra.mxu0 0.0
    %1220 = vmatprep.subr.mxu0 0.0
    %1221 = vmatpush1.msra.mxu0 0.0
    %1222 = vmatprep.subr.mxu0 0.0
    %1223 = vmatpush1.msra.mxu0 0.0
    %1224 = vmatprep.subr.mxu0 0.0
    %1225 = vmatpush1.msra.mxu0 0.0
    %1226 = vmatprep.mubr.f32.mxu0 0.0
    %1227 = vmatmul.mubr.f32.gmra.mrb[0].mxu0 %v1157
    %v1228 = vpop.f32.mrb[0].mxu0
    %v1229 = vadd.f32 %v1154, %v1228
    %v1230 = vpop.f32.mrb[0].mxu0
    %1231 = vmatprep.mubr.f32.mxu0 0.0
    %1232 = vmatmul.mubr.f32.gmra.mrb[0].mxu0 %v1160
    %v1233 = vpop.f32.mrb[0].mxu0
    %v1234 = vadd.f32 %v1154, %v1233
    %v1235 = vpop.f32.mrb[0].mxu0
    %1236 = vdwg.mxu0
    %v1237 = vadd.f32 %v190, %v1229
    %v1238 = vadd.f32 %v191, %v1234
    %v1239 = vsel %vm238, %v1237, 0.0
    %1240 = vadd.xlane.f32.xlu0 %v1239
    %v1241 = vpop.xlane.xlu0 %1240
    %v1242 = vsel %vm238, %v1238, 0.0
    %1243 = vadd.xlane.f32.xlu0 %v1242
    %v1244 = vpop.xlane.xlu0 %1243
    %v1245 = vrcp.pop 32.0
    %v1246 = vmul.f32 %v1241, %v1245
    %v1247 = vmul.f32 %v1244, %v1245
    %v1248 = vmul.f32 %v1237, %v1237
    %v1249 = vmul.f32 %v1238, %v1238
    %v1250 = vsel %vm238, %v1248, 0.0
    %1251 = vadd.xlane.f32.xlu0 %v1250
    %v1252 = vpop.xlane.xlu0 %1251
    %v1253 = vsel %vm238, %v1249, 0.0
    %1254 = vadd.xlane.f32.xlu0 %v1253
    %v1255 = vpop.xlane.xlu0 %1254
    %v1256 = vmul.f32 %v1252, %v1245
    %v1257 = vmul.f32 %v1255, %v1245
    %v1258 = vmul.f32 %v1246, %v1246
    %v1259 = vmul.f32 %v1247, %v1247
    %v1260 = vsub.f32 %v1256, %v1258
    %v1261 = vsub.f32 %v1257, %v1259
    %v1262 = vsub.f32 %v1237, %v1246
    %v1263 = vsub.f32 %v1238, %v1247
    %v1264 = vadd.f32 %v1260, 1e-05
    %v1265 = vadd.f32 %v1261, 1e-05
    %v1266 = vrsqrt.pop %v1264
    %v1267 = vrsqrt.pop %v1265
    %v1268 = vmul.f32 %v1262, %v1266
    %v1269 = vmul.f32 %v1263, %v1267
    %v1271 = vlaneseq
    %v1272 = vshrl.u32 %v1271, 7
    %v1273 = vsub.s32 0, %v1272
    %v1274 = vrot.slane %v214, %v1273
    %v1276 = vmul.f32 %v1268, %v1274
    %v1277 = vmul.f32 %v1269, %v1274
    %v1279 = vlaneseq
    %v1280 = vshrl.u32 %v1279, 7
    %v1281 = vsub.s32 0, %v1280
    %v1282 = vrot.slane %v215, %v1281
    %v1284 = vadd.f32 %v1276, %v1282
    %v1285 = vadd.f32 %v1277, %v1282
    %v1287 = vlaneseq
    %v1288 = vshrl.u32 %v1287, 7
    %v1289 = vsub.s32 0, %v1288
    %v1290 = vrot.slane %v220, %v1289
    %v1293 = vsel %vm238, %v1284, 0
    %v1296 = vsel %vm238, %v1285, 0
    %1298 = vmatprep.subr.mxu0 0.0
    %1299 = vmatpush1.msra.mxu0 %v216
    %1300 = vmatprep.subr.mxu0 0.0
    %1301 = vmatpush1.msra.mxu0 %v217
    %1302 = vmatprep.subr.mxu0 0.0
    %1303 = vmatpush1.msra.mxu0 %v218
    %1304 = vmatprep.subr.mxu0 0.0
    %1305 = vmatpush1.msra.mxu0 %v219
    %1306 = vmatprep.subr.mxu0 0.0
    %1307 = vmatpush1.msra.mxu0 0.0
    %1308 = vmatprep.subr.mxu0 0.0
    %1309 = vmatpush1.msra.mxu0 0.0
    %1310 = vmatprep.subr.mxu0 0.0
    %1311 = vmatpush1.msra.mxu0 0.0
    %1312 = vmatprep.subr.mxu0 0.0
    %1313 = vmatpush1.msra.mxu0 0.0
    %1314 = vmatprep.subr.mxu0 0.0
    %1315 = vmatpush1.msra.mxu0 0.0
    %1316 = vmatprep.subr.mxu0 0.0
    %1317 = vmatpush1.msra.mxu0 0.0
    %1318 = vmatprep.subr.mxu0 0.0
    %1319 = vmatpush1.msra.mxu0 0.0
    %1320 = vmatprep.subr.mxu0 0.0
    %1321 = vmatpush1.msra.mxu0 0.0
    %1322 = vmatprep.subr.mxu0 0.0
    %1323 = vmatpush1.msra.mxu0 0.0
    %1324 = vmatprep.subr.mxu0 0.0
    %1325 = vmatpush1.msra.mxu0 0.0
    %1326 = vmatprep.subr.mxu0 0.0
    %1327 = vmatpush1.msra.mxu0 0.0
    %1328 = vmatprep.subr.mxu0 0.0
    %1329 = vmatpush1.msra.mxu0 0.0
    %1330 = vmatprep.subr.mxu0 0.0
    %1331 = vmatpush1.msra.mxu0 0.0
    %1332 = vmatprep.subr.mxu0 0.0
    %1333 = vmatpush1.msra.mxu0 0.0
    %1334 = vmatprep.subr.mxu0 0.0
    %1335 = vmatpush1.msra.mxu0 0.0
    %1336 = vmatprep.subr.mxu0 0.0
    %1337 = vmatpush1.msra.mxu0 0.0
    %1338 = vmatprep.subr.mxu0 0.0
    %1339 = vmatpush1.msra.mxu0 0.0
    %1340 = vmatprep.subr.mxu0 0.0
    %1341 = vmatpush1.msra.mxu0 0.0
    %1342 = vmatprep.subr.mxu0 0.0
    %1343 = vmatpush1.msra.mxu0 0.0
    %1344 = vmatprep.subr.mxu0 0.0
    %1345 = vmatpush1.msra.mxu0 0.0
    %1346 = vmatprep.subr.mxu0 0.0
    %1347 = vmatpush1.msra.mxu0 0.0
    %1348 = vmatprep.subr.mxu0 0.0
    %1349 = vmatpush1.msra.mxu0 0.0
    %1350 = vmatprep.subr.mxu0 0.0
    %1351 = vmatpush1.msra.mxu0 0.0
    %1352 = vmatprep.subr.mxu0 0.0
    %1353 = vmatpush1.msra.mxu0 0.0
    %1354 = vmatprep.subr.mxu0 0.0
    %1355 = vmatpush1.msra.mxu0 0.0
    %1356 = vmatprep.subr.mxu0 0.0
    %1357 = vmatpush1.msra.mxu0 0.0
    %1358 = vmatprep.subr.mxu0 0.0
    %1359 = vmatpush1.msra.mxu0 0.0
    %1360 = vmatprep.subr.mxu0 0.0
    %1361 = vmatpush1.msra.mxu0 0.0
    %1362 = vmatprep.mubr.f32.mxu0 0.0
    %1363 = vmatmul.mubr.f32.gmra.mrb[0].mxu0 %v1293
    %v1364 = vpop.f32.mrb[0].mxu0
    %v1365 = vadd.f32 %v1290, %v1364
    %v1366 = vpop.f32.mrb[0].mxu0
    %1367 = vmatprep.mubr.f32.mxu0 0.0
    %1368 = vmatmul.mubr.f32.gmra.mrb[0].mxu0 %v1296
    %v1369 = vpop.f32.mrb[0].mxu0
    %v1370 = vadd.f32 %v1290, %v1369
    %v1371 = vpop.f32.mrb[0].mxu0
    %1372 = vdwg.mxu0
    %v1373 = vmax.f32 %v1365, 0.0
    %v1374 = vmax.f32 %v1370, 0.0
    %v1376 = vlaneseq
    %v1377 = vshrl.u32 %v1376, 7
    %v1378 = vsub.s32 0, %v1377
    %v1379 = vrot.slane %v229, %v1378
    %v1382 = vsel %vm848, %v1373, 0
    %v1385 = vsel %vm848, %v1374, 0
    %1387 = vmatprep.subr.mxu0 0.0
    %1388 = vmatpush1.msra.mxu0 %v221
    %1389 = vmatprep.subr.mxu0 0.0
    %1390 = vmatpush1.msra.mxu0 %v222
    %1391 = vmatprep.subr.mxu0 0.0
    %1392 = vmatpush1.msra.mxu0 %v223
    %1393 = vmatprep.subr.mxu0 0.0
    %1394 = vmatpush1.msra.mxu0 %v224
    %1395 = vmatprep.subr.mxu0 0.0
    %1396 = vmatpush1.msra.mxu0 %v225
    %1397 = vmatprep.subr.mxu0 0.0
    %1398 = vmatpush1.msra.mxu0 %v226
    %1399 = vmatprep.subr.mxu0 0.0
    %1400 = vmatpush1.msra.mxu0 %v227
    %1401 = vmatprep.subr.mxu0 0.0
    %1402 = vmatpush1.msra.mxu0 %v228
    %1403 = vmatprep.subr.mxu0 0.0
    %1404 = vmatpush1.msra.mxu0 0.0
    %1405 = vmatprep.subr.mxu0 0.0
    %1406 = vmatpush1.msra.mxu0 0.0
    %1407 = vmatprep.subr.mxu0 0.0
    %1408 = vmatpush1.msra.mxu0 0.0
    %1409 = vmatprep.subr.mxu0 0.0
    %1410 = vmatpush1.msra.mxu0 0.0
    %1411 = vmatprep.subr.mxu0 0.0
    %1412 = vmatpush1.msra.mxu0 0.0
    %1413 = vmatprep.subr.mxu0 0.0
    %1414 = vmatpush1.msra.mxu0 0.0
    %1415 = vmatprep.subr.mxu0 0.0
    %1416 = vmatpush1.msra.mxu0 0.0
    %1417 = vmatprep.subr.mxu0 0.0
    %1418 = vmatpush1.msra.mxu0 0.0
    %1419 = vmatprep.subr.mxu0 0.0
    %1420 = vmatpush1.msra.mxu0 0.0
    %1421 = vmatprep.subr.mxu0 0.0
    %1422 = vmatpush1.msra.mxu0 0.0
    %1423 = vmatprep.subr.mxu0 0.0
    %1424 = vmatpush1.msra.mxu0 0.0
    %1425 = vmatprep.subr.mxu0 0.0
    %1426 = vmatpush1.msra.mxu0 0.0
    %1427 = vmatprep.subr.mxu0 0.0
    %1428 = vmatpush1.msra.mxu0 0.0
    %1429 = vmatprep.subr.mxu0 0.0
    %1430 = vmatpush1.msra.mxu0 0.0
    %1431 = vmatprep.subr.mxu0 0.0
    %1432 = vmatpush1.msra.mxu0 0.0
    %1433 = vmatprep.subr.mxu0 0.0
    %1434 = vmatpush1.msra.mxu0 0.0
    %1435 = vmatprep.subr.mxu0 0.0
    %1436 = vmatpush1.msra.mxu0 0.0
    %1437 = vmatprep.subr.mxu0 0.0
    %1438 = vmatpush1.msra.mxu0 0.0
    %1439 = vmatprep.subr.mxu0 0.0
    %1440 = vmatpush1.msra.mxu0 0.0
    %1441 = vmatprep.subr.mxu0 0.0
    %1442 = vmatpush1.msra.mxu0 0.0
    %1443 = vmatprep.subr.mxu0 0.0
    %1444 = vmatpush1.msra.mxu0 0.0
    %1445 = vmatprep.subr.mxu0 0.0
    %1446 = vmatpush1.msra.mxu0 0.0
    %1447 = vmatprep.subr.mxu0 0.0
    %1448 = vmatpush1.msra.mxu0 0.0
    %1449 = vmatprep.subr.mxu0 0.0
    %1450 = vmatpush1.msra.mxu0 0.0
    %1451 = vmatprep.mubr.f32.mxu0 0.0
    %1452 = vmatmul.mubr.f32.gmra.mrb[0].mxu0 %v1382
    %v1453 = vpop.f32.mrb[0].mxu0
    %v1454 = vadd.f32 %v1379, %v1453
    %v1455 = vpop.f32.mrb[0].mxu0
    %1456 = vmatprep.mubr.f32.mxu0 0.0
    %1457 = vmatmul.mubr.f32.gmra.mrb[0].mxu0 %v1385
    %v1458 = vpop.f32.mrb[0].mxu0
    %v1459 = vadd.f32 %v1379, %v1458
    %v1460 = vpop.f32.mrb[0].mxu0
    %1461 = vdwg.mxu0
    %v1462 = vadd.f32 %v1284, %v1454
    %v1463 = vadd.f32 %v1285, %v1459
    %v1464 = vsel %vm238, %v1462, 0.0
    %1465 = vadd.xlane.f32.xlu0 %v1464
    %v1466 = vpop.xlane.xlu0 %1465
    %v1467 = vsel %vm238, %v1463, 0.0
    %1468 = vadd.xlane.f32.xlu0 %v1467
    %v1469 = vpop.xlane.xlu0 %1468
    %v1470 = vmul.f32 %v1466, %v1245
    %v1471 = vmul.f32 %v1469, %v1245
    %v1472 = vmul.f32 %v1462, %v1462
    %v1473 = vmul.f32 %v1463, %v1463
    %v1474 = vsel %vm238, %v1472, 0.0
    %1475 = vadd.xlane.f32.xlu0 %v1474
    %v1476 = vpop.xlane.xlu0 %1475
    %v1477 = vsel %vm238, %v1473, 0.0
    %1478 = vadd.xlane.f32.xlu0 %v1477
    %v1479 = vpop.xlane.xlu0 %1478
    %v1480 = vmul.f32 %v1476, %v1245
    %v1481 = vmul.f32 %v1479, %v1245
    %v1482 = vmul.f32 %v1470, %v1470
    %v1483 = vmul.f32 %v1471, %v1471
    %v1484 = vsub.f32 %v1480, %v1482
    %v1485 = vsub.f32 %v1481, %v1483
    %v1486 = vsub.f32 %v1462, %v1470
    %v1487 = vsub.f32 %v1463, %v1471
    %v1488 = vadd.f32 %v1484, 1e-05
    %v1489 = vadd.f32 %v1485, 1e-05
    %v1490 = vrsqrt.pop %v1488
    %v1491 = vrsqrt.pop %v1489
    %v1492 = vmul.f32 %v1486, %v1490
    %v1493 = vmul.f32 %v1487, %v1491
    %v1495 = vlaneseq
    %v1496 = vshrl.u32 %v1495, 7
    %v1497 = vsub.s32 0, %v1496
    %v1498 = vrot.slane %v230, %v1497
    %v1500 = vmul.f32 %v1492, %v1498
    %v1501 = vmul.f32 %v1493, %v1498
    %v1503 = vlaneseq
    %v1504 = vshrl.u32 %v1503, 7
    %v1505 = vsub.s32 0, %v1504
    %v1506 = vrot.slane %v231, %v1505
    %v1508 = vadd.f32 %v1500, %v1506
    %v1509 = vadd.f32 %v1501, %v1506
    %v1511 = vsel %vm238, %v1508, 0
    %v1514 = vsel %vm238, %v1509, 0
    %1516 = vmatprep.subr.mxu0 0.0
    %1517 = vmatpush1.msra.mxu0 %v204
    %1518 = vmatprep.subr.mxu0 0.0
    %1519 = vmatpush1.msra.mxu0 %v205
    %1520 = vmatprep.subr.mxu0 0.0
    %1521 = vmatpush1.msra.mxu0 %v206
    %1522 = vmatprep.subr.mxu0 0.0
    %1523 = vmatpush1.msra.mxu0 %v207
    %1524 = vmatprep.subr.mxu0 0.0
    %1525 = vmatpush1.msra.mxu0 0.0
    %1526 = vmatprep.subr.mxu0 0.0
    %1527 = vmatpush1.msra.mxu0 0.0
    %1528 = vmatprep.subr.mxu0 0.0
    %1529 = vmatpush1.msra.mxu0 0.0
    %1530 = vmatprep.subr.mxu0 0.0
    %1531 = vmatpush1.msra.mxu0 0.0
    %1532 = vmatprep.subr.mxu0 0.0
    %1533 = vmatpush1.msra.mxu0 0.0
    %1534 = vmatprep.subr.mxu0 0.0
    %1535 = vmatpush1.msra.mxu0 0.0
    %1536 = vmatprep.subr.mxu0 0.0
    %1537 = vmatpush1.msra.mxu0 0.0
    %1538 = vmatprep.subr.mxu0 0.0
    %1539 = vmatpush1.msra.mxu0 0.0
    %1540 = vmatprep.subr.mxu0 0.0
    %1541 = vmatpush1.msra.mxu0 0.0
    %1542 = vmatprep.subr.mxu0 0.0
    %1543 = vmatpush1.msra.mxu0 0.0
    %1544 = vmatprep.subr.mxu0 0.0
    %1545 = vmatpush1.msra.mxu0 0.0
    %1546 = vmatprep.subr.mxu0 0.0
    %1547 = vmatpush1.msra.mxu0 0.0
    %1548 = vmatprep.subr.mxu0 0.0
    %1549 = vmatpush1.msra.mxu0 0.0
    %1550 = vmatprep.subr.mxu0 0.0
    %1551 = vmatpush1.msra.mxu0 0.0
    %1552 = vmatprep.subr.mxu0 0.0
    %1553 = vmatpush1.msra.mxu0 0.0
    %1554 = vmatprep.subr.mxu0 0.0
    %1555 = vmatpush1.msra.mxu0 0.0
    %1556 = vmatprep.subr.mxu0 0.0
    %1557 = vmatpush1.msra.mxu0 0.0
    %1558 = vmatprep.subr.mxu0 0.0
    %1559 = vmatpush1.msra.mxu0 0.0
    %1560 = vmatprep.subr.mxu0 0.0
    %1561 = vmatpush1.msra.mxu0 0.0
    %1562 = vmatprep.subr.mxu0 0.0
    %1563 = vmatpush1.msra.mxu0 0.0
    %1564 = vmatprep.subr.mxu0 0.0
    %1565 = vmatpush1.msra.mxu0 0.0
    %1566 = vmatprep.subr.mxu0 0.0
    %1567 = vmatpush1.msra.mxu0 0.0
    %1568 = vmatprep.subr.mxu0 0.0
    %1569 = vmatpush1.msra.mxu0 0.0
    %1570 = vmatprep.subr.mxu0 0.0
    %1571 = vmatpush1.msra.mxu0 0.0
    %1572 = vmatprep.subr.mxu0 0.0
    %1573 = vmatpush1.msra.mxu0 0.0
    %1574 = vmatprep.subr.mxu0 0.0
    %1575 = vmatpush1.msra.mxu0 0.0
    %1576 = vmatprep.subr.mxu0 0.0
    %1577 = vmatpush1.msra.mxu0 0.0
    %1578 = vmatprep.subr.mxu0 0.0
    %1579 = vmatpush1.msra.mxu0 0.0
    %1580 = vmatprep.mubr.f32.mxu0 0.0
    %1581 = vmatmul.mubr.f32.gmra.mrb[0].mxu0 %v1511
    %v1582 = vpop.f32.mrb[0].mxu0
    %v1583 = vadd.f32 %v236, %v1582
    %v1584 = vpop.f32.mrb[0].mxu0
    %1585 = vmatprep.mubr.f32.mxu0 0.0
    %1586 = vmatmul.mubr.f32.gmra.mrb[0].mxu0 %v1514
    %v1587 = vpop.f32.mrb[0].mxu0
    %v1588 = vadd.f32 %v236, %v1587
    %v1589 = vpop.f32.mrb[0].mxu0
    %1590 = vmatprep.mubr.f32.mxu0 0.0
    %1591 = vmatmul.mubr.f32.gmra.mrb[0].mxu0 %v240
    %v1592 = vpop.f32.mrb[0].mxu0
    %v1593 = vadd.f32 %v236, %v1592
    %v1594 = vpop.f32.mrb[0].mxu0
    %1595 = vmatprep.mubr.f32.mxu0 0.0
    %1596 = vmatmul.mubr.f32.gmra.mrb[0].mxu0 %v243
    %v1597 = vpop.f32.mrb[0].mxu0
    %v1598 = vadd.f32 %v236, %v1597
    %v1599 = vpop.f32.mrb[0].mxu0
    %1600 = vdwg.mxu0
    %1603 = vrot.lane.b32.xlu0 %v1593, 96
    %v1604 = vpop.permute.xlu0 %1603
    %1605 = vrot.lane.b32.xlu0 %v1598, 96
    %v1606 = vpop.permute.xlu0 %1605
    %1609 = vxpose.xlu0.b32.start [1/16] %v1604, 128
    %1610 = vxpose.xlu0.b32.cont [2/16] 0.0, 128
    %1611 = vxpose.xlu0.b32.cont [3/16] 0.0, 128
    %1612 = vxpose.xlu0.b32.cont [4/16] 0.0, 128
    %1613 = vxpose.xlu0.b32.cont [5/16] 0.0, 128
    %1614 = vxpose.xlu0.b32.cont [6/16] 0.0, 128
    %1615 = vxpose.xlu0.b32.cont [7/16] 0.0, 128
    %1616 = vxpose.xlu0.b32.cont [8/16] 0.0, 128
    %1617 = vxpose.xlu0.b32.cont [9/16] 0.0, 128
    %1618 = vxpose.xlu0.b32.cont [10/16] 0.0, 128
    %1619 = vxpose.xlu0.b32.cont [11/16] 0.0, 128
    %1620 = vxpose.xlu0.b32.cont [12/16] 0.0, 128
    %1621 = vxpose.xlu0.b32.cont [13/16] 0.0, 128
    %1622 = vxpose.xlu0.b32.cont [14/16] 0.0, 128
    %1623 = vxpose.xlu0.b32.cont [15/16] 0.0, 128
    %1624 = vxpose.xlu0.b32.end [16/16] 0.0, 128
    %v1625 = vpop.trf.xlu0
    %v1626 = vpop.trf.xlu0
    %v1627 = vpop.trf.xlu0
    %v1628 = vpop.trf.xlu0
    %v1629 = vpop.trf.xlu0
    %v1630 = vpop.trf.xlu0
    %v1631 = vpop.trf.xlu0
    %v1632 = vpop.trf.xlu0
    %v1633 = vpop.trf.xlu0
    %v1634 = vpop.trf.xlu0
    %v1635 = vpop.trf.xlu0
    %v1636 = vpop.trf.xlu0
    %v1637 = vpop.trf.xlu0
    %v1638 = vpop.trf.xlu0
    %v1639 = vpop.trf.xlu0
    %v1640 = vpop.trf.xlu0
    %1641 = vxpose.xlu0.b32.start [1/16] %v1606, 128
    %1642 = vxpose.xlu0.b32.cont [2/16] 0.0, 128
    %1643 = vxpose.xlu0.b32.cont [3/16] 0.0, 128
    %1644 = vxpose.xlu0.b32.cont [4/16] 0.0, 128
    %1645 = vxpose.xlu0.b32.cont [5/16] 0.0, 128
    %1646 = vxpose.xlu0.b32.cont [6/16] 0.0, 128
    %1647 = vxpose.xlu0.b32.cont [7/16] 0.0, 128
    %1648 = vxpose.xlu0.b32.cont [8/16] 0.0, 128
    %1649 = vxpose.xlu0.b32.cont [9/16] 0.0, 128
    %1650 = vxpose.xlu0.b32.cont [10/16] 0.0, 128
    %1651 = vxpose.xlu0.b32.cont [11/16] 0.0, 128
    %1652 = vxpose.xlu0.b32.cont [12/16] 0.0, 128
    %1653 = vxpose.xlu0.b32.cont [13/16] 0.0, 128
    %1654 = vxpose.xlu0.b32.cont [14/16] 0.0, 128
    %1655 = vxpose.xlu0.b32.cont [15/16] 0.0, 128
    %1656 = vxpose.xlu0.b32.end [16/16] 0.0, 128
    %v1657 = vpop.trf.xlu0
    %v1658 = vpop.trf.xlu0
    %v1659 = vpop.trf.xlu0
    %v1660 = vpop.trf.xlu0
    %v1661 = vpop.trf.xlu0
    %v1662 = vpop.trf.xlu0
    %v1663 = vpop.trf.xlu0
    %v1664 = vpop.trf.xlu0
    %v1665 = vpop.trf.xlu0
    %v1666 = vpop.trf.xlu0
    %v1667 = vpop.trf.xlu0
    %v1668 = vpop.trf.xlu0
    %v1669 = vpop.trf.xlu0
    %v1670 = vpop.trf.xlu0
    %v1671 = vpop.trf.xlu0
    %v1672 = vpop.trf.xlu0
    %1681 = vrot.lane.b32.xlu0 %v1625, 8
    %v1682 = vpop.permute.xlu0 %1681
    %1683 = vrot.lane.b32.xlu0 %v1626, 8
    %v1684 = vpop.permute.xlu0 %1683
    %1685 = vrot.lane.b32.xlu0 %v1627, 8
    %v1686 = vpop.permute.xlu0 %1685
    %1687 = vrot.lane.b32.xlu0 %v1628, 8
    %v1688 = vpop.permute.xlu0 %1687
    %1689 = vrot.lane.b32.xlu0 %v1657, 8
    %v1690 = vpop.permute.xlu0 %1689
    %1691 = vrot.lane.b32.xlu0 %v1658, 8
    %v1692 = vpop.permute.xlu0 %1691
    %1693 = vrot.lane.b32.xlu0 %v1659, 8
    %v1694 = vpop.permute.xlu0 %1693
    %1695 = vrot.lane.b32.xlu0 %v1660, 8
    %v1696 = vpop.permute.xlu0 %1695
    %1705 = vrot.lane.b32.xlu0 %v1625, 16
    %v1706 = vpop.permute.xlu0 %1705
    %1707 = vrot.lane.b32.xlu0 %v1626, 16
    %v1708 = vpop.permute.xlu0 %1707
    %1709 = vrot.lane.b32.xlu0 %v1627, 16
    %v1710 = vpop.permute.xlu0 %1709
    %1711 = vrot.lane.b32.xlu0 %v1628, 16
    %v1712 = vpop.permute.xlu0 %1711
    %1713 = vrot.lane.b32.xlu0 %v1657, 16
    %v1714 = vpop.permute.xlu0 %1713
    %1715 = vrot.lane.b32.xlu0 %v1658, 16
    %v1716 = vpop.permute.xlu0 %1715
    %1717 = vrot.lane.b32.xlu0 %v1659, 16
    %v1718 = vpop.permute.xlu0 %1717
    %1719 = vrot.lane.b32.xlu0 %v1660, 16
    %v1720 = vpop.permute.xlu0 %1719
    %1729 = vrot.lane.b32.xlu0 %v1625, 24
    %v1730 = vpop.permute.xlu0 %1729
    %1731 = vrot.lane.b32.xlu0 %v1626, 24
    %v1732 = vpop.permute.xlu0 %1731
    %1733 = vrot.lane.b32.xlu0 %v1627, 24
    %v1734 = vpop.permute.xlu0 %1733
    %1735 = vrot.lane.b32.xlu0 %v1628, 24
    %v1736 = vpop.permute.xlu0 %1735
    %1737 = vrot.lane.b32.xlu0 %v1657, 24
    %v1738 = vpop.permute.xlu0 %1737
    %1739 = vrot.lane.b32.xlu0 %v1658, 24
    %v1740 = vpop.permute.xlu0 %1739
    %1741 = vrot.lane.b32.xlu0 %v1659, 24
    %v1742 = vpop.permute.xlu0 %1741
    %1743 = vrot.lane.b32.xlu0 %v1660, 24
    %v1744 = vpop.permute.xlu0 %1743
    %1753 = vrot.lane.b32.xlu0 %v1625, 32
    %v1754 = vpop.permute.xlu0 %1753
    %1755 = vrot.lane.b32.xlu0 %v1626, 32
    %v1756 = vpop.permute.xlu0 %1755
    %1757 = vrot.lane.b32.xlu0 %v1627, 32
    %v1758 = vpop.permute.xlu0 %1757
    %1759 = vrot.lane.b32.xlu0 %v1628, 32
    %v1760 = vpop.permute.xlu0 %1759
    %1761 = vrot.lane.b32.xlu0 %v1657, 32
    %v1762 = vpop.permute.xlu0 %1761
    %1763 = vrot.lane.b32.xlu0 %v1658, 32
    %v1764 = vpop.permute.xlu0 %1763
    %1765 = vrot.lane.b32.xlu0 %v1659, 32
    %v1766 = vpop.permute.xlu0 %1765
    %1767 = vrot.lane.b32.xlu0 %v1660, 32
    %v1768 = vpop.permute.xlu0 %1767
    %1777 = vrot.lane.b32.xlu0 %v1625, 40
    %v1778 = vpop.permute.xlu0 %1777
    %1779 = vrot.lane.b32.xlu0 %v1626, 40
    %v1780 = vpop.permute.xlu0 %1779
    %1781 = vrot.lane.b32.xlu0 %v1627, 40
    %v1782 = vpop.permute.xlu0 %1781
    %1783 = vrot.lane.b32.xlu0 %v1628, 40
    %v1784 = vpop.permute.xlu0 %1783
    %1785 = vrot.lane.b32.xlu0 %v1657, 40
    %v1786 = vpop.permute.xlu0 %1785
    %1787 = vrot.lane.b32.xlu0 %v1658, 40
    %v1788 = vpop.permute.xlu0 %1787
    %1789 = vrot.lane.b32.xlu0 %v1659, 40
    %v1790 = vpop.permute.xlu0 %1789
    %1791 = vrot.lane.b32.xlu0 %v1660, 40
    %v1792 = vpop.permute.xlu0 %1791
    %1801 = vrot.lane.b32.xlu0 %v1625, 48
    %v1802 = vpop.permute.xlu0 %1801
    %1803 = vrot.lane.b32.xlu0 %v1626, 48
    %v1804 = vpop.permute.xlu0 %1803
    %1805 = vrot.lane.b32.xlu0 %v1627, 48
    %v1806 = vpop.permute.xlu0 %1805
    %1807 = vrot.lane.b32.xlu0 %v1628, 48
    %v1808 = vpop.permute.xlu0 %1807
    %1809 = vrot.lane.b32.xlu0 %v1657, 48
    %v1810 = vpop.permute.xlu0 %1809
    %1811 = vrot.lane.b32.xlu0 %v1658, 48
    %v1812 = vpop.permute.xlu0 %1811
    %1813 = vrot.lane.b32.xlu0 %v1659, 48
    %v1814 = vpop.permute.xlu0 %1813
    %1815 = vrot.lane.b32.xlu0 %v1660, 48
    %v1816 = vpop.permute.xlu0 %1815
    %1825 = vrot.lane.b32.xlu0 %v1625, 56
    %v1826 = vpop.permute.xlu0 %1825
    %1827 = vrot.lane.b32.xlu0 %v1626, 56
    %v1828 = vpop.permute.xlu0 %1827
    %1829 = vrot.lane.b32.xlu0 %v1627, 56
    %v1830 = vpop.permute.xlu0 %1829
    %1831 = vrot.lane.b32.xlu0 %v1628, 56
    %v1832 = vpop.permute.xlu0 %1831
    %1833 = vrot.lane.b32.xlu0 %v1657, 56
    %v1834 = vpop.permute.xlu0 %1833
    %1835 = vrot.lane.b32.xlu0 %v1658, 56
    %v1836 = vpop.permute.xlu0 %1835
    %1837 = vrot.lane.b32.xlu0 %v1659, 56
    %v1838 = vpop.permute.xlu0 %1837
    %1839 = vrot.lane.b32.xlu0 %v1660, 56
    %v1840 = vpop.permute.xlu0 %1839
    %v1849 = vsel %vm584, %v1625, %v1682
    %v1850 = vsel %vm584, %v1626, %v1684
    %v1851 = vsel %vm584, %v1627, %v1686
    %v1852 = vsel %vm584, %v1628, %v1688
    %v1853 = vsel %vm584, %v1657, %v1690
    %v1854 = vsel %vm584, %v1658, %v1692
    %v1855 = vsel %vm584, %v1659, %v1694
    %v1856 = vsel %vm584, %v1660, %v1696
    %v1857 = vsel %vm593, %v1849, %v1706
    %v1858 = vsel %vm593, %v1850, %v1708
    %v1859 = vsel %vm593, %v1851, %v1710
    %v1860 = vsel %vm593, %v1852, %v1712
    %v1861 = vsel %vm593, %v1853, %v1714
    %v1862 = vsel %vm593, %v1854, %v1716
    %v1863 = vsel %vm593, %v1855, %v1718
    %v1864 = vsel %vm593, %v1856, %v1720
    %v1865 = vsel %vm602, %v1857, %v1730
    %v1866 = vsel %vm602, %v1858, %v1732
    %v1867 = vsel %vm602, %v1859, %v1734
    %v1868 = vsel %vm602, %v1860, %v1736
    %v1869 = vsel %vm602, %v1861, %v1738
    %v1870 = vsel %vm602, %v1862, %v1740
    %v1871 = vsel %vm602, %v1863, %v1742
    %v1872 = vsel %vm602, %v1864, %v1744
    %v1873 = vsel %vm238, %v1865, %v1754
    %v1874 = vsel %vm238, %v1866, %v1756
    %v1875 = vsel %vm238, %v1867, %v1758
    %v1876 = vsel %vm238, %v1868, %v1760
    %v1877 = vsel %vm238, %v1869, %v1762
    %v1878 = vsel %vm238, %v1870, %v1764
    %v1879 = vsel %vm238, %v1871, %v1766
    %v1880 = vsel %vm238, %v1872, %v1768
    %v1881 = vsel %vm619, %v1873, %v1778
    %v1882 = vsel %vm619, %v1874, %v1780
    %v1883 = vsel %vm619, %v1875, %v1782
    %v1884 = vsel %vm619, %v1876, %v1784
    %v1885 = vsel %vm619, %v1877, %v1786
    %v1886 = vsel %vm619, %v1878, %v1788
    %v1887 = vsel %vm619, %v1879, %v1790
    %v1888 = vsel %vm619, %v1880, %v1792
    %v1889 = vsel %vm628, %v1881, %v1802
    %v1890 = vsel %vm628, %v1882, %v1804
    %v1891 = vsel %vm628, %v1883, %v1806
    %v1892 = vsel %vm628, %v1884, %v1808
    %v1893 = vsel %vm628, %v1885, %v1810
    %v1894 = vsel %vm628, %v1886, %v1812
    %v1895 = vsel %vm628, %v1887, %v1814
    %v1896 = vsel %vm628, %v1888, %v1816
    %v1897 = vsel %vm637, %v1889, %v1826
    %v1898 = vsel %vm637, %v1890, %v1828
    %v1899 = vsel %vm637, %v1891, %v1830
    %v1900 = vsel %vm637, %v1892, %v1832
    %v1901 = vsel %vm637, %v1893, %v1834
    %v1902 = vsel %vm637, %v1894, %v1836
    %v1903 = vsel %vm637, %v1895, %v1838
    %v1904 = vsel %vm637, %v1896, %v1840
    %v1905 = vmul.f32 %v1897, %v200
    %v1906 = vmul.f32 %v1898, %v201
    %v1907 = vmul.f32 %v1899, %v202
    %v1908 = vmul.f32 %v1900, %v203
    %v1909 = vmul.f32 %v1901, %v200
    %v1910 = vmul.f32 %v1902, %v201
    %v1911 = vmul.f32 %v1903, %v202
    %v1912 = vmul.f32 %v1904, %v203
    %v1913 = vmul.f32 %v1593, %v663
    %v1914 = vmul.f32 %v1593, %v665
    %v1915 = vmul.f32 %v1593, %v667
    %v1916 = vmul.f32 %v1593, %v669
    %v1917 = vmul.f32 %v1593, %v671
    %v1918 = vmul.f32 %v1593, %v673
    %v1919 = vmul.f32 %v1593, %v675
    %v1920 = vmul.f32 %v1593, %v677
    %v1921 = vmul.f32 %v1598, %v663
    %v1922 = vmul.f32 %v1598, %v665
    %v1923 = vmul.f32 %v1598, %v667
    %v1924 = vmul.f32 %v1598, %v669
    %v1925 = vmul.f32 %v1598, %v671
    %v1926 = vmul.f32 %v1598, %v673
    %v1927 = vmul.f32 %v1598, %v675
    %v1928 = vmul.f32 %v1598, %v677
    %v1930 = vsel %vm238, %v1583, 0
    %1932 = vmatprep.subr.mxu0 0.0
    %1933 = vmatpush1.msra.mxu0 %v1905
    %1934 = vmatprep.subr.mxu0 0.0
    %1935 = vmatpush1.msra.mxu0 %v1906
    %1936 = vmatprep.subr.mxu0 0.0
    %1937 = vmatpush1.msra.mxu0 %v1907
    %1938 = vmatprep.subr.mxu0 0.0
    %1939 = vmatpush1.msra.mxu0 %v1908
    %1940 = vmatprep.subr.mxu0 0.0
    %1941 = vmatpush1.msra.mxu0 0.0
    %1942 = vmatprep.subr.mxu0 0.0
    %1943 = vmatpush1.msra.mxu0 0.0
    %1944 = vmatprep.subr.mxu0 0.0
    %1945 = vmatpush1.msra.mxu0 0.0
    %1946 = vmatprep.subr.mxu0 0.0
    %1947 = vmatpush1.msra.mxu0 0.0
    %1948 = vmatprep.subr.mxu0 0.0
    %1949 = vmatpush1.msra.mxu0 0.0
    %1950 = vmatprep.subr.mxu0 0.0
    %1951 = vmatpush1.msra.mxu0 0.0
    %1952 = vmatprep.subr.mxu0 0.0
    %1953 = vmatpush1.msra.mxu0 0.0
    %1954 = vmatprep.subr.mxu0 0.0
    %1955 = vmatpush1.msra.mxu0 0.0
    %1956 = vmatprep.subr.mxu0 0.0
    %1957 = vmatpush1.msra.mxu0 0.0
    %1958 = vmatprep.subr.mxu0 0.0
    %1959 = vmatpush1.msra.mxu0 0.0
    %1960 = vmatprep.subr.mxu0 0.0
    %1961 = vmatpush1.msra.mxu0 0.0
    %1962 = vmatprep.subr.mxu0 0.0
    %1963 = vmatpush1.msra.mxu0 0.0
    %1964 = vmatprep.subr.mxu0 0.0
    %1965 = vmatpush1.msra.mxu0 0.0
    %1966 = vmatprep.subr.mxu0 0.0
    %1967 = vmatpush1.msra.mxu0 0.0
    %1968 = vmatprep.subr.mxu0 0.0
    %1969 = vmatpush1.msra.mxu0 0.0
    %1970 = vmatprep.subr.mxu0 0.0
    %1971 = vmatpush1.msra.mxu0 0.0
    %1972 = vmatprep.subr.mxu0 0.0
    %1973 = vmatpush1.msra.mxu0 0.0
    %1974 = vmatprep.subr.mxu0 0.0
    %1975 = vmatpush1.msra.mxu0 0.0
    %1976 = vmatprep.subr.mxu0 0.0
    %1977 = vmatpush1.msra.mxu0 0.0
    %1978 = vmatprep.subr.mxu0 0.0
    %1979 = vmatpush1.msra.mxu0 0.0
    %1980 = vmatprep.subr.mxu0 0.0
    %1981 = vmatpush1.msra.mxu0 0.0
    %1982 = vmatprep.subr.mxu0 0.0
    %1983 = vmatpush1.msra.mxu0 0.0
    %1984 = vmatprep.subr.mxu0 0.0
    %1985 = vmatpush1.msra.mxu0 0.0
    %1986 = vmatprep.subr.mxu0 0.0
    %1987 = vmatpush1.msra.mxu0 0.0
    %1988 = vmatprep.subr.mxu0 0.0
    %1989 = vmatpush1.msra.mxu0 0.0
    %1990 = vmatprep.subr.mxu0 0.0
    %1991 = vmatpush1.msra.mxu0 0.0
    %1992 = vmatprep.subr.mxu0 0.0
    %1993 = vmatpush1.msra.mxu0 0.0
    %1994 = vmatprep.subr.mxu0 0.0
    %1995 = vmatpush1.msra.mxu0 0.0
    %1996 = vmatprep.mubr.f32.mxu0 0.0
    %1997 = vmatmul.mubr.f32.gmra.mrb[0].mxu0 %v1930
    %v1998 = vpop.f32.mrb[0].mxu0
    %v1999 = vadd.f32 0.0, %v1998
    %v2000 = vpop.f32.mrb[0].mxu0
    %2001 = vdwg.mxu0
    %v2003 = vsel %vm238, %v1588, 0
    %2005 = vmatprep.subr.mxu0 0.0
    %2006 = vmatpush1.msra.mxu0 %v1909
    %2007 = vmatprep.subr.mxu0 0.0
    %2008 = vmatpush1.msra.mxu0 %v1910
    %2009 = vmatprep.subr.mxu0 0.0
    %2010 = vmatpush1.msra.mxu0 %v1911
    %2011 = vmatprep.subr.mxu0 0.0
    %2012 = vmatpush1.msra.mxu0 %v1912
    %2013 = vmatprep.subr.mxu0 0.0
    %2014 = vmatpush1.msra.mxu0 0.0
    %2015 = vmatprep.subr.mxu0 0.0
    %2016 = vmatpush1.msra.mxu0 0.0
    %2017 = vmatprep.subr.mxu0 0.0
    %2018 = vmatpush1.msra.mxu0 0.0
    %2019 = vmatprep.subr.mxu0 0.0
    %2020 = vmatpush1.msra.mxu0 0.0
    %2021 = vmatprep.subr.mxu0 0.0
    %2022 = vmatpush1.msra.mxu0 0.0
    %2023 = vmatprep.subr.mxu0 0.0
    %2024 = vmatpush1.msra.mxu0 0.0
    %2025 = vmatprep.subr.mxu0 0.0
    %2026 = vmatpush1.msra.mxu0 0.0
    %2027 = vmatprep.subr.mxu0 0.0
    %2028 = vmatpush1.msra.mxu0 0.0
    %2029 = vmatprep.subr.mxu0 0.0
    %2030 = vmatpush1.msra.mxu0 0.0
    %2031 = vmatprep.subr.mxu0 0.0
    %2032 = vmatpush1.msra.mxu0 0.0
    %2033 = vmatprep.subr.mxu0 0.0
    %2034 = vmatpush1.msra.mxu0 0.0
    %2035 = vmatprep.subr.mxu0 0.0
    %2036 = vmatpush1.msra.mxu0 0.0
    %2037 = vmatprep.subr.mxu0 0.0
    %2038 = vmatpush1.msra.mxu0 0.0
    %2039 = vmatprep.subr.mxu0 0.0
    %2040 = vmatpush1.msra.mxu0 0.0
    %2041 = vmatprep.subr.mxu0 0.0
    %2042 = vmatpush1.msra.mxu0 0.0
    %2043 = vmatprep.subr.mxu0 0.0
    %2044 = vmatpush1.msra.mxu0 0.0
    %2045 = vmatprep.subr.mxu0 0.0
    %2046 = vmatpush1.msra.mxu0 0.0
    %2047 = vmatprep.subr.mxu0 0.0
    %2048 = vmatpush1.msra.mxu0 0.0
    %2049 = vmatprep.subr.mxu0 0.0
    %2050 = vmatpush1.msra.mxu0 0.0
    %2051 = vmatprep.subr.mxu0 0.0
    %2052 = vmatpush1.msra.mxu0 0.0
    %2053 = vmatprep.subr.mxu0 0.0
    %2054 = vmatpush1.msra.mxu0 0.0
    %2055 = vmatprep.subr.mxu0 0.0
    %2056 = vmatpush1.msra.mxu0 0.0
    %2057 = vmatprep.subr.mxu0 0.0
    %2058 = vmatpush1.msra.mxu0 0.0
    %2059 = vmatprep.subr.mxu0 0.0
    %2060 = vmatpush1.msra.mxu0 0.0
    %2061 = vmatprep.subr.mxu0 0.0
    %2062 = vmatpush1.msra.mxu0 0.0
    %2063 = vmatprep.subr.mxu0 0.0
    %2064 = vmatpush1.msra.mxu0 0.0
    %2065 = vmatprep.subr.mxu0 0.0
    %2066 = vmatpush1.msra.mxu0 0.0
    %2067 = vmatprep.subr.mxu0 0.0
    %2068 = vmatpush1.msra.mxu0 0.0
    %2069 = vmatprep.mubr.f32.mxu0 0.0
    %2070 = vmatmul.mubr.f32.gmra.mrb[0].mxu0 %v2003
    %v2071 = vpop.f32.mrb[0].mxu0
    %v2072 = vadd.f32 0.0, %v2071
    %v2073 = vpop.f32.mrb[0].mxu0
    %2074 = vdwg.mxu0
    %v2075 = vsel %vm848, %v1999, -inf
    %2076 = vmax.xlane.f32.xlu0 %v2075
    %v2077 = vpop.xlane.xlu0 %2076
    %v2078 = vsel %vm848, %v2072, -inf
    %2079 = vmax.xlane.f32.xlu0 %v2078
    %v2080 = vpop.xlane.xlu0 %2079
    %v2081 = vsub.f32 %v1999, %v2077
    %v2082 = vsub.f32 %v2072, %v2080
    %v2083 = vmul.f32 %v2081, 1.442695
    %v2084 = vpow.pop %v2083
    %v2085 = vmul.f32 %v2082, 1.442695
    %v2086 = vpow.pop %v2085
    %v2088 = vsel %vm848, %v2084, 0
    %v2091 = vsel %vm848, %v2086, 0
    %2093 = vmatprep.subr.mxu0 0.0
    %2094 = vmatpush1.msra.mxu0 %v192
    %2095 = vmatprep.subr.mxu0 0.0
    %2096 = vmatpush1.msra.mxu0 %v193
    %2097 = vmatprep.subr.mxu0 0.0
    %2098 = vmatpush1.msra.mxu0 %v194
    %2099 = vmatprep.subr.mxu0 0.0
    %2100 = vmatpush1.msra.mxu0 %v195
    %2101 = vmatprep.subr.mxu0 0.0
    %2102 = vmatpush1.msra.mxu0 %v196
    %2103 = vmatprep.subr.mxu0 0.0
    %2104 = vmatpush1.msra.mxu0 %v197
    %2105 = vmatprep.subr.mxu0 0.0
    %2106 = vmatpush1.msra.mxu0 %v198
    %2107 = vmatprep.subr.mxu0 0.0
    %2108 = vmatpush1.msra.mxu0 %v199
    %2109 = vmatprep.subr.mxu0 0.0
    %2110 = vmatpush1.msra.mxu0 0.0
    %2111 = vmatprep.subr.mxu0 0.0
    %2112 = vmatpush1.msra.mxu0 0.0
    %2113 = vmatprep.subr.mxu0 0.0
    %2114 = vmatpush1.msra.mxu0 0.0
    %2115 = vmatprep.subr.mxu0 0.0
    %2116 = vmatpush1.msra.mxu0 0.0
    %2117 = vmatprep.subr.mxu0 0.0
    %2118 = vmatpush1.msra.mxu0 0.0
    %2119 = vmatprep.subr.mxu0 0.0
    %2120 = vmatpush1.msra.mxu0 0.0
    %2121 = vmatprep.subr.mxu0 0.0
    %2122 = vmatpush1.msra.mxu0 0.0
    %2123 = vmatprep.subr.mxu0 0.0
    %2124 = vmatpush1.msra.mxu0 0.0
    %2125 = vmatprep.subr.mxu0 0.0
    %2126 = vmatpush1.msra.mxu0 0.0
    %2127 = vmatprep.subr.mxu0 0.0
    %2128 = vmatpush1.msra.mxu0 0.0
    %2129 = vmatprep.subr.mxu0 0.0
    %2130 = vmatpush1.msra.mxu0 0.0
    %2131 = vmatprep.subr.mxu0 0.0
    %2132 = vmatpush1.msra.mxu0 0.0
    %2133 = vmatprep.subr.mxu0 0.0
    %2134 = vmatpush1.msra.mxu0 0.0
    %2135 = vmatprep.subr.mxu0 0.0
    %2136 = vmatpush1.msra.mxu0 0.0
    %2137 = vmatprep.subr.mxu0 0.0
    %2138 = vmatpush1.msra.mxu0 0.0
    %2139 = vmatprep.subr.mxu0 0.0
    %2140 = vmatpush1.msra.mxu0 0.0
    %2141 = vmatprep.subr.mxu0 0.0
    %2142 = vmatpush1.msra.mxu0 0.0
    %2143 = vmatprep.subr.mxu0 0.0
    %2144 = vmatpush1.msra.mxu0 0.0
    %2145 = vmatprep.subr.mxu0 0.0
    %2146 = vmatpush1.msra.mxu0 0.0
    %2147 = vmatprep.subr.mxu0 0.0
    %2148 = vmatpush1.msra.mxu0 0.0
    %2149 = vmatprep.subr.mxu0 0.0
    %2150 = vmatpush1.msra.mxu0 0.0
    %2151 = vmatprep.subr.mxu0 0.0
    %2152 = vmatpush1.msra.mxu0 0.0
    %2153 = vmatprep.subr.mxu0 0.0
    %2154 = vmatpush1.msra.mxu0 0.0
    %2155 = vmatprep.subr.mxu0 0.0
    %2156 = vmatpush1.msra.mxu0 0.0
    %2157 = vmatprep.mubr.f32.mxu0 0.0
    %2158 = vmatmul.mubr.f32.gmra.mrb[0].mxu0 %v2088
    %v2159 = vpop.f32.mrb[0].mxu0
    %v2160 = vadd.f32 0.0, %v2159
    %v2161 = vpop.f32.mrb[0].mxu0
    %2162 = vmatprep.mubr.f32.mxu0 0.0
    %2163 = vmatmul.mubr.f32.gmra.mrb[0].mxu0 %v2091
    %v2164 = vpop.f32.mrb[0].mxu0
    %v2165 = vadd.f32 0.0, %v2164
    %v2166 = vpop.f32.mrb[0].mxu0
    %2167 = vdwg.mxu0
    %2176 = vrot.lane.b32.xlu0 %v1913, 64
    %v2177 = vpop.permute.xlu0 %2176
    %2178 = vrot.lane.b32.xlu0 %v1914, 64
    %v2179 = vpop.permute.xlu0 %2178
    %2180 = vrot.lane.b32.xlu0 %v1915, 64
    %v2181 = vpop.permute.xlu0 %2180
    %2182 = vrot.lane.b32.xlu0 %v1916, 64
    %v2183 = vpop.permute.xlu0 %2182
    %2184 = vrot.lane.b32.xlu0 %v1917, 64
    %v2185 = vpop.permute.xlu0 %2184
    %2186 = vrot.lane.b32.xlu0 %v1918, 64
    %v2187 = vpop.permute.xlu0 %2186
    %2188 = vrot.lane.b32.xlu0 %v1919, 64
    %v2189 = vpop.permute.xlu0 %2188
    %2190 = vrot.lane.b32.xlu0 %v1920, 64
    %v2191 = vpop.permute.xlu0 %2190
    %2200 = vmatprep.subr.mxu0 0.0
    %2201 = vmatpush1.msra.mxu0 %v2177
    %2202 = vmatprep.subr.mxu0 0.0
    %2203 = vmatpush1.msra.mxu0 %v2179
    %2204 = vmatprep.subr.mxu0 0.0
    %2205 = vmatpush1.msra.mxu0 %v2181
    %2206 = vmatprep.subr.mxu0 0.0
    %2207 = vmatpush1.msra.mxu0 %v2183
    %2208 = vmatprep.subr.mxu0 0.0
    %2209 = vmatpush1.msra.mxu0 %v2185
    %2210 = vmatprep.subr.mxu0 0.0
    %2211 = vmatpush1.msra.mxu0 %v2187
    %2212 = vmatprep.subr.mxu0 0.0
    %2213 = vmatpush1.msra.mxu0 %v2189
    %2214 = vmatprep.subr.mxu0 0.0
    %2215 = vmatpush1.msra.mxu0 %v2191
    %2216 = vmatprep.subr.mxu0 0.0
    %2217 = vmatpush1.msra.mxu0 0.0
    %2218 = vmatprep.subr.mxu0 0.0
    %2219 = vmatpush1.msra.mxu0 0.0
    %2220 = vmatprep.subr.mxu0 0.0
    %2221 = vmatpush1.msra.mxu0 0.0
    %2222 = vmatprep.subr.mxu0 0.0
    %2223 = vmatpush1.msra.mxu0 0.0
    %2224 = vmatprep.subr.mxu0 0.0
    %2225 = vmatpush1.msra.mxu0 0.0
    %2226 = vmatprep.subr.mxu0 0.0
    %2227 = vmatpush1.msra.mxu0 0.0
    %2228 = vmatprep.subr.mxu0 0.0
    %2229 = vmatpush1.msra.mxu0 0.0
    %2230 = vmatprep.subr.mxu0 0.0
    %2231 = vmatpush1.msra.mxu0 0.0
    %2232 = vmatprep.subr.mxu0 0.0
    %2233 = vmatpush1.msra.mxu0 0.0
    %2234 = vmatprep.subr.mxu0 0.0
    %2235 = vmatpush1.msra.mxu0 0.0
    %2236 = vmatprep.subr.mxu0 0.0
    %2237 = vmatpush1.msra.mxu0 0.0
    %2238 = vmatprep.subr.mxu0 0.0
    %2239 = vmatpush1.msra.mxu0 0.0
    %2240 = vmatprep.subr.mxu0 0.0
    %2241 = vmatpush1.msra.mxu0 0.0
    %2242 = vmatprep.subr.mxu0 0.0
    %2243 = vmatpush1.msra.mxu0 0.0
    %2244 = vmatprep.subr.mxu0 0.0
    %2245 = vmatpush1.msra.mxu0 0.0
    %2246 = vmatprep.subr.mxu0 0.0
    %2247 = vmatpush1.msra.mxu0 0.0
    %2248 = vmatprep.subr.mxu0 0.0
    %2249 = vmatpush1.msra.mxu0 0.0
    %2250 = vmatprep.subr.mxu0 0.0
    %2251 = vmatpush1.msra.mxu0 0.0
    %2252 = vmatprep.subr.mxu0 0.0
    %2253 = vmatpush1.msra.mxu0 0.0
    %2254 = vmatprep.subr.mxu0 0.0
    %2255 = vmatpush1.msra.mxu0 0.0
    %2256 = vmatprep.subr.mxu0 0.0
    %2257 = vmatpush1.msra.mxu0 0.0
    %2258 = vmatprep.subr.mxu0 0.0
    %2259 = vmatpush1.msra.mxu0 0.0
    %2260 = vmatprep.subr.mxu0 0.0
    %2261 = vmatpush1.msra.mxu0 0.0
    %2262 = vmatprep.subr.mxu0 0.0
    %2263 = vmatpush1.msra.mxu0 0.0
    %2264 = vmatprep.mubr.f32.mxu0 0.0
    %2265 = vmatmul.mubr.f32.gmra.mrb[0].mxu0 %v2088
    %v2266 = vpop.f32.mrb[0].mxu0
    %v2267 = vadd.f32 0.0, %v2266
    %v2268 = vpop.f32.mrb[0].mxu0
    %2269 = vdwg.mxu0
    %2278 = vrot.lane.b32.xlu0 %v1921, 64
    %v2279 = vpop.permute.xlu0 %2278
    %2280 = vrot.lane.b32.xlu0 %v1922, 64
    %v2281 = vpop.permute.xlu0 %2280
    %2282 = vrot.lane.b32.xlu0 %v1923, 64
    %v2283 = vpop.permute.xlu0 %2282
    %2284 = vrot.lane.b32.xlu0 %v1924, 64
    %v2285 = vpop.permute.xlu0 %2284
    %2286 = vrot.lane.b32.xlu0 %v1925, 64
    %v2287 = vpop.permute.xlu0 %2286
    %2288 = vrot.lane.b32.xlu0 %v1926, 64
    %v2289 = vpop.permute.xlu0 %2288
    %2290 = vrot.lane.b32.xlu0 %v1927, 64
    %v2291 = vpop.permute.xlu0 %2290
    %2292 = vrot.lane.b32.xlu0 %v1928, 64
    %v2293 = vpop.permute.xlu0 %2292
    %2302 = vmatprep.subr.mxu0 0.0
    %2303 = vmatpush1.msra.mxu0 %v2279
    %2304 = vmatprep.subr.mxu0 0.0
    %2305 = vmatpush1.msra.mxu0 %v2281
    %2306 = vmatprep.subr.mxu0 0.0
    %2307 = vmatpush1.msra.mxu0 %v2283
    %2308 = vmatprep.subr.mxu0 0.0
    %2309 = vmatpush1.msra.mxu0 %v2285
    %2310 = vmatprep.subr.mxu0 0.0
    %2311 = vmatpush1.msra.mxu0 %v2287
    %2312 = vmatprep.subr.mxu0 0.0
    %2313 = vmatpush1.msra.mxu0 %v2289
    %2314 = vmatprep.subr.mxu0 0.0
    %2315 = vmatpush1.msra.mxu0 %v2291
    %2316 = vmatprep.subr.mxu0 0.0
    %2317 = vmatpush1.msra.mxu0 %v2293
    %2318 = vmatprep.subr.mxu0 0.0
    %2319 = vmatpush1.msra.mxu0 0.0
    %2320 = vmatprep.subr.mxu0 0.0
    %2321 = vmatpush1.msra.mxu0 0.0
    %2322 = vmatprep.subr.mxu0 0.0
    %2323 = vmatpush1.msra.mxu0 0.0
    %2324 = vmatprep.subr.mxu0 0.0
    %2325 = vmatpush1.msra.mxu0 0.0
    %2326 = vmatprep.subr.mxu0 0.0
    %2327 = vmatpush1.msra.mxu0 0.0
    %2328 = vmatprep.subr.mxu0 0.0
    %2329 = vmatpush1.msra.mxu0 0.0
    %2330 = vmatprep.subr.mxu0 0.0
    %2331 = vmatpush1.msra.mxu0 0.0
    %2332 = vmatprep.subr.mxu0 0.0
    %2333 = vmatpush1.msra.mxu0 0.0
    %2334 = vmatprep.subr.mxu0 0.0
    %2335 = vmatpush1.msra.mxu0 0.0
    %2336 = vmatprep.subr.mxu0 0.0
    %2337 = vmatpush1.msra.mxu0 0.0
    %2338 = vmatprep.subr.mxu0 0.0
    %2339 = vmatpush1.msra.mxu0 0.0
    %2340 = vmatprep.subr.mxu0 0.0
    %2341 = vmatpush1.msra.mxu0 0.0
    %2342 = vmatprep.subr.mxu0 0.0
    %2343 = vmatpush1.msra.mxu0 0.0
    %2344 = vmatprep.subr.mxu0 0.0
    %2345 = vmatpush1.msra.mxu0 0.0
    %2346 = vmatprep.subr.mxu0 0.0
    %2347 = vmatpush1.msra.mxu0 0.0
    %2348 = vmatprep.subr.mxu0 0.0
    %2349 = vmatpush1.msra.mxu0 0.0
    %2350 = vmatprep.subr.mxu0 0.0
    %2351 = vmatpush1.msra.mxu0 0.0
    %2352 = vmatprep.subr.mxu0 0.0
    %2353 = vmatpush1.msra.mxu0 0.0
    %2354 = vmatprep.subr.mxu0 0.0
    %2355 = vmatpush1.msra.mxu0 0.0
    %2356 = vmatprep.subr.mxu0 0.0
    %2357 = vmatpush1.msra.mxu0 0.0
    %2358 = vmatprep.subr.mxu0 0.0
    %2359 = vmatpush1.msra.mxu0 0.0
    %2360 = vmatprep.subr.mxu0 0.0
    %2361 = vmatpush1.msra.mxu0 0.0
    %2362 = vmatprep.subr.mxu0 0.0
    %2363 = vmatpush1.msra.mxu0 0.0
    %2364 = vmatprep.subr.mxu0 0.0
    %2365 = vmatpush1.msra.mxu0 0.0
    %2366 = vmatprep.mubr.f32.mxu0 0.0
    %2367 = vmatmul.mubr.f32.gmra.mrb[0].mxu0 %v2091
    %v2368 = vpop.f32.mrb[0].mxu0
    %v2369 = vadd.f32 0.0, %v2368
    %v2370 = vpop.f32.mrb[0].mxu0
    %2371 = vdwg.mxu0
    %v2372 = vrcp.pop %v2160
    %v2373 = vrcp.pop %v2165
    %v2374 = vmul.f32 %v2267, %v2372
    %v2375 = vmul.f32 %v2369, %v2373
    %v2377 = vsel %vm238, %v2374, 0
    %v2380 = vsel %vm238, %v2375, 0
    %2382 = vmatprep.subr.mxu0 0.0
    %2383 = vmatpush1.msra.mxu0 %v209
    %2384 = vmatprep.subr.mxu0 0.0
    %2385 = vmatpush1.msra.mxu0 %v210
    %2386 = vmatprep.subr.mxu0 0.0
    %2387 = vmatpush1.msra.mxu0 %v211
    %2388 = vmatprep.subr.mxu0 0.0
    %2389 = vmatpush1.msra.mxu0 %v212
    %2390 = vmatprep.subr.mxu0 0.0
    %2391 = vmatpush1.msra.mxu0 0.0
    %2392 = vmatprep.subr.mxu0 0.0
    %2393 = vmatpush1.msra.mxu0 0.0
    %2394 = vmatprep.subr.mxu0 0.0
    %2395 = vmatpush1.msra.mxu0 0.0
    %2396 = vmatprep.subr.mxu0 0.0
    %2397 = vmatpush1.msra.mxu0 0.0
    %2398 = vmatprep.subr.mxu0 0.0
    %2399 = vmatpush1.msra.mxu0 0.0
    %2400 = vmatprep.subr.mxu0 0.0
    %2401 = vmatpush1.msra.mxu0 0.0
    %2402 = vmatprep.subr.mxu0 0.0
    %2403 = vmatpush1.msra.mxu0 0.0
    %2404 = vmatprep.subr.mxu0 0.0
    %2405 = vmatpush1.msra.mxu0 0.0
    %2406 = vmatprep.subr.mxu0 0.0
    %2407 = vmatpush1.msra.mxu0 0.0
    %2408 = vmatprep.subr.mxu0 0.0
    %2409 = vmatpush1.msra.mxu0 0.0
    %2410 = vmatprep.subr.mxu0 0.0
    %2411 = vmatpush1.msra.mxu0 0.0
    %2412 = vmatprep.subr.mxu0 0.0
    %2413 = vmatpush1.msra.mxu0 0.0
    %2414 = vmatprep.subr.mxu0 0.0
    %2415 = vmatpush1.msra.mxu0 0.0
    %2416 = vmatprep.subr.mxu0 0.0
    %2417 = vmatpush1.msra.mxu0 0.0
    %2418 = vmatprep.subr.mxu0 0.0
    %2419 = vmatpush1.msra.mxu0 0.0
    %2420 = vmatprep.subr.mxu0 0.0
    %2421 = vmatpush1.msra.mxu0 0.0
    %2422 = vmatprep.subr.mxu0 0.0
    %2423 = vmatpush1.msra.mxu0 0.0
    %2424 = vmatprep.subr.mxu0 0.0
    %2425 = vmatpush1.msra.mxu0 0.0
    %2426 = vmatprep.subr.mxu0 0.0
    %2427 = vmatpush1.msra.mxu0 0.0
    %2428 = vmatprep.subr.mxu0 0.0
    %2429 = vmatpush1.msra.mxu0 0.0
    %2430 = vmatprep.subr.mxu0 0.0
    %2431 = vmatpush1.msra.mxu0 0.0
    %2432 = vmatprep.subr.mxu0 0.0
    %2433 = vmatpush1.msra.mxu0 0.0
    %2434 = vmatprep.subr.mxu0 0.0
    %2435 = vmatpush1.msra.mxu0 0.0
    %2436 = vmatprep.subr.mxu0 0.0
    %2437 = vmatpush1.msra.mxu0 0.0
    %2438 = vmatprep.subr.mxu0 0.0
    %2439 = vmatpush1.msra.mxu0 0.0
    %2440 = vmatprep.subr.mxu0 0.0
    %2441 = vmatpush1.msra.mxu0 0.0
    %2442 = vmatprep.subr.mxu0 0.0
    %2443 = vmatpush1.msra.mxu0 0.0
    %2444 = vmatprep.subr.mxu0 0.0
    %2445 = vmatpush1.msra.mxu0 0.0
    %2446 = vmatprep.mubr.f32.mxu0 0.0
    %2447 = vmatmul.mubr.f32.gmra.mrb[0].mxu0 %v2377
    %v2448 = vpop.f32.mrb[0].mxu0
    %v2449 = vadd.f32 %v1154, %v2448
    %v2450 = vpop.f32.mrb[0].mxu0
    %2451 = vmatprep.mubr.f32.mxu0 0.0
    %2452 = vmatmul.mubr.f32.gmra.mrb[0].mxu0 %v2380
    %v2453 = vpop.f32.mrb[0].mxu0
    %v2454 = vadd.f32 %v1154, %v2453
    %v2455 = vpop.f32.mrb[0].mxu0
    %2456 = vdwg.mxu0
    %v2457 = vadd.f32 %v1508, %v2449
    %v2458 = vadd.f32 %v1509, %v2454
    %v2459 = vsel %vm238, %v2457, 0.0
    %2460 = vadd.xlane.f32.xlu0 %v2459
    %v2461 = vpop.xlane.xlu0 %2460
    %v2462 = vsel %vm238, %v2458, 0.0
    %2463 = vadd.xlane.f32.xlu0 %v2462
    %v2464 = vpop.xlane.xlu0 %2463
    %v2465 = vmul.f32 %v2461, %v1245
    %v2466 = vmul.f32 %v2464, %v1245
    %v2467 = vmul.f32 %v2457, %v2457
    %v2468 = vmul.f32 %v2458, %v2458
    %v2469 = vsel %vm238, %v2467, 0.0
    %2470 = vadd.xlane.f32.xlu0 %v2469
    %v2471 = vpop.xlane.xlu0 %2470
    %v2472 = vsel %vm238, %v2468, 0.0
    %2473 = vadd.xlane.f32.xlu0 %v2472
    %v2474 = vpop.xlane.xlu0 %2473
    %v2475 = vmul.f32 %v2471, %v1245
    %v2476 = vmul.f32 %v2474, %v1245
    %v2477 = vmul.f32 %v2465, %v2465
    %v2478 = vmul.f32 %v2466, %v2466
    %v2479 = vsub.f32 %v2475, %v2477
    %v2480 = vsub.f32 %v2476, %v2478
    %v2481 = vsub.f32 %v2457, %v2465
    %v2482 = vsub.f32 %v2458, %v2466
    %v2483 = vadd.f32 %v2479, 1e-05
    %v2484 = vadd.f32 %v2480, 1e-05
    %v2485 = vrsqrt.pop %v2483
    %v2486 = vrsqrt.pop %v2484
    %v2487 = vmul.f32 %v2481, %v2485
    %v2488 = vmul.f32 %v2482, %v2486
    %v2489 = vmul.f32 %v2487, %v1274
    %v2490 = vmul.f32 %v2488, %v1274
    %v2491 = vadd.f32 %v2489, %v1282
    %v2492 = vadd.f32 %v2490, %v1282
    %v2494 = vsel %vm238, %v2491, 0
    %v2497 = vsel %vm238, %v2492, 0
    %2499 = vmatprep.subr.mxu0 0.0
    %2500 = vmatpush1.msra.mxu0 %v216
    %2501 = vmatprep.subr.mxu0 0.0
    %2502 = vmatpush1.msra.mxu0 %v217
    %2503 = vmatprep.subr.mxu0 0.0
    %2504 = vmatpush1.msra.mxu0 %v218
    %2505 = vmatprep.subr.mxu0 0.0
    %2506 = vmatpush1.msra.mxu0 %v219
    %2507 = vmatprep.subr.mxu0 0.0
    %2508 = vmatpush1.msra.mxu0 0.0
    %2509 = vmatprep.subr.mxu0 0.0
    %2510 = vmatpush1.msra.mxu0 0.0
    %2511 = vmatprep.subr.mxu0 0.0
    %2512 = vmatpush1.msra.mxu0 0.0
    %2513 = vmatprep.subr.mxu0 0.0
    %2514 = vmatpush1.msra.mxu0 0.0
    %2515 = vmatprep.subr.mxu0 0.0
    %2516 = vmatpush1.msra.mxu0 0.0
    %2517 = vmatprep.subr.mxu0 0.0
    %2518 = vmatpush1.msra.mxu0 0.0
    %2519 = vmatprep.subr.mxu0 0.0
    %2520 = vmatpush1.msra.mxu0 0.0
    %2521 = vmatprep.subr.mxu0 0.0
    %2522 = vmatpush1.msra.mxu0 0.0
    %2523 = vmatprep.subr.mxu0 0.0
    %2524 = vmatpush1.msra.mxu0 0.0
    %2525 = vmatprep.subr.mxu0 0.0
    %2526 = vmatpush1.msra.mxu0 0.0
    %2527 = vmatprep.subr.mxu0 0.0
    %2528 = vmatpush1.msra.mxu0 0.0
    %2529 = vmatprep.subr.mxu0 0.0
    %2530 = vmatpush1.msra.mxu0 0.0
    %2531 = vmatprep.subr.mxu0 0.0
    %2532 = vmatpush1.msra.mxu0 0.0
    %2533 = vmatprep.subr.mxu0 0.0
    %2534 = vmatpush1.msra.mxu0 0.0
    %2535 = vmatprep.subr.mxu0 0.0
    %2536 = vmatpush1.msra.mxu0 0.0
    %2537 = vmatprep.subr.mxu0 0.0
    %2538 = vmatpush1.msra.mxu0 0.0
    %2539 = vmatprep.subr.mxu0 0.0
    %2540 = vmatpush1.msra.mxu0 0.0
    %2541 = vmatprep.subr.mxu0 0.0
    %2542 = vmatpush1.msra.mxu0 0.0
    %2543 = vmatprep.subr.mxu0 0.0
    %2544 = vmatpush1.msra.mxu0 0.0
    %2545 = vmatprep.subr.mxu0 0.0
    %2546 = vmatpush1.msra.mxu0 0.0
    %2547 = vmatprep.subr.mxu0 0.0
    %2548 = vmatpush1.msra.mxu0 0.0
    %2549 = vmatprep.subr.mxu0 0.0
    %2550 = vmatpush1.msra.mxu0 0.0
    %2551 = vmatprep.subr.mxu0 0.0
    %2552 = vmatpush1.msra.mxu0 0.0
    %2553 = vmatprep.subr.mxu0 0.0
    %2554 = vmatpush1.msra.mxu0 0.0
    %2555 = vmatprep.subr.mxu0 0.0
    %2556 = vmatpush1.msra.mxu0 0.0
    %2557 = vmatprep.subr.mxu0 0.0
    %2558 = vmatpush1.msra.mxu0 0.0
    %2559 = vmatprep.subr.mxu0 0.0
    %2560 = vmatpush1.msra.mxu0 0.0
    %2561 = vmatprep.subr.mxu0 0.0
    %2562 = vmatpush1.msra.mxu0 0.0
    %2563 = vmatprep.mubr.f32.mxu0 0.0
    %2564 = vmatmul.mubr.f32.gmra.mrb[0].mxu0 %v2494
    %v2565 = vpop.f32.mrb[0].mxu0
    %v2566 = vadd.f32 %v1290, %v2565
    %v2567 = vpop.f32.mrb[0].mxu0
    %2568 = vmatprep.mubr.f32.mxu0 0.0
    %2569 = vmatmul.mubr.f32.gmra.mrb[0].mxu0 %v2497
    %v2570 = vpop.f32.mrb[0].mxu0
    %v2571 = vadd.f32 %v1290, %v2570
    %v2572 = vpop.f32.mrb[0].mxu0
    %2573 = vdwg.mxu0
    %v2574 = vmax.f32 %v2566, 0.0
    %v2575 = vmax.f32 %v2571, 0.0
    %v2577 = vsel %vm848, %v2574, 0
    %v2580 = vsel %vm848, %v2575, 0
    %2582 = vmatprep.subr.mxu0 0.0
    %2583 = vmatpush1.msra.mxu0 %v221
    %2584 = vmatprep.subr.mxu0 0.0
    %2585 = vmatpush1.msra.mxu0 %v222
    %2586 = vmatprep.subr.mxu0 0.0
    %2587 = vmatpush1.msra.mxu0 %v223
    %2588 = vmatprep.subr.mxu0 0.0
    %2589 = vmatpush1.msra.mxu0 %v224
    %2590 = vmatprep.subr.mxu0 0.0
    %2591 = vmatpush1.msra.mxu0 %v225
    %2592 = vmatprep.subr.mxu0 0.0
    %2593 = vmatpush1.msra.mxu0 %v226
    %2594 = vmatprep.subr.mxu0 0.0
    %2595 = vmatpush1.msra.mxu0 %v227
    %2596 = vmatprep.subr.mxu0 0.0
    %2597 = vmatpush1.msra.mxu0 %v228
    %2598 = vmatprep.subr.mxu0 0.0
    %2599 = vmatpush1.msra.mxu0 0.0
    %2600 = vmatprep.subr.mxu0 0.0
    %2601 = vmatpush1.msra.mxu0 0.0
    %2602 = vmatprep.subr.mxu0 0.0
    %2603 = vmatpush1.msra.mxu0 0.0
    %2604 = vmatprep.subr.mxu0 0.0
    %2605 = vmatpush1.msra.mxu0 0.0
    %2606 = vmatprep.subr.mxu0 0.0
    %2607 = vmatpush1.msra.mxu0 0.0
    %2608 = vmatprep.subr.mxu0 0.0
    %2609 = vmatpush1.msra.mxu0 0.0
    %2610 = vmatprep.subr.mxu0 0.0
    %2611 = vmatpush1.msra.mxu0 0.0
    %2612 = vmatprep.subr.mxu0 0.0
    %2613 = vmatpush1.msra.mxu0 0.0
    %2614 = vmatprep.subr.mxu0 0.0
    %2615 = vmatpush1.msra.mxu0 0.0
    %2616 = vmatprep.subr.mxu0 0.0
    %2617 = vmatpush1.msra.mxu0 0.0
    %2618 = vmatprep.subr.mxu0 0.0
    %2619 = vmatpush1.msra.mxu0 0.0
    %2620 = vmatprep.subr.mxu0 0.0
    %2621 = vmatpush1.msra.mxu0 0.0
    %2622 = vmatprep.subr.mxu0 0.0
    %2623 = vmatpush1.msra.mxu0 0.0
    %2624 = vmatprep.subr.mxu0 0.0
    %2625 = vmatpush1.msra.mxu0 0.0
    %2626 = vmatprep.subr.mxu0 0.0
    %2627 = vmatpush1.msra.mxu0 0.0
    %2628 = vmatprep.subr.mxu0 0.0
    %2629 = vmatpush1.msra.mxu0 0.0
    %2630 = vmatprep.subr.mxu0 0.0
    %2631 = vmatpush1.msra.mxu0 0.0
    %2632 = vmatprep.subr.mxu0 0.0
    %2633 = vmatpush1.msra.mxu0 0.0
    %2634 = vmatprep.subr.mxu0 0.0
    %2635 = vmatpush1.msra.mxu0 0.0
    %2636 = vmatprep.subr.mxu0 0.0
    %2637 = vmatpush1.msra.mxu0 0.0
    %2638 = vmatprep.subr.mxu0 0.0
    %2639 = vmatpush1.msra.mxu0 0.0
    %2640 = vmatprep.subr.mxu0 0.0
    %2641 = vmatpush1.msra.mxu0 0.0
    %2642 = vmatprep.subr.mxu0 0.0
    %2643 = vmatpush1.msra.mxu0 0.0
    %2644 = vmatprep.subr.mxu0 0.0
    %2645 = vmatpush1.msra.mxu0 0.0
    %2646 = vmatprep.mubr.f32.mxu0 0.0
    %2647 = vmatmul.mubr.f32.gmra.mrb[0].mxu0 %v2577
    %v2648 = vpop.f32.mrb[0].mxu0
    %v2649 = vadd.f32 %v1379, %v2648
    %v2650 = vpop.f32.mrb[0].mxu0
    %2651 = vmatprep.mubr.f32.mxu0 0.0
    %2652 = vmatmul.mubr.f32.gmra.mrb[0].mxu0 %v2580
    %v2653 = vpop.f32.mrb[0].mxu0
    %v2654 = vadd.f32 %v1379, %v2653
    %v2655 = vpop.f32.mrb[0].mxu0
    %2656 = vdwg.mxu0
    %v2657 = vadd.f32 %v2491, %v2649
    %v2658 = vadd.f32 %v2492, %v2654
    %v2659 = vsel %vm238, %v2657, 0.0
    %2660 = vadd.xlane.f32.xlu0 %v2659
    %v2661 = vpop.xlane.xlu0 %2660
    %v2662 = vsel %vm238, %v2658, 0.0
    %2663 = vadd.xlane.f32.xlu0 %v2662
    %v2664 = vpop.xlane.xlu0 %2663
    %v2665 = vmul.f32 %v2661, %v1245
    %v2666 = vmul.f32 %v2664, %v1245
    %v2667 = vmul.f32 %v2657, %v2657
    %v2668 = vmul.f32 %v2658, %v2658
    %v2669 = vsel %vm238, %v2667, 0.0
    %2670 = vadd.xlane.f32.xlu0 %v2669
    %v2671 = vpop.xlane.xlu0 %2670
    %v2672 = vsel %vm238, %v2668, 0.0
    %2673 = vadd.xlane.f32.xlu0 %v2672
    %v2674 = vpop.xlane.xlu0 %2673
    %v2675 = vmul.f32 %v2671, %v1245
    %v2676 = vmul.f32 %v2674, %v1245
    %v2677 = vmul.f32 %v2665, %v2665
    %v2678 = vmul.f32 %v2666, %v2666
    %v2679 = vsub.f32 %v2675, %v2677
    %v2680 = vsub.f32 %v2676, %v2678
    %v2681 = vsub.f32 %v2657, %v2665
    %v2682 = vsub.f32 %v2658, %v2666
    %v2683 = vadd.f32 %v2679, 1e-05
    %v2684 = vadd.f32 %v2680, 1e-05
    %v2685 = vrsqrt.pop %v2683
    %v2686 = vrsqrt.pop %v2684
    %v2687 = vmul.f32 %v2681, %v2685
    %v2688 = vmul.f32 %v2682, %v2686
    %v2689 = vmul.f32 %v2687, %v1498
    %v2690 = vmul.f32 %v2688, %v1498
    %v2691 = vadd.f32 %v2689, %v1506
    %v2692 = vadd.f32 %v2690, %v1506
    %s2693 = scalar_lea.vmem %s5, 32
    %v2694 = vld [vmem:[%s2693] sm:$0xff]
    %v2695 = vld [vmem:[%s2693 + $0x8] sm:$0xff]
    %v2696 = vld [vmem:[%s2693 + $0x10] sm:$0xff]
    %v2697 = vld [vmem:[%s2693 + $0x18] sm:$0xff]
    %s2698 = scalar_lea.vmem [#allocation5], 1
    %v2699 = vld [vmem:[%s2698] sm:$0x1]
    %s2700 = scalar_lea.vmem %s7, 32
    %v2701 = vld [vmem:[%s2700] sm:$0xff]
    %v2702 = vld [vmem:[%s2700 + $0x8] sm:$0xff]
    %v2703 = vld [vmem:[%s2700 + $0x10] sm:$0xff]
    %v2704 = vld [vmem:[%s2700 + $0x18] sm:$0xff]
    %s2705 = scalar_lea.vmem [#allocation7], 1
    %v2706 = vld [vmem:[%s2705] sm:$0x1]
    %s2707 = scalar_lea.vmem [#allocation8], 1
    %v2708 = vld [vmem:[%s2707] sm:$0x1]
    %s2709 = scalar_lea.vmem [#allocation10], 1
    %v2710 = vld [vmem:[%s2709] sm:$0x1]
    %s2711 = scalar_lea.vmem %s11, 32
    %v2712 = vld [vmem:[%s2711] sm:$0xff]
    %v2713 = vld [vmem:[%s2711 + $0x8] sm:$0xff]
    %v2714 = vld [vmem:[%s2711 + $0x10] sm:$0xff]
    %v2715 = vld [vmem:[%s2711 + $0x18] sm:$0xff]
    %s2716 = scalar_lea.vmem [#allocation11], 1
    %v2717 = vld [vmem:[%s2716] sm:$0x1]
    %s2718 = scalar_lea.vmem %s13, 64
    %v2719 = vld [vmem:[%s2718] sm:$0xff]
    %v2720 = vld [vmem:[%s2718 + $0x8] sm:$0xff]
    %v2721 = vld [vmem:[%s2718 + $0x10] sm:$0xff]
    %v2722 = vld [vmem:[%s2718 + $0x18] sm:$0xff]
    %v2723 = vld [vmem:[%s2718 + $0x20] sm:$0xff]
    %v2724 = vld [vmem:[%s2718 + $0x28] sm:$0xff]
    %v2725 = vld [vmem:[%s2718 + $0x30] sm:$0xff]
    %v2726 = vld [vmem:[%s2718 + $0x38] sm:$0xff]
    %s2727 = scalar_lea.vmem [#allocation13], 1
    %v2728 = vld [vmem:[%s2727] sm:$0x1]
    %s2729 = scalar_lea.vmem [#allocation14], 1
    %v2730 = vld [vmem:[%s2729] sm:$0x1]
    %s2731 = scalar_lea.vmem [#allocation16], 1
    %v2732 = vld [vmem:[%s2731] sm:$0x1]
    %v2734 = vlaneseq
    %v2735 = vshrl.u32 %v2734, 7
    %v2736 = vsub.s32 0, %v2735
    %v2737 = vrot.slane %v2699, %v2736
    %v2740 = vsel %vm238, %v2691, 0
    %v2743 = vsel %vm238, %v2692, 0
    %2745 = vmatprep.subr.mxu0 0.0
    %2746 = vmatpush1.msra.mxu0 %v2694
    %2747 = vmatprep.subr.mxu0 0.0
    %2748 = vmatpush1.msra.mxu0 %v2695
    %2749 = vmatprep.subr.mxu0 0.0
    %2750 = vmatpush1.msra.mxu0 %v2696
    %2751 = vmatprep.subr.mxu0 0.0
    %2752 = vmatpush1.msra.mxu0 %v2697
    %2753 = vmatprep.subr.mxu0 0.0
    %2754 = vmatpush1.msra.mxu0 0.0
    %2755 = vmatprep.subr.mxu0 0.0
    %2756 = vmatpush1.msra.mxu0 0.0
    %2757 = vmatprep.subr.mxu0 0.0
    %2758 = vmatpush1.msra.mxu0 0.0
    %2759 = vmatprep.subr.mxu0 0.0
    %2760 = vmatpush1.msra.mxu0 0.0
    %2761 = vmatprep.subr.mxu0 0.0
    %2762 = vmatpush1.msra.mxu0 0.0
    %2763 = vmatprep.subr.mxu0 0.0
    %2764 = vmatpush1.msra.mxu0 0.0
    %2765 = vmatprep.subr.mxu0 0.0
    %2766 = vmatpush1.msra.mxu0 0.0
    %2767 = vmatprep.subr.mxu0 0.0
    %2768 = vmatpush1.msra.mxu0 0.0
    %2769 = vmatprep.subr.mxu0 0.0
    %2770 = vmatpush1.msra.mxu0 0.0
    %2771 = vmatprep.subr.mxu0 0.0
    %2772 = vmatpush1.msra.mxu0 0.0
    %2773 = vmatprep.subr.mxu0 0.0
    %2774 = vmatpush1.msra.mxu0 0.0
    %2775 = vmatprep.subr.mxu0 0.0
    %2776 = vmatpush1.msra.mxu0 0.0
    %2777 = vmatprep.subr.mxu0 0.0
    %2778 = vmatpush1.msra.mxu0 0.0
    %2779 = vmatprep.subr.mxu0 0.0
    %2780 = vmatpush1.msra.mxu0 0.0
    %2781 = vmatprep.subr.mxu0 0.0
    %2782 = vmatpush1.msra.mxu0 0.0
    %2783 = vmatprep.subr.mxu0 0.0
    %2784 = vmatpush1.msra.mxu0 0.0
    %2785 = vmatprep.subr.mxu0 0.0
    %2786 = vmatpush1.msra.mxu0 0.0
    %2787 = vmatprep.subr.mxu0 0.0
    %2788 = vmatpush1.msra.mxu0 0.0
    %2789 = vmatprep.subr.mxu0 0.0
    %2790 = vmatpush1.msra.mxu0 0.0
    %2791 = vmatprep.subr.mxu0 0.0
    %2792 = vmatpush1.msra.mxu0 0.0
    %2793 = vmatprep.subr.mxu0 0.0
    %2794 = vmatpush1.msra.mxu0 0.0
    %2795 = vmatprep.subr.mxu0 0.0
    %2796 = vmatpush1.msra.mxu0 0.0
    %2797 = vmatprep.subr.mxu0 0.0
    %2798 = vmatpush1.msra.mxu0 0.0
    %2799 = vmatprep.subr.mxu0 0.0
    %2800 = vmatpush1.msra.mxu0 0.0
    %2801 = vmatprep.subr.mxu0 0.0
    %2802 = vmatpush1.msra.mxu0 0.0
    %2803 = vmatprep.subr.mxu0 0.0
    %2804 = vmatpush1.msra.mxu0 0.0
    %2805 = vmatprep.subr.mxu0 0.0
    %2806 = vmatpush1.msra.mxu0 0.0
    %2807 = vmatprep.subr.mxu0 0.0
    %2808 = vmatpush1.msra.mxu0 0.0
    %2809 = vmatprep.mubr.f32.mxu0 0.0
    %2810 = vmatmul.mubr.f32.gmra.mrb[0].mxu0 %v2740
    %v2811 = vpop.f32.mrb[0].mxu0
    %v2812 = vadd.f32 %v2737, %v2811
    %v2813 = vpop.f32.mrb[0].mxu0
    %2814 = vmatprep.mubr.f32.mxu0 0.0
    %2815 = vmatmul.mubr.f32.gmra.mrb[0].mxu0 %v2743
    %v2816 = vpop.f32.mrb[0].mxu0
    %v2817 = vadd.f32 %v2737, %v2816
    %v2818 = vpop.f32.mrb[0].mxu0
    %2819 = vmatprep.mubr.f32.mxu0 0.0
    %2820 = vmatmul.mubr.f32.gmra.mrb[0].mxu0 %v1511
    %v2821 = vpop.f32.mrb[0].mxu0
    %v2822 = vadd.f32 %v2737, %v2821
    %v2823 = vpop.f32.mrb[0].mxu0
    %2824 = vmatprep.mubr.f32.mxu0 0.0
    %2825 = vmatmul.mubr.f32.gmra.mrb[0].mxu0 %v1514
    %v2826 = vpop.f32.mrb[0].mxu0
    %v2827 = vadd.f32 %v2737, %v2826
    %v2828 = vpop.f32.mrb[0].mxu0
    %2829 = vdwg.mxu0
    %2832 = vrot.lane.b32.xlu0 %v2822, 96
    %v2833 = vpop.permute.xlu0 %2832
    %2834 = vrot.lane.b32.xlu0 %v2827, 96
    %v2835 = vpop.permute.xlu0 %2834
    %2838 = vxpose.xlu0.b32.start [1/16] %v2833, 128
    %2839 = vxpose.xlu0.b32.cont [2/16] 0.0, 128
    %2840 = vxpose.xlu0.b32.cont [3/16] 0.0, 128
    %2841 = vxpose.xlu0.b32.cont [4/16] 0.0, 128
    %2842 = vxpose.xlu0.b32.cont [5/16] 0.0, 128
    %2843 = vxpose.xlu0.b32.cont [6/16] 0.0, 128
    %2844 = vxpose.xlu0.b32.cont [7/16] 0.0, 128
    %2845 = vxpose.xlu0.b32.cont [8/16] 0.0, 128
    %2846 = vxpose.xlu0.b32.cont [9/16] 0.0, 128
    %2847 = vxpose.xlu0.b32.cont [10/16] 0.0, 128
    %2848 = vxpose.xlu0.b32.cont [11/16] 0.0, 128
    %2849 = vxpose.xlu0.b32.cont [12/16] 0.0, 128
    %2850 = vxpose.xlu0.b32.cont [13/16] 0.0, 128
    %2851 = vxpose.xlu0.b32.cont [14/16] 0.0, 128
    %2852 = vxpose.xlu0.b32.cont [15/16] 0.0, 128
    %2853 = vxpose.xlu0.b32.end [16/16] 0.0, 128
    %v2854 = vpop.trf.xlu0
    %v2855 = vpop.trf.xlu0
    %v2856 = vpop.trf.xlu0
    %v2857 = vpop.trf.xlu0
    %v2858 = vpop.trf.xlu0
    %v2859 = vpop.trf.xlu0
    %v2860 = vpop.trf.xlu0
    %v2861 = vpop.trf.xlu0
    %v2862 = vpop.trf.xlu0
    %v2863 = vpop.trf.xlu0
    %v2864 = vpop.trf.xlu0
    %v2865 = vpop.trf.xlu0
    %v2866 = vpop.trf.xlu0
    %v2867 = vpop.trf.xlu0
    %v2868 = vpop.trf.xlu0
    %v2869 = vpop.trf.xlu0
    %2870 = vxpose.xlu0.b32.start [1/16] %v2835, 128
    %2871 = vxpose.xlu0.b32.cont [2/16] 0.0, 128
    %2872 = vxpose.xlu0.b32.cont [3/16] 0.0, 128
    %2873 = vxpose.xlu0.b32.cont [4/16] 0.0, 128
    %2874 = vxpose.xlu0.b32.cont [5/16] 0.0, 128
    %2875 = vxpose.xlu0.b32.cont [6/16] 0.0, 128
    %2876 = vxpose.xlu0.b32.cont [7/16] 0.0, 128
    %2877 = vxpose.xlu0.b32.cont [8/16] 0.0, 128
    %2878 = vxpose.xlu0.b32.cont [9/16] 0.0, 128
    %2879 = vxpose.xlu0.b32.cont [10/16] 0.0, 128
    %2880 = vxpose.xlu0.b32.cont [11/16] 0.0, 128
    %2881 = vxpose.xlu0.b32.cont [12/16] 0.0, 128
    %2882 = vxpose.xlu0.b32.cont [13/16] 0.0, 128
    %2883 = vxpose.xlu0.b32.cont [14/16] 0.0, 128
    %2884 = vxpose.xlu0.b32.cont [15/16] 0.0, 128
    %2885 = vxpose.xlu0.b32.end [16/16] 0.0, 128
    %v2886 = vpop.trf.xlu0
    %v2887 = vpop.trf.xlu0
    %v2888 = vpop.trf.xlu0
    %v2889 = vpop.trf.xlu0
    %v2890 = vpop.trf.xlu0
    %v2891 = vpop.trf.xlu0
    %v2892 = vpop.trf.xlu0
    %v2893 = vpop.trf.xlu0
    %v2894 = vpop.trf.xlu0
    %v2895 = vpop.trf.xlu0
    %v2896 = vpop.trf.xlu0
    %v2897 = vpop.trf.xlu0
    %v2898 = vpop.trf.xlu0
    %v2899 = vpop.trf.xlu0
    %v2900 = vpop.trf.xlu0
    %v2901 = vpop.trf.xlu0
    %2910 = vrot.lane.b32.xlu0 %v2854, 8
    %v2911 = vpop.permute.xlu0 %2910
    %2912 = vrot.lane.b32.xlu0 %v2855, 8
    %v2913 = vpop.permute.xlu0 %2912
    %2914 = vrot.lane.b32.xlu0 %v2856, 8
    %v2915 = vpop.permute.xlu0 %2914
    %2916 = vrot.lane.b32.xlu0 %v2857, 8
    %v2917 = vpop.permute.xlu0 %2916
    %2918 = vrot.lane.b32.xlu0 %v2886, 8
    %v2919 = vpop.permute.xlu0 %2918
    %2920 = vrot.lane.b32.xlu0 %v2887, 8
    %v2921 = vpop.permute.xlu0 %2920
    %2922 = vrot.lane.b32.xlu0 %v2888, 8
    %v2923 = vpop.permute.xlu0 %2922
    %2924 = vrot.lane.b32.xlu0 %v2889, 8
    %v2925 = vpop.permute.xlu0 %2924
    %2934 = vrot.lane.b32.xlu0 %v2854, 16
    %v2935 = vpop.permute.xlu0 %2934
    %2936 = vrot.lane.b32.xlu0 %v2855, 16
    %v2937 = vpop.permute.xlu0 %2936
    %2938 = vrot.lane.b32.xlu0 %v2856, 16
    %v2939 = vpop.permute.xlu0 %2938
    %2940 = vrot.lane.b32.xlu0 %v2857, 16
    %v2941 = vpop.permute.xlu0 %2940
    %2942 = vrot.lane.b32.xlu0 %v2886, 16
    %v2943 = vpop.permute.xlu0 %2942
    %2944 = vrot.lane.b32.xlu0 %v2887, 16
    %v2945 = vpop.permute.xlu0 %2944
    %2946 = vrot.lane.b32.xlu0 %v2888, 16
    %v2947 = vpop.permute.xlu0 %2946
    %2948 = vrot.lane.b32.xlu0 %v2889, 16
    %v2949 = vpop.permute.xlu0 %2948
    %2958 = vrot.lane.b32.xlu0 %v2854, 24
    %v2959 = vpop.permute.xlu0 %2958
    %2960 = vrot.lane.b32.xlu0 %v2855, 24
    %v2961 = vpop.permute.xlu0 %2960
    %2962 = vrot.lane.b32.xlu0 %v2856, 24
    %v2963 = vpop.permute.xlu0 %2962
    %2964 = vrot.lane.b32.xlu0 %v2857, 24
    %v2965 = vpop.permute.xlu0 %2964
    %2966 = vrot.lane.b32.xlu0 %v2886, 24
    %v2967 = vpop.permute.xlu0 %2966
    %2968 = vrot.lane.b32.xlu0 %v2887, 24
    %v2969 = vpop.permute.xlu0 %2968
    %2970 = vrot.lane.b32.xlu0 %v2888, 24
    %v2971 = vpop.permute.xlu0 %2970
    %2972 = vrot.lane.b32.xlu0 %v2889, 24
    %v2973 = vpop.permute.xlu0 %2972
    %2982 = vrot.lane.b32.xlu0 %v2854, 32
    %v2983 = vpop.permute.xlu0 %2982
    %2984 = vrot.lane.b32.xlu0 %v2855, 32
    %v2985 = vpop.permute.xlu0 %2984
    %2986 = vrot.lane.b32.xlu0 %v2856, 32
    %v2987 = vpop.permute.xlu0 %2986
    %2988 = vrot.lane.b32.xlu0 %v2857, 32
    %v2989 = vpop.permute.xlu0 %2988
    %2990 = vrot.lane.b32.xlu0 %v2886, 32
    %v2991 = vpop.permute.xlu0 %2990
    %2992 = vrot.lane.b32.xlu0 %v2887, 32
    %v2993 = vpop.permute.xlu0 %2992
    %2994 = vrot.lane.b32.xlu0 %v2888, 32
    %v2995 = vpop.permute.xlu0 %2994
    %2996 = vrot.lane.b32.xlu0 %v2889, 32
    %v2997 = vpop.permute.xlu0 %2996
    %3006 = vrot.lane.b32.xlu0 %v2854, 40
    %v3007 = vpop.permute.xlu0 %3006
    %3008 = vrot.lane.b32.xlu0 %v2855, 40
    %v3009 = vpop.permute.xlu0 %3008
    %3010 = vrot.lane.b32.xlu0 %v2856, 40
    %v3011 = vpop.permute.xlu0 %3010
    %3012 = vrot.lane.b32.xlu0 %v2857, 40
    %v3013 = vpop.permute.xlu0 %3012
    %3014 = vrot.lane.b32.xlu0 %v2886, 40
    %v3015 = vpop.permute.xlu0 %3014
    %3016 = vrot.lane.b32.xlu0 %v2887, 40
    %v3017 = vpop.permute.xlu0 %3016
    %3018 = vrot.lane.b32.xlu0 %v2888, 40
    %v3019 = vpop.permute.xlu0 %3018
    %3020 = vrot.lane.b32.xlu0 %v2889, 40
    %v3021 = vpop.permute.xlu0 %3020
    %3030 = vrot.lane.b32.xlu0 %v2854, 48
    %v3031 = vpop.permute.xlu0 %3030
    %3032 = vrot.lane.b32.xlu0 %v2855, 48
    %v3033 = vpop.permute.xlu0 %3032
    %3034 = vrot.lane.b32.xlu0 %v2856, 48
    %v3035 = vpop.permute.xlu0 %3034
    %3036 = vrot.lane.b32.xlu0 %v2857, 48
    %v3037 = vpop.permute.xlu0 %3036
    %3038 = vrot.lane.b32.xlu0 %v2886, 48
    %v3039 = vpop.permute.xlu0 %3038
    %3040 = vrot.lane.b32.xlu0 %v2887, 48
    %v3041 = vpop.permute.xlu0 %3040
    %3042 = vrot.lane.b32.xlu0 %v2888, 48
    %v3043 = vpop.permute.xlu0 %3042
    %3044 = vrot.lane.b32.xlu0 %v2889, 48
    %v3045 = vpop.permute.xlu0 %3044
    %3054 = vrot.lane.b32.xlu0 %v2854, 56
    %v3055 = vpop.permute.xlu0 %3054
    %3056 = vrot.lane.b32.xlu0 %v2855, 56
    %v3057 = vpop.permute.xlu0 %3056
    %3058 = vrot.lane.b32.xlu0 %v2856, 56
    %v3059 = vpop.permute.xlu0 %3058
    %3060 = vrot.lane.b32.xlu0 %v2857, 56
    %v3061 = vpop.permute.xlu0 %3060
    %3062 = vrot.lane.b32.xlu0 %v2886, 56
    %v3063 = vpop.permute.xlu0 %3062
    %3064 = vrot.lane.b32.xlu0 %v2887, 56
    %v3065 = vpop.permute.xlu0 %3064
    %3066 = vrot.lane.b32.xlu0 %v2888, 56
    %v3067 = vpop.permute.xlu0 %3066
    %3068 = vrot.lane.b32.xlu0 %v2889, 56
    %v3069 = vpop.permute.xlu0 %3068
    %v3078 = vsel %vm584, %v2854, %v2911
    %v3079 = vsel %vm584, %v2855, %v2913
    %v3080 = vsel %vm584, %v2856, %v2915
    %v3081 = vsel %vm584, %v2857, %v2917
    %v3082 = vsel %vm584, %v2886, %v2919
    %v3083 = vsel %vm584, %v2887, %v2921
    %v3084 = vsel %vm584, %v2888, %v2923
    %v3085 = vsel %vm584, %v2889, %v2925
    %v3086 = vsel %vm593, %v3078, %v2935
    %v3087 = vsel %vm593, %v3079, %v2937
    %v3088 = vsel %vm593, %v3080, %v2939
    %v3089 = vsel %vm593, %v3081, %v2941
    %v3090 = vsel %vm593, %v3082, %v2943
    %v3091 = vsel %vm593, %v3083, %v2945
    %v3092 = vsel %vm593, %v3084, %v2947
    %v3093 = vsel %vm593, %v3085, %v2949
    %v3094 = vsel %vm602, %v3086, %v2959
    %v3095 = vsel %vm602, %v3087, %v2961
    %v3096 = vsel %vm602, %v3088, %v2963
    %v3097 = vsel %vm602, %v3089, %v2965
    %v3098 = vsel %vm602, %v3090, %v2967
    %v3099 = vsel %vm602, %v3091, %v2969
    %v3100 = vsel %vm602, %v3092, %v2971
    %v3101 = vsel %vm602, %v3093, %v2973
    %v3102 = vsel %vm238, %v3094, %v2983
    %v3103 = vsel %vm238, %v3095, %v2985
    %v3104 = vsel %vm238, %v3096, %v2987
    %v3105 = vsel %vm238, %v3097, %v2989
    %v3106 = vsel %vm238, %v3098, %v2991
    %v3107 = vsel %vm238, %v3099, %v2993
    %v3108 = vsel %vm238, %v3100, %v2995
    %v3109 = vsel %vm238, %v3101, %v2997
    %v3110 = vsel %vm619, %v3102, %v3007
    %v3111 = vsel %vm619, %v3103, %v3009
    %v3112 = vsel %vm619, %v3104, %v3011
    %v3113 = vsel %vm619, %v3105, %v3013
    %v3114 = vsel %vm619, %v3106, %v3015
    %v3115 = vsel %vm619, %v3107, %v3017
    %v3116 = vsel %vm619, %v3108, %v3019
    %v3117 = vsel %vm619, %v3109, %v3021
    %v3118 = vsel %vm628, %v3110, %v3031
    %v3119 = vsel %vm628, %v3111, %v3033
    %v3120 = vsel %vm628, %v3112, %v3035
    %v3121 = vsel %vm628, %v3113, %v3037
    %v3122 = vsel %vm628, %v3114, %v3039
    %v3123 = vsel %vm628, %v3115, %v3041
    %v3124 = vsel %vm628, %v3116, %v3043
    %v3125 = vsel %vm628, %v3117, %v3045
    %v3126 = vsel %vm637, %v3118, %v3055
    %v3127 = vsel %vm637, %v3119, %v3057
    %v3128 = vsel %vm637, %v3120, %v3059
    %v3129 = vsel %vm637, %v3121, %v3061
    %v3130 = vsel %vm637, %v3122, %v3063
    %v3131 = vsel %vm637, %v3123, %v3065
    %v3132 = vsel %vm637, %v3124, %v3067
    %v3133 = vsel %vm637, %v3125, %v3069
    %v3134 = vmul.f32 %v3126, %v200
    %v3135 = vmul.f32 %v3127, %v201
    %v3136 = vmul.f32 %v3128, %v202
    %v3137 = vmul.f32 %v3129, %v203
    %v3138 = vmul.f32 %v3130, %v200
    %v3139 = vmul.f32 %v3131, %v201
    %v3140 = vmul.f32 %v3132, %v202
    %v3141 = vmul.f32 %v3133, %v203
    %v3142 = vmul.f32 %v2822, %v663
    %v3143 = vmul.f32 %v2822, %v665
    %v3144 = vmul.f32 %v2822, %v667
    %v3145 = vmul.f32 %v2822, %v669
    %v3146 = vmul.f32 %v2822, %v671
    %v3147 = vmul.f32 %v2822, %v673
    %v3148 = vmul.f32 %v2822, %v675
    %v3149 = vmul.f32 %v2822, %v677
    %v3150 = vmul.f32 %v2827, %v663
    %v3151 = vmul.f32 %v2827, %v665
    %v3152 = vmul.f32 %v2827, %v667
    %v3153 = vmul.f32 %v2827, %v669
    %v3154 = vmul.f32 %v2827, %v671
    %v3155 = vmul.f32 %v2827, %v673
    %v3156 = vmul.f32 %v2827, %v675
    %v3157 = vmul.f32 %v2827, %v677
    %v3159 = vsel %vm238, %v2812, 0
    %3161 = vmatprep.subr.mxu0 0.0
    %3162 = vmatpush1.msra.mxu0 %v3134
    %3163 = vmatprep.subr.mxu0 0.0
    %3164 = vmatpush1.msra.mxu0 %v3135
    %3165 = vmatprep.subr.mxu0 0.0
    %3166 = vmatpush1.msra.mxu0 %v3136
    %3167 = vmatprep.subr.mxu0 0.0
    %3168 = vmatpush1.msra.mxu0 %v3137
    %3169 = vmatprep.subr.mxu0 0.0
    %3170 = vmatpush1.msra.mxu0 0.0
    %3171 = vmatprep.subr.mxu0 0.0
    %3172 = vmatpush1.msra.mxu0 0.0
    %3173 = vmatprep.subr.mxu0 0.0
    %3174 = vmatpush1.msra.mxu0 0.0
    %3175 = vmatprep.subr.mxu0 0.0
    %3176 = vmatpush1.msra.mxu0 0.0
    %3177 = vmatprep.subr.mxu0 0.0
    %3178 = vmatpush1.msra.mxu0 0.0
    %3179 = vmatprep.subr.mxu0 0.0
    %3180 = vmatpush1.msra.mxu0 0.0
    %3181 = vmatprep.subr.mxu0 0.0
    %3182 = vmatpush1.msra.mxu0 0.0
    %3183 = vmatprep.subr.mxu0 0.0
    %3184 = vmatpush1.msra.mxu0 0.0
    %3185 = vmatprep.subr.mxu0 0.0
    %3186 = vmatpush1.msra.mxu0 0.0
    %3187 = vmatprep.subr.mxu0 0.0
    %3188 = vmatpush1.msra.mxu0 0.0
    %3189 = vmatprep.subr.mxu0 0.0
    %3190 = vmatpush1.msra.mxu0 0.0
    %3191 = vmatprep.subr.mxu0 0.0
    %3192 = vmatpush1.msra.mxu0 0.0
    %3193 = vmatprep.subr.mxu0 0.0
    %3194 = vmatpush1.msra.mxu0 0.0
    %3195 = vmatprep.subr.mxu0 0.0
    %3196 = vmatpush1.msra.mxu0 0.0
    %3197 = vmatprep.subr.mxu0 0.0
    %3198 = vmatpush1.msra.mxu0 0.0
    %3199 = vmatprep.subr.mxu0 0.0
    %3200 = vmatpush1.msra.mxu0 0.0
    %3201 = vmatprep.subr.mxu0 0.0
    %3202 = vmatpush1.msra.mxu0 0.0
    %3203 = vmatprep.subr.mxu0 0.0
    %3204 = vmatpush1.msra.mxu0 0.0
    %3205 = vmatprep.subr.mxu0 0.0
    %3206 = vmatpush1.msra.mxu0 0.0
    %3207 = vmatprep.subr.mxu0 0.0
    %3208 = vmatpush1.msra.mxu0 0.0
    %3209 = vmatprep.subr.mxu0 0.0
    %3210 = vmatpush1.msra.mxu0 0.0
    %3211 = vmatprep.subr.mxu0 0.0
    %3212 = vmatpush1.msra.mxu0 0.0
    %3213 = vmatprep.subr.mxu0 0.0
    %3214 = vmatpush1.msra.mxu0 0.0
    %3215 = vmatprep.subr.mxu0 0.0
    %3216 = vmatpush1.msra.mxu0 0.0
    %3217 = vmatprep.subr.mxu0 0.0
    %3218 = vmatpush1.msra.mxu0 0.0
    %3219 = vmatprep.subr.mxu0 0.0
    %3220 = vmatpush1.msra.mxu0 0.0
    %3221 = vmatprep.subr.mxu0 0.0
    %3222 = vmatpush1.msra.mxu0 0.0
    %3223 = vmatprep.subr.mxu0 0.0
    %3224 = vmatpush1.msra.mxu0 0.0
    %3225 = vmatprep.mubr.f32.mxu0 0.0
    %3226 = vmatmul.mubr.f32.gmra.mrb[0].mxu0 %v3159
    %v3227 = vpop.f32.mrb[0].mxu0
    %v3228 = vadd.f32 0.0, %v3227
    %v3229 = vpop.f32.mrb[0].mxu0
    %3230 = vdwg.mxu0
    %v3232 = vsel %vm238, %v2817, 0
    %3234 = vmatprep.subr.mxu0 0.0
    %3235 = vmatpush1.msra.mxu0 %v3138
    %3236 = vmatprep.subr.mxu0 0.0
    %3237 = vmatpush1.msra.mxu0 %v3139
    %3238 = vmatprep.subr.mxu0 0.0
    %3239 = vmatpush1.msra.mxu0 %v3140
    %3240 = vmatprep.subr.mxu0 0.0
    %3241 = vmatpush1.msra.mxu0 %v3141
    %3242 = vmatprep.subr.mxu0 0.0
    %3243 = vmatpush1.msra.mxu0 0.0
    %3244 = vmatprep.subr.mxu0 0.0
    %3245 = vmatpush1.msra.mxu0 0.0
    %3246 = vmatprep.subr.mxu0 0.0
    %3247 = vmatpush1.msra.mxu0 0.0
    %3248 = vmatprep.subr.mxu0 0.0
    %3249 = vmatpush1.msra.mxu0 0.0
    %3250 = vmatprep.subr.mxu0 0.0
    %3251 = vmatpush1.msra.mxu0 0.0
    %3252 = vmatprep.subr.mxu0 0.0
    %3253 = vmatpush1.msra.mxu0 0.0
    %3254 = vmatprep.subr.mxu0 0.0
    %3255 = vmatpush1.msra.mxu0 0.0
    %3256 = vmatprep.subr.mxu0 0.0
    %3257 = vmatpush1.msra.mxu0 0.0
    %3258 = vmatprep.subr.mxu0 0.0
    %3259 = vmatpush1.msra.mxu0 0.0
    %3260 = vmatprep.subr.mxu0 0.0
    %3261 = vmatpush1.msra.mxu0 0.0
    %3262 = vmatprep.subr.mxu0 0.0
    %3263 = vmatpush1.msra.mxu0 0.0
    %3264 = vmatprep.subr.mxu0 0.0
    %3265 = vmatpush1.msra.mxu0 0.0
    %3266 = vmatprep.subr.mxu0 0.0
    %3267 = vmatpush1.msra.mxu0 0.0
    %3268 = vmatprep.subr.mxu0 0.0
    %3269 = vmatpush1.msra.mxu0 0.0
    %3270 = vmatprep.subr.mxu0 0.0
    %3271 = vmatpush1.msra.mxu0 0.0
    %3272 = vmatprep.subr.mxu0 0.0
    %3273 = vmatpush1.msra.mxu0 0.0
    %3274 = vmatprep.subr.mxu0 0.0
    %3275 = vmatpush1.msra.mxu0 0.0
    %3276 = vmatprep.subr.mxu0 0.0
    %3277 = vmatpush1.msra.mxu0 0.0
    %3278 = vmatprep.subr.mxu0 0.0
    %3279 = vmatpush1.msra.mxu0 0.0
    %3280 = vmatprep.subr.mxu0 0.0
    %3281 = vmatpush1.msra.mxu0 0.0
    %3282 = vmatprep.subr.mxu0 0.0
    %3283 = vmatpush1.msra.mxu0 0.0
    %3284 = vmatprep.subr.mxu0 0.0
    %3285 = vmatpush1.msra.mxu0 0.0
    %3286 = vmatprep.subr.mxu0 0.0
    %3287 = vmatpush1.msra.mxu0 0.0
    %3288 = vmatprep.subr.mxu0 0.0
    %3289 = vmatpush1.msra.mxu0 0.0
    %3290 = vmatprep.subr.mxu0 0.0
    %3291 = vmatpush1.msra.mxu0 0.0
    %3292 = vmatprep.subr.mxu0 0.0
    %3293 = vmatpush1.msra.mxu0 0.0
    %3294 = vmatprep.subr.mxu0 0.0
    %3295 = vmatpush1.msra.mxu0 0.0
    %3296 = vmatprep.subr.mxu0 0.0
    %3297 = vmatpush1.msra.mxu0 0.0
    %3298 = vmatprep.mubr.f32.mxu0 0.0
    %3299 = vmatmul.mubr.f32.gmra.mrb[0].mxu0 %v3232
    %v3300 = vpop.f32.mrb[0].mxu0
    %v3301 = vadd.f32 0.0, %v3300
    %v3302 = vpop.f32.mrb[0].mxu0
    %3303 = vdwg.mxu0
    %v3304 = vsel %vm848, %v3228, -inf
    %3305 = vmax.xlane.f32.xlu0 %v3304
    %v3306 = vpop.xlane.xlu0 %3305
    %v3307 = vsel %vm848, %v3301, -inf
    %3308 = vmax.xlane.f32.xlu0 %v3307
    %v3309 = vpop.xlane.xlu0 %3308
    %v3310 = vsub.f32 %v3228, %v3306
    %v3311 = vsub.f32 %v3301, %v3309
    %v3312 = vmul.f32 %v3310, 1.442695
    %v3313 = vpow.pop %v3312
    %v3314 = vmul.f32 %v3311, 1.442695
    %v3315 = vpow.pop %v3314
    %v3317 = vsel %vm848, %v3313, 0
    %v3320 = vsel %vm848, %v3315, 0
    %3322 = vmatprep.subr.mxu0 0.0
    %3323 = vmatpush1.msra.mxu0 %v192
    %3324 = vmatprep.subr.mxu0 0.0
    %3325 = vmatpush1.msra.mxu0 %v193
    %3326 = vmatprep.subr.mxu0 0.0
    %3327 = vmatpush1.msra.mxu0 %v194
    %3328 = vmatprep.subr.mxu0 0.0
    %3329 = vmatpush1.msra.mxu0 %v195
    %3330 = vmatprep.subr.mxu0 0.0
    %3331 = vmatpush1.msra.mxu0 %v196
    %3332 = vmatprep.subr.mxu0 0.0
    %3333 = vmatpush1.msra.mxu0 %v197
    %3334 = vmatprep.subr.mxu0 0.0
    %3335 = vmatpush1.msra.mxu0 %v198
    %3336 = vmatprep.subr.mxu0 0.0
    %3337 = vmatpush1.msra.mxu0 %v199
    %3338 = vmatprep.subr.mxu0 0.0
    %3339 = vmatpush1.msra.mxu0 0.0
    %3340 = vmatprep.subr.mxu0 0.0
    %3341 = vmatpush1.msra.mxu0 0.0
    %3342 = vmatprep.subr.mxu0 0.0
    %3343 = vmatpush1.msra.mxu0 0.0
    %3344 = vmatprep.subr.mxu0 0.0
    %3345 = vmatpush1.msra.mxu0 0.0
    %3346 = vmatprep.subr.mxu0 0.0
    %3347 = vmatpush1.msra.mxu0 0.0
    %3348 = vmatprep.subr.mxu0 0.0
    %3349 = vmatpush1.msra.mxu0 0.0
    %3350 = vmatprep.subr.mxu0 0.0
    %3351 = vmatpush1.msra.mxu0 0.0
    %3352 = vmatprep.subr.mxu0 0.0
    %3353 = vmatpush1.msra.mxu0 0.0
    %3354 = vmatprep.subr.mxu0 0.0
    %3355 = vmatpush1.msra.mxu0 0.0
    %3356 = vmatprep.subr.mxu0 0.0
    %3357 = vmatpush1.msra.mxu0 0.0
    %3358 = vmatprep.subr.mxu0 0.0
    %3359 = vmatpush1.msra.mxu0 0.0
    %3360 = vmatprep.subr.mxu0 0.0
    %3361 = vmatpush1.msra.mxu0 0.0
    %3362 = vmatprep.subr.mxu0 0.0
    %3363 = vmatpush1.msra.mxu0 0.0
    %3364 = vmatprep.subr.mxu0 0.0
    %3365 = vmatpush1.msra.mxu0 0.0
    %3366 = vmatprep.subr.mxu0 0.0
    %3367 = vmatpush1.msra.mxu0 0.0
    %3368 = vmatprep.subr.mxu0 0.0
    %3369 = vmatpush1.msra.mxu0 0.0
    %3370 = vmatprep.subr.mxu0 0.0
    %3371 = vmatpush1.msra.mxu0 0.0
    %3372 = vmatprep.subr.mxu0 0.0
    %3373 = vmatpush1.msra.mxu0 0.0
    %3374 = vmatprep.subr.mxu0 0.0
    %3375 = vmatpush1.msra.mxu0 0.0
    %3376 = vmatprep.subr.mxu0 0.0
    %3377 = vmatpush1.msra.mxu0 0.0
    %3378 = vmatprep.subr.mxu0 0.0
    %3379 = vmatpush1.msra.mxu0 0.0
    %3380 = vmatprep.subr.mxu0 0.0
    %3381 = vmatpush1.msra.mxu0 0.0
    %3382 = vmatprep.subr.mxu0 0.0
    %3383 = vmatpush1.msra.mxu0 0.0
    %3384 = vmatprep.subr.mxu0 0.0
    %3385 = vmatpush1.msra.mxu0 0.0
    %3386 = vmatprep.mubr.f32.mxu0 0.0
    %3387 = vmatmul.mubr.f32.gmra.mrb[0].mxu0 %v3317
    %v3388 = vpop.f32.mrb[0].mxu0
    %v3389 = vadd.f32 0.0, %v3388
    %v3390 = vpop.f32.mrb[0].mxu0
    %3391 = vmatprep.mubr.f32.mxu0 0.0
    %3392 = vmatmul.mubr.f32.gmra.mrb[0].mxu0 %v3320
    %v3393 = vpop.f32.mrb[0].mxu0
    %v3394 = vadd.f32 0.0, %v3393
    %v3395 = vpop.f32.mrb[0].mxu0
    %3396 = vdwg.mxu0
    %3405 = vrot.lane.b32.xlu0 %v3142, 64
    %v3406 = vpop.permute.xlu0 %3405
    %3407 = vrot.lane.b32.xlu0 %v3143, 64
    %v3408 = vpop.permute.xlu0 %3407
    %3409 = vrot.lane.b32.xlu0 %v3144, 64
    %v3410 = vpop.permute.xlu0 %3409
    %3411 = vrot.lane.b32.xlu0 %v3145, 64
    %v3412 = vpop.permute.xlu0 %3411
    %3413 = vrot.lane.b32.xlu0 %v3146, 64
    %v3414 = vpop.permute.xlu0 %3413
    %3415 = vrot.lane.b32.xlu0 %v3147, 64
    %v3416 = vpop.permute.xlu0 %3415
    %3417 = vrot.lane.b32.xlu0 %v3148, 64
    %v3418 = vpop.permute.xlu0 %3417
    %3419 = vrot.lane.b32.xlu0 %v3149, 64
    %v3420 = vpop.permute.xlu0 %3419
    %3429 = vmatprep.subr.mxu0 0.0
    %3430 = vmatpush1.msra.mxu0 %v3406
    %3431 = vmatprep.subr.mxu0 0.0
    %3432 = vmatpush1.msra.mxu0 %v3408
    %3433 = vmatprep.subr.mxu0 0.0
    %3434 = vmatpush1.msra.mxu0 %v3410
    %3435 = vmatprep.subr.mxu0 0.0
    %3436 = vmatpush1.msra.mxu0 %v3412
    %3437 = vmatprep.subr.mxu0 0.0
    %3438 = vmatpush1.msra.mxu0 %v3414
    %3439 = vmatprep.subr.mxu0 0.0
    %3440 = vmatpush1.msra.mxu0 %v3416
    %3441 = vmatprep.subr.mxu0 0.0
    %3442 = vmatpush1.msra.mxu0 %v3418
    %3443 = vmatprep.subr.mxu0 0.0
    %3444 = vmatpush1.msra.mxu0 %v3420
    %3445 = vmatprep.subr.mxu0 0.0
    %3446 = vmatpush1.msra.mxu0 0.0
    %3447 = vmatprep.subr.mxu0 0.0
    %3448 = vmatpush1.msra.mxu0 0.0
    %3449 = vmatprep.subr.mxu0 0.0
    %3450 = vmatpush1.msra.mxu0 0.0
    %3451 = vmatprep.subr.mxu0 0.0
    %3452 = vmatpush1.msra.mxu0 0.0
    %3453 = vmatprep.subr.mxu0 0.0
    %3454 = vmatpush1.msra.mxu0 0.0
    %3455 = vmatprep.subr.mxu0 0.0
    %3456 = vmatpush1.msra.mxu0 0.0
    %3457 = vmatprep.subr.mxu0 0.0
    %3458 = vmatpush1.msra.mxu0 0.0
    %3459 = vmatprep.subr.mxu0 0.0
    %3460 = vmatpush1.msra.mxu0 0.0
    %3461 = vmatprep.subr.mxu0 0.0
    %3462 = vmatpush1.msra.mxu0 0.0
    %3463 = vmatprep.subr.mxu0 0.0
    %3464 = vmatpush1.msra.mxu0 0.0
    %3465 = vmatprep.subr.mxu0 0.0
    %3466 = vmatpush1.msra.mxu0 0.0
    %3467 = vmatprep.subr.mxu0 0.0
    %3468 = vmatpush1.msra.mxu0 0.0
    %3469 = vmatprep.subr.mxu0 0.0
    %3470 = vmatpush1.msra.mxu0 0.0
    %3471 = vmatprep.subr.mxu0 0.0
    %3472 = vmatpush1.msra.mxu0 0.0
    %3473 = vmatprep.subr.mxu0 0.0
    %3474 = vmatpush1.msra.mxu0 0.0
    %3475 = vmatprep.subr.mxu0 0.0
    %3476 = vmatpush1.msra.mxu0 0.0
    %3477 = vmatprep.subr.mxu0 0.0
    %3478 = vmatpush1.msra.mxu0 0.0
    %3479 = vmatprep.subr.mxu0 0.0
    %3480 = vmatpush1.msra.mxu0 0.0
    %3481 = vmatprep.subr.mxu0 0.0
    %3482 = vmatpush1.msra.mxu0 0.0
    %3483 = vmatprep.subr.mxu0 0.0
    %3484 = vmatpush1.msra.mxu0 0.0
    %3485 = vmatprep.subr.mxu0 0.0
    %3486 = vmatpush1.msra.mxu0 0.0
    %3487 = vmatprep.subr.mxu0 0.0
    %3488 = vmatpush1.msra.mxu0 0.0
    %3489 = vmatprep.subr.mxu0 0.0
    %3490 = vmatpush1.msra.mxu0 0.0
    %3491 = vmatprep.subr.mxu0 0.0
    %3492 = vmatpush1.msra.mxu0 0.0
    %3493 = vmatprep.mubr.f32.mxu0 0.0
    %3494 = vmatmul.mubr.f32.gmra.mrb[0].mxu0 %v3317
    %v3495 = vpop.f32.mrb[0].mxu0
    %v3496 = vadd.f32 0.0, %v3495
    %v3497 = vpop.f32.mrb[0].mxu0
    %3498 = vdwg.mxu0
    %3507 = vrot.lane.b32.xlu0 %v3150, 64
    %v3508 = vpop.permute.xlu0 %3507
    %3509 = vrot.lane.b32.xlu0 %v3151, 64
    %v3510 = vpop.permute.xlu0 %3509
    %3511 = vrot.lane.b32.xlu0 %v3152, 64
    %v3512 = vpop.permute.xlu0 %3511
    %3513 = vrot.lane.b32.xlu0 %v3153, 64
    %v3514 = vpop.permute.xlu0 %3513
    %3515 = vrot.lane.b32.xlu0 %v3154, 64
    %v3516 = vpop.permute.xlu0 %3515
    %3517 = vrot.lane.b32.xlu0 %v3155, 64
    %v3518 = vpop.permute.xlu0 %3517
    %3519 = vrot.lane.b32.xlu0 %v3156, 64
    %v3520 = vpop.permute.xlu0 %3519
    %3521 = vrot.lane.b32.xlu0 %v3157, 64
    %v3522 = vpop.permute.xlu0 %3521
    %3531 = vmatprep.subr.mxu0 0.0
    %3532 = vmatpush1.msra.mxu0 %v3508
    %3533 = vmatprep.subr.mxu0 0.0
    %3534 = vmatpush1.msra.mxu0 %v3510
    %3535 = vmatprep.subr.mxu0 0.0
    %3536 = vmatpush1.msra.mxu0 %v3512
    %3537 = vmatprep.subr.mxu0 0.0
    %3538 = vmatpush1.msra.mxu0 %v3514
    %3539 = vmatprep.subr.mxu0 0.0
    %3540 = vmatpush1.msra.mxu0 %v3516
    %3541 = vmatprep.subr.mxu0 0.0
    %3542 = vmatpush1.msra.mxu0 %v3518
    %3543 = vmatprep.subr.mxu0 0.0
    %3544 = vmatpush1.msra.mxu0 %v3520
    %3545 = vmatprep.subr.mxu0 0.0
    %3546 = vmatpush1.msra.mxu0 %v3522
    %3547 = vmatprep.subr.mxu0 0.0
    %3548 = vmatpush1.msra.mxu0 0.0
    %3549 = vmatprep.subr.mxu0 0.0
    %3550 = vmatpush1.msra.mxu0 0.0
    %3551 = vmatprep.subr.mxu0 0.0
    %3552 = vmatpush1.msra.mxu0 0.0
    %3553 = vmatprep.subr.mxu0 0.0
    %3554 = vmatpush1.msra.mxu0 0.0
    %3555 = vmatprep.subr.mxu0 0.0
    %3556 = vmatpush1.msra.mxu0 0.0
    %3557 = vmatprep.subr.mxu0 0.0
    %3558 = vmatpush1.msra.mxu0 0.0
    %3559 = vmatprep.subr.mxu0 0.0
    %3560 = vmatpush1.msra.mxu0 0.0
    %3561 = vmatprep.subr.mxu0 0.0
    %3562 = vmatpush1.msra.mxu0 0.0
    %3563 = vmatprep.subr.mxu0 0.0
    %3564 = vmatpush1.msra.mxu0 0.0
    %3565 = vmatprep.subr.mxu0 0.0
    %3566 = vmatpush1.msra.mxu0 0.0
    %3567 = vmatprep.subr.mxu0 0.0
    %3568 = vmatpush1.msra.mxu0 0.0
    %3569 = vmatprep.subr.mxu0 0.0
    %3570 = vmatpush1.msra.mxu0 0.0
    %3571 = vmatprep.subr.mxu0 0.0
    %3572 = vmatpush1.msra.mxu0 0.0
    %3573 = vmatprep.subr.mxu0 0.0
    %3574 = vmatpush1.msra.mxu0 0.0
    %3575 = vmatprep.subr.mxu0 0.0
    %3576 = vmatpush1.msra.mxu0 0.0
    %3577 = vmatprep.subr.mxu0 0.0
    %3578 = vmatpush1.msra.mxu0 0.0
    %3579 = vmatprep.subr.mxu0 0.0
    %3580 = vmatpush1.msra.mxu0 0.0
    %3581 = vmatprep.subr.mxu0 0.0
    %3582 = vmatpush1.msra.mxu0 0.0
    %3583 = vmatprep.subr.mxu0 0.0
    %3584 = vmatpush1.msra.mxu0 0.0
    %3585 = vmatprep.subr.mxu0 0.0
    %3586 = vmatpush1.msra.mxu0 0.0
    %3587 = vmatprep.subr.mxu0 0.0
    %3588 = vmatpush1.msra.mxu0 0.0
    %3589 = vmatprep.subr.mxu0 0.0
    %3590 = vmatpush1.msra.mxu0 0.0
    %3591 = vmatprep.subr.mxu0 0.0
    %3592 = vmatpush1.msra.mxu0 0.0
    %3593 = vmatprep.subr.mxu0 0.0
    %3594 = vmatpush1.msra.mxu0 0.0
    %3595 = vmatprep.mubr.f32.mxu0 0.0
    %3596 = vmatmul.mubr.f32.gmra.mrb[0].mxu0 %v3320
    %v3597 = vpop.f32.mrb[0].mxu0
    %v3598 = vadd.f32 0.0, %v3597
    %v3599 = vpop.f32.mrb[0].mxu0
    %3600 = vdwg.mxu0
    %v3601 = vrcp.pop %v3389
    %v3602 = vrcp.pop %v3394
    %v3603 = vmul.f32 %v3496, %v3601
    %v3604 = vmul.f32 %v3598, %v3602
    %v3606 = vlaneseq
    %v3607 = vshrl.u32 %v3606, 7
    %v3608 = vsub.s32 0, %v3607
    %v3609 = vrot.slane %v2706, %v3608
    %v3612 = vsel %vm238, %v3603, 0
    %v3615 = vsel %vm238, %v3604, 0
    %3617 = vmatprep.subr.mxu0 0.0
    %3618 = vmatpush1.msra.mxu0 %v2701
    %3619 = vmatprep.subr.mxu0 0.0
    %3620 = vmatpush1.msra.mxu0 %v2702
    %3621 = vmatprep.subr.mxu0 0.0
    %3622 = vmatpush1.msra.mxu0 %v2703
    %3623 = vmatprep.subr.mxu0 0.0
    %3624 = vmatpush1.msra.mxu0 %v2704
    %3625 = vmatprep.subr.mxu0 0.0
    %3626 = vmatpush1.msra.mxu0 0.0
    %3627 = vmatprep.subr.mxu0 0.0
    %3628 = vmatpush1.msra.mxu0 0.0
    %3629 = vmatprep.subr.mxu0 0.0
    %3630 = vmatpush1.msra.mxu0 0.0
    %3631 = vmatprep.subr.mxu0 0.0
    %3632 = vmatpush1.msra.mxu0 0.0
    %3633 = vmatprep.subr.mxu0 0.0
    %3634 = vmatpush1.msra.mxu0 0.0
    %3635 = vmatprep.subr.mxu0 0.0
    %3636 = vmatpush1.msra.mxu0 0.0
    %3637 = vmatprep.subr.mxu0 0.0
    %3638 = vmatpush1.msra.mxu0 0.0
    %3639 = vmatprep.subr.mxu0 0.0
    %3640 = vmatpush1.msra.mxu0 0.0
    %3641 = vmatprep.subr.mxu0 0.0
    %3642 = vmatpush1.msra.mxu0 0.0
    %3643 = vmatprep.subr.mxu0 0.0
    %3644 = vmatpush1.msra.mxu0 0.0
    %3645 = vmatprep.subr.mxu0 0.0
    %3646 = vmatpush1.msra.mxu0 0.0
    %3647 = vmatprep.subr.mxu0 0.0
    %3648 = vmatpush1.msra.mxu0 0.0
    %3649 = vmatprep.subr.mxu0 0.0
    %3650 = vmatpush1.msra.mxu0 0.0
    %3651 = vmatprep.subr.mxu0 0.0
    %3652 = vmatpush1.msra.mxu0 0.0
    %3653 = vmatprep.subr.mxu0 0.0
    %3654 = vmatpush1.msra.mxu0 0.0
    %3655 = vmatprep.subr.mxu0 0.0
    %3656 = vmatpush1.msra.mxu0 0.0
    %3657 = vmatprep.subr.mxu0 0.0
    %3658 = vmatpush1.msra.mxu0 0.0
    %3659 = vmatprep.subr.mxu0 0.0
    %3660 = vmatpush1.msra.mxu0 0.0
    %3661 = vmatprep.subr.mxu0 0.0
    %3662 = vmatpush1.msra.mxu0 0.0
    %3663 = vmatprep.subr.mxu0 0.0
    %3664 = vmatpush1.msra.mxu0 0.0
    %3665 = vmatprep.subr.mxu0 0.0
    %3666 = vmatpush1.msra.mxu0 0.0
    %3667 = vmatprep.subr.mxu0 0.0
    %3668 = vmatpush1.msra.mxu0 0.0
    %3669 = vmatprep.subr.mxu0 0.0
    %3670 = vmatpush1.msra.mxu0 0.0
    %3671 = vmatprep.subr.mxu0 0.0
    %3672 = vmatpush1.msra.mxu0 0.0
    %3673 = vmatprep.subr.mxu0 0.0
    %3674 = vmatpush1.msra.mxu0 0.0
    %3675 = vmatprep.subr.mxu0 0.0
    %3676 = vmatpush1.msra.mxu0 0.0
    %3677 = vmatprep.subr.mxu0 0.0
    %3678 = vmatpush1.msra.mxu0 0.0
    %3679 = vmatprep.subr.mxu0 0.0
    %3680 = vmatpush1.msra.mxu0 0.0
    %3681 = vmatprep.mubr.f32.mxu0 0.0
    %3682 = vmatmul.mubr.f32.gmra.mrb[0].mxu0 %v3612
    %v3683 = vpop.f32.mrb[0].mxu0
    %v3684 = vadd.f32 %v3609, %v3683
    %v3685 = vpop.f32.mrb[0].mxu0
    %3686 = vmatprep.mubr.f32.mxu0 0.0
    %3687 = vmatmul.mubr.f32.gmra.mrb[0].mxu0 %v3615
    %v3688 = vpop.f32.mrb[0].mxu0
    %v3689 = vadd.f32 %v3609, %v3688
    %v3690 = vpop.f32.mrb[0].mxu0
    %3691 = vdwg.mxu0
    %v3692 = vadd.f32 %v2691, %v3684
    %v3693 = vadd.f32 %v2692, %v3689
    %v3694 = vsel %vm238, %v3692, 0.0
    %3695 = vadd.xlane.f32.xlu0 %v3694
    %v3696 = vpop.xlane.xlu0 %3695
    %v3697 = vsel %vm238, %v3693, 0.0
    %3698 = vadd.xlane.f32.xlu0 %v3697
    %v3699 = vpop.xlane.xlu0 %3698
    %v3700 = vmul.f32 %v3696, %v1245
    %v3701 = vmul.f32 %v3699, %v1245
    %v3702 = vmul.f32 %v3692, %v3692
    %v3703 = vmul.f32 %v3693, %v3693
    %v3704 = vsel %vm238, %v3702, 0.0
    %3705 = vadd.xlane.f32.xlu0 %v3704
    %v3706 = vpop.xlane.xlu0 %3705
    %v3707 = vsel %vm238, %v3703, 0.0
    %3708 = vadd.xlane.f32.xlu0 %v3707
    %v3709 = vpop.xlane.xlu0 %3708
    %v3710 = vmul.f32 %v3706, %v1245
    %v3711 = vmul.f32 %v3709, %v1245
    %v3712 = vmul.f32 %v3700, %v3700
    %v3713 = vmul.f32 %v3701, %v3701
    %v3714 = vsub.f32 %v3710, %v3712
    %v3715 = vsub.f32 %v3711, %v3713
    %v3716 = vsub.f32 %v3692, %v3700
    %v3717 = vsub.f32 %v3693, %v3701
    %v3718 = vadd.f32 %v3714, 1e-05
    %v3719 = vadd.f32 %v3715, 1e-05
    %v3720 = vrsqrt.pop %v3718
    %v3721 = vrsqrt.pop %v3719
    %v3722 = vmul.f32 %v3716, %v3720
    %v3723 = vmul.f32 %v3717, %v3721
    %v3725 = vlaneseq
    %v3726 = vshrl.u32 %v3725, 7
    %v3727 = vsub.s32 0, %v3726
    %v3728 = vrot.slane %v2708, %v3727
    %v3730 = vmul.f32 %v3722, %v3728
    %v3731 = vmul.f32 %v3723, %v3728
    %v3733 = vlaneseq
    %v3734 = vshrl.u32 %v3733, 7
    %v3735 = vsub.s32 0, %v3734
    %v3736 = vrot.slane %v2710, %v3735
    %v3738 = vadd.f32 %v3730, %v3736
    %v3739 = vadd.f32 %v3731, %v3736
    %v3741 = vlaneseq
    %v3742 = vshrl.u32 %v3741, 7
    %v3743 = vsub.s32 0, %v3742
    %v3744 = vrot.slane %v2717, %v3743
    %v3747 = vsel %vm238, %v3738, 0
    %v3750 = vsel %vm238, %v3739, 0
    %3752 = vmatprep.subr.mxu0 0.0
    %3753 = vmatpush1.msra.mxu0 %v2712
    %3754 = vmatprep.subr.mxu0 0.0
    %3755 = vmatpush1.msra.mxu0 %v2713
    %3756 = vmatprep.subr.mxu0 0.0
    %3757 = vmatpush1.msra.mxu0 %v2714
    %3758 = vmatprep.subr.mxu0 0.0
    %3759 = vmatpush1.msra.mxu0 %v2715
    %3760 = vmatprep.subr.mxu0 0.0
    %3761 = vmatpush1.msra.mxu0 0.0
    %3762 = vmatprep.subr.mxu0 0.0
    %3763 = vmatpush1.msra.mxu0 0.0
    %3764 = vmatprep.subr.mxu0 0.0
    %3765 = vmatpush1.msra.mxu0 0.0
    %3766 = vmatprep.subr.mxu0 0.0
    %3767 = vmatpush1.msra.mxu0 0.0
    %3768 = vmatprep.subr.mxu0 0.0
    %3769 = vmatpush1.msra.mxu0 0.0
    %3770 = vmatprep.subr.mxu0 0.0
    %3771 = vmatpush1.msra.mxu0 0.0
    %3772 = vmatprep.subr.mxu0 0.0
    %3773 = vmatpush1.msra.mxu0 0.0
    %3774 = vmatprep.subr.mxu0 0.0
    %3775 = vmatpush1.msra.mxu0 0.0
    %3776 = vmatprep.subr.mxu0 0.0
    %3777 = vmatpush1.msra.mxu0 0.0
    %3778 = vmatprep.subr.mxu0 0.0
    %3779 = vmatpush1.msra.mxu0 0.0
    %3780 = vmatprep.subr.mxu0 0.0
    %3781 = vmatpush1.msra.mxu0 0.0
    %3782 = vmatprep.subr.mxu0 0.0
    %3783 = vmatpush1.msra.mxu0 0.0
    %3784 = vmatprep.subr.mxu0 0.0
    %3785 = vmatpush1.msra.mxu0 0.0
    %3786 = vmatprep.subr.mxu0 0.0
    %3787 = vmatpush1.msra.mxu0 0.0
    %3788 = vmatprep.subr.mxu0 0.0
    %3789 = vmatpush1.msra.mxu0 0.0
    %3790 = vmatprep.subr.mxu0 0.0
    %3791 = vmatpush1.msra.mxu0 0.0
    %3792 = vmatprep.subr.mxu0 0.0
    %3793 = vmatpush1.msra.mxu0 0.0
    %3794 = vmatprep.subr.mxu0 0.0
    %3795 = vmatpush1.msra.mxu0 0.0
    %3796 = vmatprep.subr.mxu0 0.0
    %3797 = vmatpush1.msra.mxu0 0.0
    %3798 = vmatprep.subr.mxu0 0.0
    %3799 = vmatpush1.msra.mxu0 0.0
    %3800 = vmatprep.subr.mxu0 0.0
    %3801 = vmatpush1.msra.mxu0 0.0
    %3802 = vmatprep.subr.mxu0 0.0
    %3803 = vmatpush1.msra.mxu0 0.0
    %3804 = vmatprep.subr.mxu0 0.0
    %3805 = vmatpush1.msra.mxu0 0.0
    %3806 = vmatprep.subr.mxu0 0.0
    %3807 = vmatpush1.msra.mxu0 0.0
    %3808 = vmatprep.subr.mxu0 0.0
    %3809 = vmatpush1.msra.mxu0 0.0
    %3810 = vmatprep.subr.mxu0 0.0
    %3811 = vmatpush1.msra.mxu0 0.0
    %3812 = vmatprep.subr.mxu0 0.0
    %3813 = vmatpush1.msra.mxu0 0.0
    %3814 = vmatprep.subr.mxu0 0.0
    %3815 = vmatpush1.msra.mxu0 0.0
    %3816 = vmatprep.mubr.f32.mxu0 0.0
    %3817 = vmatmul.mubr.f32.gmra.mrb[0].mxu0 %v3747
    %v3818 = vpop.f32.mrb[0].mxu0
    %v3819 = vadd.f32 %v3744, %v3818
    %v3820 = vpop.f32.mrb[0].mxu0
    %3821 = vmatprep.mubr.f32.mxu0 0.0
    %3822 = vmatmul.mubr.f32.gmra.mrb[0].mxu0 %v3750
    %v3823 = vpop.f32.mrb[0].mxu0
    %v3824 = vadd.f32 %v3744, %v3823
    %v3825 = vpop.f32.mrb[0].mxu0
    %3826 = vdwg.mxu0
    %v3827 = vmax.f32 %v3819, 0.0
    %v3828 = vmax.f32 %v3824, 0.0
    %v3830 = vlaneseq
    %v3831 = vshrl.u32 %v3830, 7
    %v3832 = vsub.s32 0, %v3831
    %v3833 = vrot.slane %v2728, %v3832
    %v3836 = vsel %vm848, %v3827, 0
    %v3839 = vsel %vm848, %v3828, 0
    %3841 = vmatprep.subr.mxu0 0.0
    %3842 = vmatpush1.msra.mxu0 %v2719
    %3843 = vmatprep.subr.mxu0 0.0
    %3844 = vmatpush1.msra.mxu0 %v2720
    %3845 = vmatprep.subr.mxu0 0.0
    %3846 = vmatpush1.msra.mxu0 %v2721
    %3847 = vmatprep.subr.mxu0 0.0
    %3848 = vmatpush1.msra.mxu0 %v2722
    %3849 = vmatprep.subr.mxu0 0.0
    %3850 = vmatpush1.msra.mxu0 %v2723
    %3851 = vmatprep.subr.mxu0 0.0
    %3852 = vmatpush1.msra.mxu0 %v2724
    %3853 = vmatprep.subr.mxu0 0.0
    %3854 = vmatpush1.msra.mxu0 %v2725
    %3855 = vmatprep.subr.mxu0 0.0
    %3856 = vmatpush1.msra.mxu0 %v2726
    %3857 = vmatprep.subr.mxu0 0.0
    %3858 = vmatpush1.msra.mxu0 0.0
    %3859 = vmatprep.subr.mxu0 0.0
    %3860 = vmatpush1.msra.mxu0 0.0
    %3861 = vmatprep.subr.mxu0 0.0
    %3862 = vmatpush1.msra.mxu0 0.0
    %3863 = vmatprep.subr.mxu0 0.0
    %3864 = vmatpush1.msra.mxu0 0.0
    %3865 = vmatprep.subr.mxu0 0.0
    %3866 = vmatpush1.msra.mxu0 0.0
    %3867 = vmatprep.subr.mxu0 0.0
    %3868 = vmatpush1.msra.mxu0 0.0
    %3869 = vmatprep.subr.mxu0 0.0
    %3870 = vmatpush1.msra.mxu0 0.0
    %3871 = vmatprep.subr.mxu0 0.0
    %3872 = vmatpush1.msra.mxu0 0.0
    %3873 = vmatprep.subr.mxu0 0.0
    %3874 = vmatpush1.msra.mxu0 0.0
    %3875 = vmatprep.subr.mxu0 0.0
    %3876 = vmatpush1.msra.mxu0 0.0
    %3877 = vmatprep.subr.mxu0 0.0
    %3878 = vmatpush1.msra.mxu0 0.0
    %3879 = vmatprep.subr.mxu0 0.0
    %3880 = vmatpush1.msra.mxu0 0.0
    %3881 = vmatprep.subr.mxu0 0.0
    %3882 = vmatpush1.msra.mxu0 0.0
    %3883 = vmatprep.subr.mxu0 0.0
    %3884 = vmatpush1.msra.mxu0 0.0
    %3885 = vmatprep.subr.mxu0 0.0
    %3886 = vmatpush1.msra.mxu0 0.0
    %3887 = vmatprep.subr.mxu0 0.0
    %3888 = vmatpush1.msra.mxu0 0.0
    %3889 = vmatprep.subr.mxu0 0.0
    %3890 = vmatpush1.msra.mxu0 0.0
    %3891 = vmatprep.subr.mxu0 0.0
    %3892 = vmatpush1.msra.mxu0 0.0
    %3893 = vmatprep.subr.mxu0 0.0
    %3894 = vmatpush1.msra.mxu0 0.0
    %3895 = vmatprep.subr.mxu0 0.0
    %3896 = vmatpush1.msra.mxu0 0.0
    %3897 = vmatprep.subr.mxu0 0.0
    %3898 = vmatpush1.msra.mxu0 0.0
    %3899 = vmatprep.subr.mxu0 0.0
    %3900 = vmatpush1.msra.mxu0 0.0
    %3901 = vmatprep.subr.mxu0 0.0
    %3902 = vmatpush1.msra.mxu0 0.0
    %3903 = vmatprep.subr.mxu0 0.0
    %3904 = vmatpush1.msra.mxu0 0.0
    %3905 = vmatprep.mubr.f32.mxu0 0.0
    %3906 = vmatmul.mubr.f32.gmra.mrb[0].mxu0 %v3836
    %v3907 = vpop.f32.mrb[0].mxu0
    %v3908 = vadd.f32 %v3833, %v3907
    %v3909 = vpop.f32.mrb[0].mxu0
    %3910 = vmatprep.mubr.f32.mxu0 0.0
    %3911 = vmatmul.mubr.f32.gmra.mrb[0].mxu0 %v3839
    %v3912 = vpop.f32.mrb[0].mxu0
    %v3913 = vadd.f32 %v3833, %v3912
    %v3914 = vpop.f32.mrb[0].mxu0
    %3915 = vdwg.mxu0
    %v3916 = vadd.f32 %v3738, %v3908
    %v3917 = vadd.f32 %v3739, %v3913
    %v3918 = vsel %vm238, %v3916, 0.0
    %3919 = vadd.xlane.f32.xlu0 %v3918
    %v3920 = vpop.xlane.xlu0 %3919
    %v3921 = vsel %vm238, %v3917, 0.0
    %3922 = vadd.xlane.f32.xlu0 %v3921
    %v3923 = vpop.xlane.xlu0 %3922
    %v3924 = vmul.f32 %v3920, %v1245
    %v3925 = vmul.f32 %v3923, %v1245
    %v3926 = vmul.f32 %v3916, %v3916
    %v3927 = vmul.f32 %v3917, %v3917
    %v3928 = vsel %vm238, %v3926, 0.0
    %3929 = vadd.xlane.f32.xlu0 %v3928
    %v3930 = vpop.xlane.xlu0 %3929
    %v3931 = vsel %vm238, %v3927, 0.0
    %3932 = vadd.xlane.f32.xlu0 %v3931
    %v3933 = vpop.xlane.xlu0 %3932
    %v3934 = vmul.f32 %v3930, %v1245
    %v3935 = vmul.f32 %v3933, %v1245
    %v3936 = vmul.f32 %v3924, %v3924
    %v3937 = vmul.f32 %v3925, %v3925
    %v3938 = vsub.f32 %v3934, %v3936
    %v3939 = vsub.f32 %v3935, %v3937
    %v3940 = vsub.f32 %v3916, %v3924
    %v3941 = vsub.f32 %v3917, %v3925
    %v3942 = vadd.f32 %v3938, 1e-05
    %v3943 = vadd.f32 %v3939, 1e-05
    %v3944 = vrsqrt.pop %v3942
    %v3945 = vrsqrt.pop %v3943
    %v3946 = vmul.f32 %v3940, %v3944
    %v3947 = vmul.f32 %v3941, %v3945
    %v3949 = vlaneseq
    %v3950 = vshrl.u32 %v3949, 7
    %v3951 = vsub.s32 0, %v3950
    %v3952 = vrot.slane %v2730, %v3951
    %v3954 = vmul.f32 %v3946, %v3952
    %v3955 = vmul.f32 %v3947, %v3952
    %v3957 = vlaneseq
    %v3958 = vshrl.u32 %v3957, 7
    %v3959 = vsub.s32 0, %v3958
    %v3960 = vrot.slane %v2732, %v3959
    %v3962 = vadd.f32 %v3954, %v3960
    %v3963 = vadd.f32 %v3955, %v3960
    %v3965 = vsel %vm238, %v3962, 0
    %v3968 = vsel %vm238, %v3963, 0
    %3970 = vmatprep.subr.mxu0 0.0
    %3971 = vmatpush1.msra.mxu0 %v2694
    %3972 = vmatprep.subr.mxu0 0.0
    %3973 = vmatpush1.msra.mxu0 %v2695
    %3974 = vmatprep.subr.mxu0 0.0
    %3975 = vmatpush1.msra.mxu0 %v2696
    %3976 = vmatprep.subr.mxu0 0.0
    %3977 = vmatpush1.msra.mxu0 %v2697
    %3978 = vmatprep.subr.mxu0 0.0
    %3979 = vmatpush1.msra.mxu0 0.0
    %3980 = vmatprep.subr.mxu0 0.0
    %3981 = vmatpush1.msra.mxu0 0.0
    %3982 = vmatprep.subr.mxu0 0.0
    %3983 = vmatpush1.msra.mxu0 0.0
    %3984 = vmatprep.subr.mxu0 0.0
    %3985 = vmatpush1.msra.mxu0 0.0
    %3986 = vmatprep.subr.mxu0 0.0
    %3987 = vmatpush1.msra.mxu0 0.0
    %3988 = vmatprep.subr.mxu0 0.0
    %3989 = vmatpush1.msra.mxu0 0.0
    %3990 = vmatprep.subr.mxu0 0.0
    %3991 = vmatpush1.msra.mxu0 0.0
    %3992 = vmatprep.subr.mxu0 0.0
    %3993 = vmatpush1.msra.mxu0 0.0
    %3994 = vmatprep.subr.mxu0 0.0
    %3995 = vmatpush1.msra.mxu0 0.0
    %3996 = vmatprep.subr.mxu0 0.0
    %3997 = vmatpush1.msra.mxu0 0.0
    %3998 = vmatprep.subr.mxu0 0.0
    %3999 = vmatpush1.msra.mxu0 0.0
    %4000 = vmatprep.subr.mxu0 0.0
    %4001 = vmatpush1.msra.mxu0 0.0
    %4002 = vmatprep.subr.mxu0 0.0
    %4003 = vmatpush1.msra.mxu0 0.0
    %4004 = vmatprep.subr.mxu0 0.0
    %4005 = vmatpush1.msra.mxu0 0.0
    %4006 = vmatprep.subr.mxu0 0.0
    %4007 = vmatpush1.msra.mxu0 0.0
    %4008 = vmatprep.subr.mxu0 0.0
    %4009 = vmatpush1.msra.mxu0 0.0
    %4010 = vmatprep.subr.mxu0 0.0
    %4011 = vmatpush1.msra.mxu0 0.0
    %4012 = vmatprep.subr.mxu0 0.0
    %4013 = vmatpush1.msra.mxu0 0.0
    %4014 = vmatprep.subr.mxu0 0.0
    %4015 = vmatpush1.msra.mxu0 0.0
    %4016 = vmatprep.subr.mxu0 0.0
    %4017 = vmatpush1.msra.mxu0 0.0
    %4018 = vmatprep.subr.mxu0 0.0
    %4019 = vmatpush1.msra.mxu0 0.0
    %4020 = vmatprep.subr.mxu0 0.0
    %4021 = vmatpush1.msra.mxu0 0.0
    %4022 = vmatprep.subr.mxu0 0.0
    %4023 = vmatpush1.msra.mxu0 0.0
    %4024 = vmatprep.subr.mxu0 0.0
    %4025 = vmatpush1.msra.mxu0 0.0
    %4026 = vmatprep.subr.mxu0 0.0
    %4027 = vmatpush1.msra.mxu0 0.0
    %4028 = vmatprep.subr.mxu0 0.0
    %4029 = vmatpush1.msra.mxu0 0.0
    %4030 = vmatprep.subr.mxu0 0.0
    %4031 = vmatpush1.msra.mxu0 0.0
    %4032 = vmatprep.subr.mxu0 0.0
    %4033 = vmatpush1.msra.mxu0 0.0
    %4034 = vmatprep.mubr.f32.mxu0 0.0
    %4035 = vmatmul.mubr.f32.gmra.mrb[0].mxu0 %v3965
    %v4036 = vpop.f32.mrb[0].mxu0
    %v4037 = vadd.f32 %v2737, %v4036
    %v4038 = vpop.f32.mrb[0].mxu0
    %4039 = vmatprep.mubr.f32.mxu0 0.0
    %4040 = vmatmul.mubr.f32.gmra.mrb[0].mxu0 %v3968
    %v4041 = vpop.f32.mrb[0].mxu0
    %v4042 = vadd.f32 %v2737, %v4041
    %v4043 = vpop.f32.mrb[0].mxu0
    %4044 = vmatprep.mubr.f32.mxu0 0.0
    %4045 = vmatmul.mubr.f32.gmra.mrb[0].mxu0 %v2740
    %v4046 = vpop.f32.mrb[0].mxu0
    %v4047 = vadd.f32 %v2737, %v4046
    %v4048 = vpop.f32.mrb[0].mxu0
    %4049 = vmatprep.mubr.f32.mxu0 0.0
    %4050 = vmatmul.mubr.f32.gmra.mrb[0].mxu0 %v2743
    %v4051 = vpop.f32.mrb[0].mxu0
    %v4052 = vadd.f32 %v2737, %v4051
    %v4053 = vpop.f32.mrb[0].mxu0
    %4054 = vdwg.mxu0
    %4057 = vrot.lane.b32.xlu0 %v4047, 96
    %v4058 = vpop.permute.xlu0 %4057
    %4059 = vrot.lane.b32.xlu0 %v4052, 96
    %v4060 = vpop.permute.xlu0 %4059
    %4063 = vxpose.xlu0.b32.start [1/16] %v4058, 128
    %4064 = vxpose.xlu0.b32.cont [2/16] 0.0, 128
    %4065 = vxpose.xlu0.b32.cont [3/16] 0.0, 128
    %4066 = vxpose.xlu0.b32.cont [4/16] 0.0, 128
    %4067 = vxpose.xlu0.b32.cont [5/16] 0.0, 128
    %4068 = vxpose.xlu0.b32.cont [6/16] 0.0, 128
    %4069 = vxpose.xlu0.b32.cont [7/16] 0.0, 128
    %4070 = vxpose.xlu0.b32.cont [8/16] 0.0, 128
    %4071 = vxpose.xlu0.b32.cont [9/16] 0.0, 128
    %4072 = vxpose.xlu0.b32.cont [10/16] 0.0, 128
    %4073 = vxpose.xlu0.b32.cont [11/16] 0.0, 128
    %4074 = vxpose.xlu0.b32.cont [12/16] 0.0, 128
    %4075 = vxpose.xlu0.b32.cont [13/16] 0.0, 128
    %4076 = vxpose.xlu0.b32.cont [14/16] 0.0, 128
    %4077 = vxpose.xlu0.b32.cont [15/16] 0.0, 128
    %4078 = vxpose.xlu0.b32.end [16/16] 0.0, 128
    %v4079 = vpop.trf.xlu0
    %v4080 = vpop.trf.xlu0
    %v4081 = vpop.trf.xlu0
    %v4082 = vpop.trf.xlu0
    %v4083 = vpop.trf.xlu0
    %v4084 = vpop.trf.xlu0
    %v4085 = vpop.trf.xlu0
    %v4086 = vpop.trf.xlu0
    %v4087 = vpop.trf.xlu0
    %v4088 = vpop.trf.xlu0
    %v4089 = vpop.trf.xlu0
    %v4090 = vpop.trf.xlu0
    %v4091 = vpop.trf.xlu0
    %v4092 = vpop.trf.xlu0
    %v4093 = vpop.trf.xlu0
    %v4094 = vpop.trf.xlu0
    %4095 = vxpose.xlu0.b32.start [1/16] %v4060, 128
    %4096 = vxpose.xlu0.b32.cont [2/16] 0.0, 128
    %4097 = vxpose.xlu0.b32.cont [3/16] 0.0, 128
    %4098 = vxpose.xlu0.b32.cont [4/16] 0.0, 128
    %4099 = vxpose.xlu0.b32.cont [5/16] 0.0, 128
    %4100 = vxpose.xlu0.b32.cont [6/16] 0.0, 128
    %4101 = vxpose.xlu0.b32.cont [7/16] 0.0, 128
    %4102 = vxpose.xlu0.b32.cont [8/16] 0.0, 128
    %4103 = vxpose.xlu0.b32.cont [9/16] 0.0, 128
    %4104 = vxpose.xlu0.b32.cont [10/16] 0.0, 128
    %4105 = vxpose.xlu0.b32.cont [11/16] 0.0, 128
    %4106 = vxpose.xlu0.b32.cont [12/16] 0.0, 128
    %4107 = vxpose.xlu0.b32.cont [13/16] 0.0, 128
    %4108 = vxpose.xlu0.b32.cont [14/16] 0.0, 128
    %4109 = vxpose.xlu0.b32.cont [15/16] 0.0, 128
    %4110 = vxpose.xlu0.b32.end [16/16] 0.0, 128
    %v4111 = vpop.trf.xlu0
    %v4112 = vpop.trf.xlu0
    %v4113 = vpop.trf.xlu0
    %v4114 = vpop.trf.xlu0
    %v4115 = vpop.trf.xlu0
    %v4116 = vpop.trf.xlu0
    %v4117 = vpop.trf.xlu0
    %v4118 = vpop.trf.xlu0
    %v4119 = vpop.trf.xlu0
    %v4120 = vpop.trf.xlu0
    %v4121 = vpop.trf.xlu0
    %v4122 = vpop.trf.xlu0
    %v4123 = vpop.trf.xlu0
    %v4124 = vpop.trf.xlu0
    %v4125 = vpop.trf.xlu0
    %v4126 = vpop.trf.xlu0
    %4135 = vrot.lane.b32.xlu0 %v4079, 8
    %v4136 = vpop.permute.xlu0 %4135
    %4137 = vrot.lane.b32.xlu0 %v4080, 8
    %v4138 = vpop.permute.xlu0 %4137
    %4139 = vrot.lane.b32.xlu0 %v4081, 8
    %v4140 = vpop.permute.xlu0 %4139
    %4141 = vrot.lane.b32.xlu0 %v4082, 8
    %v4142 = vpop.permute.xlu0 %4141
    %4143 = vrot.lane.b32.xlu0 %v4111, 8
    %v4144 = vpop.permute.xlu0 %4143
    %4145 = vrot.lane.b32.xlu0 %v4112, 8
    %v4146 = vpop.permute.xlu0 %4145
    %4147 = vrot.lane.b32.xlu0 %v4113, 8
    %v4148 = vpop.permute.xlu0 %4147
    %4149 = vrot.lane.b32.xlu0 %v4114, 8
    %v4150 = vpop.permute.xlu0 %4149
    %4159 = vrot.lane.b32.xlu0 %v4079, 16
    %v4160 = vpop.permute.xlu0 %4159
    %4161 = vrot.lane.b32.xlu0 %v4080, 16
    %v4162 = vpop.permute.xlu0 %4161
    %4163 = vrot.lane.b32.xlu0 %v4081, 16
    %v4164 = vpop.permute.xlu0 %4163
    %4165 = vrot.lane.b32.xlu0 %v4082, 16
    %v4166 = vpop.permute.xlu0 %4165
    %4167 = vrot.lane.b32.xlu0 %v4111, 16
    %v4168 = vpop.permute.xlu0 %4167
    %4169 = vrot.lane.b32.xlu0 %v4112, 16
    %v4170 = vpop.permute.xlu0 %4169
    %4171 = vrot.lane.b32.xlu0 %v4113, 16
    %v4172 = vpop.permute.xlu0 %4171
    %4173 = vrot.lane.b32.xlu0 %v4114, 16
    %v4174 = vpop.permute.xlu0 %4173
    %4183 = vrot.lane.b32.xlu0 %v4079, 24
    %v4184 = vpop.permute.xlu0 %4183
    %4185 = vrot.lane.b32.xlu0 %v4080, 24
    %v4186 = vpop.permute.xlu0 %4185
    %4187 = vrot.lane.b32.xlu0 %v4081, 24
    %v4188 = vpop.permute.xlu0 %4187
    %4189 = vrot.lane.b32.xlu0 %v4082, 24
    %v4190 = vpop.permute.xlu0 %4189
    %4191 = vrot.lane.b32.xlu0 %v4111, 24
    %v4192 = vpop.permute.xlu0 %4191
    %4193 = vrot.lane.b32.xlu0 %v4112, 24
    %v4194 = vpop.permute.xlu0 %4193
    %4195 = vrot.lane.b32.xlu0 %v4113, 24
    %v4196 = vpop.permute.xlu0 %4195
    %4197 = vrot.lane.b32.xlu0 %v4114, 24
    %v4198 = vpop.permute.xlu0 %4197
    %4207 = vrot.lane.b32.xlu0 %v4079, 32
    %v4208 = vpop.permute.xlu0 %4207
    %4209 = vrot.lane.b32.xlu0 %v4080, 32
    %v4210 = vpop.permute.xlu0 %4209
    %4211 = vrot.lane.b32.xlu0 %v4081, 32
    %v4212 = vpop.permute.xlu0 %4211
    %4213 = vrot.lane.b32.xlu0 %v4082, 32
    %v4214 = vpop.permute.xlu0 %4213
    %4215 = vrot.lane.b32.xlu0 %v4111, 32
    %v4216 = vpop.permute.xlu0 %4215
    %4217 = vrot.lane.b32.xlu0 %v4112, 32
    %v4218 = vpop.permute.xlu0 %4217
    %4219 = vrot.lane.b32.xlu0 %v4113, 32
    %v4220 = vpop.permute.xlu0 %4219
    %4221 = vrot.lane.b32.xlu0 %v4114, 32
    %v4222 = vpop.permute.xlu0 %4221
    %4231 = vrot.lane.b32.xlu0 %v4079, 40
    %v4232 = vpop.permute.xlu0 %4231
    %4233 = vrot.lane.b32.xlu0 %v4080, 40
    %v4234 = vpop.permute.xlu0 %4233
    %4235 = vrot.lane.b32.xlu0 %v4081, 40
    %v4236 = vpop.permute.xlu0 %4235
    %4237 = vrot.lane.b32.xlu0 %v4082, 40
    %v4238 = vpop.permute.xlu0 %4237
    %4239 = vrot.lane.b32.xlu0 %v4111, 40
    %v4240 = vpop.permute.xlu0 %4239
    %4241 = vrot.lane.b32.xlu0 %v4112, 40
    %v4242 = vpop.permute.xlu0 %4241
    %4243 = vrot.lane.b32.xlu0 %v4113, 40
    %v4244 = vpop.permute.xlu0 %4243
    %4245 = vrot.lane.b32.xlu0 %v4114, 40
    %v4246 = vpop.permute.xlu0 %4245
    %4255 = vrot.lane.b32.xlu0 %v4079, 48
    %v4256 = vpop.permute.xlu0 %4255
    %4257 = vrot.lane.b32.xlu0 %v4080, 48
    %v4258 = vpop.permute.xlu0 %4257
    %4259 = vrot.lane.b32.xlu0 %v4081, 48
    %v4260 = vpop.permute.xlu0 %4259
    %4261 = vrot.lane.b32.xlu0 %v4082, 48
    %v4262 = vpop.permute.xlu0 %4261
    %4263 = vrot.lane.b32.xlu0 %v4111, 48
    %v4264 = vpop.permute.xlu0 %4263
    %4265 = vrot.lane.b32.xlu0 %v4112, 48
    %v4266 = vpop.permute.xlu0 %4265
    %4267 = vrot.lane.b32.xlu0 %v4113, 48
    %v4268 = vpop.permute.xlu0 %4267
    %4269 = vrot.lane.b32.xlu0 %v4114, 48
    %v4270 = vpop.permute.xlu0 %4269
    %4279 = vrot.lane.b32.xlu0 %v4079, 56
    %v4280 = vpop.permute.xlu0 %4279
    %4281 = vrot.lane.b32.xlu0 %v4080, 56
    %v4282 = vpop.permute.xlu0 %4281
    %4283 = vrot.lane.b32.xlu0 %v4081, 56
    %v4284 = vpop.permute.xlu0 %4283
    %4285 = vrot.lane.b32.xlu0 %v4082, 56
    %v4286 = vpop.permute.xlu0 %4285
    %4287 = vrot.lane.b32.xlu0 %v4111, 56
    %v4288 = vpop.permute.xlu0 %4287
    %4289 = vrot.lane.b32.xlu0 %v4112, 56
    %v4290 = vpop.permute.xlu0 %4289
    %4291 = vrot.lane.b32.xlu0 %v4113, 56
    %v4292 = vpop.permute.xlu0 %4291
    %4293 = vrot.lane.b32.xlu0 %v4114, 56
    %v4294 = vpop.permute.xlu0 %4293
    %v4303 = vsel %vm584, %v4079, %v4136
    %v4304 = vsel %vm584, %v4080, %v4138
    %v4305 = vsel %vm584, %v4081, %v4140
    %v4306 = vsel %vm584, %v4082, %v4142
    %v4307 = vsel %vm584, %v4111, %v4144
    %v4308 = vsel %vm584, %v4112, %v4146
    %v4309 = vsel %vm584, %v4113, %v4148
    %v4310 = vsel %vm584, %v4114, %v4150
    %v4311 = vsel %vm593, %v4303, %v4160
    %v4312 = vsel %vm593, %v4304, %v4162
    %v4313 = vsel %vm593, %v4305, %v4164
    %v4314 = vsel %vm593, %v4306, %v4166
    %v4315 = vsel %vm593, %v4307, %v4168
    %v4316 = vsel %vm593, %v4308, %v4170
    %v4317 = vsel %vm593, %v4309, %v4172
    %v4318 = vsel %vm593, %v4310, %v4174
    %v4319 = vsel %vm602, %v4311, %v4184
    %v4320 = vsel %vm602, %v4312, %v4186
    %v4321 = vsel %vm602, %v4313, %v4188
    %v4322 = vsel %vm602, %v4314, %v4190
    %v4323 = vsel %vm602, %v4315, %v4192
    %v4324 = vsel %vm602, %v4316, %v4194
    %v4325 = vsel %vm602, %v4317, %v4196
    %v4326 = vsel %vm602, %v4318, %v4198
    %v4327 = vsel %vm238, %v4319, %v4208
    %v4328 = vsel %vm238, %v4320, %v4210
    %v4329 = vsel %vm238, %v4321, %v4212
    %v4330 = vsel %vm238, %v4322, %v4214
    %v4331 = vsel %vm238, %v4323, %v4216
    %v4332 = vsel %vm238, %v4324, %v4218
    %v4333 = vsel %vm238, %v4325, %v4220
    %v4334 = vsel %vm238, %v4326, %v4222
    %v4335 = vsel %vm619, %v4327, %v4232
    %v4336 = vsel %vm619, %v4328, %v4234
    %v4337 = vsel %vm619, %v4329, %v4236
    %v4338 = vsel %vm619, %v4330, %v4238
    %v4339 = vsel %vm619, %v4331, %v4240
    %v4340 = vsel %vm619, %v4332, %v4242
    %v4341 = vsel %vm619, %v4333, %v4244
    %v4342 = vsel %vm619, %v4334, %v4246
    %v4343 = vsel %vm628, %v4335, %v4256
    %v4344 = vsel %vm628, %v4336, %v4258
    %v4345 = vsel %vm628, %v4337, %v4260
    %v4346 = vsel %vm628, %v4338, %v4262
    %v4347 = vsel %vm628, %v4339, %v4264
    %v4348 = vsel %vm628, %v4340, %v4266
    %v4349 = vsel %vm628, %v4341, %v4268
    %v4350 = vsel %vm628, %v4342, %v4270
    %v4351 = vsel %vm637, %v4343, %v4280
    %v4352 = vsel %vm637, %v4344, %v4282
    %v4353 = vsel %vm637, %v4345, %v4284
    %v4354 = vsel %vm637, %v4346, %v4286
    %v4355 = vsel %vm637, %v4347, %v4288
    %v4356 = vsel %vm637, %v4348, %v4290
    %v4357 = vsel %vm637, %v4349, %v4292
    %v4358 = vsel %vm637, %v4350, %v4294
    %v4359 = vmul.f32 %v4351, %v200
    %v4360 = vmul.f32 %v4352, %v201
    %v4361 = vmul.f32 %v4353, %v202
    %v4362 = vmul.f32 %v4354, %v203
    %v4363 = vmul.f32 %v4355, %v200
    %v4364 = vmul.f32 %v4356, %v201
    %v4365 = vmul.f32 %v4357, %v202
    %v4366 = vmul.f32 %v4358, %v203
    %v4367 = vmul.f32 %v4047, %v663
    %v4368 = vmul.f32 %v4047, %v665
    %v4369 = vmul.f32 %v4047, %v667
    %v4370 = vmul.f32 %v4047, %v669
    %v4371 = vmul.f32 %v4047, %v671
    %v4372 = vmul.f32 %v4047, %v673
    %v4373 = vmul.f32 %v4047, %v675
    %v4374 = vmul.f32 %v4047, %v677
    %v4375 = vmul.f32 %v4052, %v663
    %v4376 = vmul.f32 %v4052, %v665
    %v4377 = vmul.f32 %v4052, %v667
    %v4378 = vmul.f32 %v4052, %v669
    %v4379 = vmul.f32 %v4052, %v671
    %v4380 = vmul.f32 %v4052, %v673
    %v4381 = vmul.f32 %v4052, %v675
    %v4382 = vmul.f32 %v4052, %v677
    %v4384 = vsel %vm238, %v4037, 0
    %4386 = vmatprep.subr.mxu0 0.0
    %4387 = vmatpush1.msra.mxu0 %v4359
    %4388 = vmatprep.subr.mxu0 0.0
    %4389 = vmatpush1.msra.mxu0 %v4360
    %4390 = vmatprep.subr.mxu0 0.0
    %4391 = vmatpush1.msra.mxu0 %v4361
    %4392 = vmatprep.subr.mxu0 0.0
    %4393 = vmatpush1.msra.mxu0 %v4362
    %4394 = vmatprep.subr.mxu0 0.0
    %4395 = vmatpush1.msra.mxu0 0.0
    %4396 = vmatprep.subr.mxu0 0.0
    %4397 = vmatpush1.msra.mxu0 0.0
    %4398 = vmatprep.subr.mxu0 0.0
    %4399 = vmatpush1.msra.mxu0 0.0
    %4400 = vmatprep.subr.mxu0 0.0
    %4401 = vmatpush1.msra.mxu0 0.0
    %4402 = vmatprep.subr.mxu0 0.0
    %4403 = vmatpush1.msra.mxu0 0.0
    %4404 = vmatprep.subr.mxu0 0.0
    %4405 = vmatpush1.msra.mxu0 0.0
    %4406 = vmatprep.subr.mxu0 0.0
    %4407 = vmatpush1.msra.mxu0 0.0
    %4408 = vmatprep.subr.mxu0 0.0
    %4409 = vmatpush1.msra.mxu0 0.0
    %4410 = vmatprep.subr.mxu0 0.0
    %4411 = vmatpush1.msra.mxu0 0.0
    %4412 = vmatprep.subr.mxu0 0.0
    %4413 = vmatpush1.msra.mxu0 0.0
    %4414 = vmatprep.subr.mxu0 0.0
    %4415 = vmatpush1.msra.mxu0 0.0
    %4416 = vmatprep.subr.mxu0 0.0
    %4417 = vmatpush1.msra.mxu0 0.0
    %4418 = vmatprep.subr.mxu0 0.0
    %4419 = vmatpush1.msra.mxu0 0.0
    %4420 = vmatprep.subr.mxu0 0.0
    %4421 = vmatpush1.msra.mxu0 0.0
    %4422 = vmatprep.subr.mxu0 0.0
    %4423 = vmatpush1.msra.mxu0 0.0
    %4424 = vmatprep.subr.mxu0 0.0
    %4425 = vmatpush1.msra.mxu0 0.0
    %4426 = vmatprep.subr.mxu0 0.0
    %4427 = vmatpush1.msra.mxu0 0.0
    %4428 = vmatprep.subr.mxu0 0.0
    %4429 = vmatpush1.msra.mxu0 0.0
    %4430 = vmatprep.subr.mxu0 0.0
    %4431 = vmatpush1.msra.mxu0 0.0
    %4432 = vmatprep.subr.mxu0 0.0
    %4433 = vmatpush1.msra.mxu0 0.0
    %4434 = vmatprep.subr.mxu0 0.0
    %4435 = vmatpush1.msra.mxu0 0.0
    %4436 = vmatprep.subr.mxu0 0.0
    %4437 = vmatpush1.msra.mxu0 0.0
    %4438 = vmatprep.subr.mxu0 0.0
    %4439 = vmatpush1.msra.mxu0 0.0
    %4440 = vmatprep.subr.mxu0 0.0
    %4441 = vmatpush1.msra.mxu0 0.0
    %4442 = vmatprep.subr.mxu0 0.0
    %4443 = vmatpush1.msra.mxu0 0.0
    %4444 = vmatprep.subr.mxu0 0.0
    %4445 = vmatpush1.msra.mxu0 0.0
    %4446 = vmatprep.subr.mxu0 0.0
    %4447 = vmatpush1.msra.mxu0 0.0
    %4448 = vmatprep.subr.mxu0 0.0
    %4449 = vmatpush1.msra.mxu0 0.0
    %4450 = vmatprep.mubr.f32.mxu0 0.0
    %4451 = vmatmul.mubr.f32.gmra.mrb[0].mxu0 %v4384
    %v4452 = vpop.f32.mrb[0].mxu0
    %v4453 = vadd.f32 0.0, %v4452
    %v4454 = vpop.f32.mrb[0].mxu0
    %4455 = vdwg.mxu0
    %v4457 = vsel %vm238, %v4042, 0
    %4459 = vmatprep.subr.mxu0 0.0
    %4460 = vmatpush1.msra.mxu0 %v4363
    %4461 = vmatprep.subr.mxu0 0.0
    %4462 = vmatpush1.msra.mxu0 %v4364
    %4463 = vmatprep.subr.mxu0 0.0
    %4464 = vmatpush1.msra.mxu0 %v4365
    %4465 = vmatprep.subr.mxu0 0.0
    %4466 = vmatpush1.msra.mxu0 %v4366
    %4467 = vmatprep.subr.mxu0 0.0
    %4468 = vmatpush1.msra.mxu0 0.0
    %4469 = vmatprep.subr.mxu0 0.0
    %4470 = vmatpush1.msra.mxu0 0.0
    %4471 = vmatprep.subr.mxu0 0.0
    %4472 = vmatpush1.msra.mxu0 0.0
    %4473 = vmatprep.subr.mxu0 0.0
    %4474 = vmatpush1.msra.mxu0 0.0
    %4475 = vmatprep.subr.mxu0 0.0
    %4476 = vmatpush1.msra.mxu0 0.0
    %4477 = vmatprep.subr.mxu0 0.0
    %4478 = vmatpush1.msra.mxu0 0.0
    %4479 = vmatprep.subr.mxu0 0.0
    %4480 = vmatpush1.msra.mxu0 0.0
    %4481 = vmatprep.subr.mxu0 0.0
    %4482 = vmatpush1.msra.mxu0 0.0
    %4483 = vmatprep.subr.mxu0 0.0
    %4484 = vmatpush1.msra.mxu0 0.0
    %4485 = vmatprep.subr.mxu0 0.0
    %4486 = vmatpush1.msra.mxu0 0.0
    %4487 = vmatprep.subr.mxu0 0.0
    %4488 = vmatpush1.msra.mxu0 0.0
    %4489 = vmatprep.subr.mxu0 0.0
    %4490 = vmatpush1.msra.mxu0 0.0
    %4491 = vmatprep.subr.mxu0 0.0
    %4492 = vmatpush1.msra.mxu0 0.0
    %4493 = vmatprep.subr.mxu0 0.0
    %4494 = vmatpush1.msra.mxu0 0.0
    %4495 = vmatprep.subr.mxu0 0.0
    %4496 = vmatpush1.msra.mxu0 0.0
    %4497 = vmatprep.subr.mxu0 0.0
    %4498 = vmatpush1.msra.mxu0 0.0
    %4499 = vmatprep.subr.mxu0 0.0
    %4500 = vmatpush1.msra.mxu0 0.0
    %4501 = vmatprep.subr.mxu0 0.0
    %4502 = vmatpush1.msra.mxu0 0.0
    %4503 = vmatprep.subr.mxu0 0.0
    %4504 = vmatpush1.msra.mxu0 0.0
    %4505 = vmatprep.subr.mxu0 0.0
    %4506 = vmatpush1.msra.mxu0 0.0
    %4507 = vmatprep.subr.mxu0 0.0
    %4508 = vmatpush1.msra.mxu0 0.0
    %4509 = vmatprep.subr.mxu0 0.0
    %4510 = vmatpush1.msra.mxu0 0.0
    %4511 = vmatprep.subr.mxu0 0.0
    %4512 = vmatpush1.msra.mxu0 0.0
    %4513 = vmatprep.subr.mxu0 0.0
    %4514 = vmatpush1.msra.mxu0 0.0
    %4515 = vmatprep.subr.mxu0 0.0
    %4516 = vmatpush1.msra.mxu0 0.0
    %4517 = vmatprep.subr.mxu0 0.0
    %4518 = vmatpush1.msra.mxu0 0.0
    %4519 = vmatprep.subr.mxu0 0.0
    %4520 = vmatpush1.msra.mxu0 0.0
    %4521 = vmatprep.subr.mxu0 0.0
    %4522 = vmatpush1.msra.mxu0 0.0
    %4523 = vmatprep.mubr.f32.mxu0 0.0
    %4524 = vmatmul.mubr.f32.gmra.mrb[0].mxu0 %v4457
    %v4525 = vpop.f32.mrb[0].mxu0
    %v4526 = vadd.f32 0.0, %v4525
    %v4527 = vpop.f32.mrb[0].mxu0
    %4528 = vdwg.mxu0
    %v4529 = vsel %vm848, %v4453, -inf
    %4530 = vmax.xlane.f32.xlu0 %v4529
    %v4531 = vpop.xlane.xlu0 %4530
    %v4532 = vsel %vm848, %v4526, -inf
    %4533 = vmax.xlane.f32.xlu0 %v4532
    %v4534 = vpop.xlane.xlu0 %4533
    %v4535 = vsub.f32 %v4453, %v4531
    %v4536 = vsub.f32 %v4526, %v4534
    %v4537 = vmul.f32 %v4535, 1.442695
    %v4538 = vpow.pop %v4537
    %v4539 = vmul.f32 %v4536, 1.442695
    %v4540 = vpow.pop %v4539
    %v4542 = vsel %vm848, %v4538, 0
    %v4545 = vsel %vm848, %v4540, 0
    %4547 = vmatprep.subr.mxu0 0.0
    %4548 = vmatpush1.msra.mxu0 %v192
    %4549 = vmatprep.subr.mxu0 0.0
    %4550 = vmatpush1.msra.mxu0 %v193
    %4551 = vmatprep.subr.mxu0 0.0
    %4552 = vmatpush1.msra.mxu0 %v194
    %4553 = vmatprep.subr.mxu0 0.0
    %4554 = vmatpush1.msra.mxu0 %v195
    %4555 = vmatprep.subr.mxu0 0.0
    %4556 = vmatpush1.msra.mxu0 %v196
    %4557 = vmatprep.subr.mxu0 0.0
    %4558 = vmatpush1.msra.mxu0 %v197
    %4559 = vmatprep.subr.mxu0 0.0
    %4560 = vmatpush1.msra.mxu0 %v198
    %4561 = vmatprep.subr.mxu0 0.0
    %4562 = vmatpush1.msra.mxu0 %v199
    %4563 = vmatprep.subr.mxu0 0.0
    %4564 = vmatpush1.msra.mxu0 0.0
    %4565 = vmatprep.subr.mxu0 0.0
    %4566 = vmatpush1.msra.mxu0 0.0
    %4567 = vmatprep.subr.mxu0 0.0
    %4568 = vmatpush1.msra.mxu0 0.0
    %4569 = vmatprep.subr.mxu0 0.0
    %4570 = vmatpush1.msra.mxu0 0.0
    %4571 = vmatprep.subr.mxu0 0.0
    %4572 = vmatpush1.msra.mxu0 0.0
    %4573 = vmatprep.subr.mxu0 0.0
    %4574 = vmatpush1.msra.mxu0 0.0
    %4575 = vmatprep.subr.mxu0 0.0
    %4576 = vmatpush1.msra.mxu0 0.0
    %4577 = vmatprep.subr.mxu0 0.0
    %4578 = vmatpush1.msra.mxu0 0.0
    %4579 = vmatprep.subr.mxu0 0.0
    %4580 = vmatpush1.msra.mxu0 0.0
    %4581 = vmatprep.subr.mxu0 0.0
    %4582 = vmatpush1.msra.mxu0 0.0
    %4583 = vmatprep.subr.mxu0 0.0
    %4584 = vmatpush1.msra.mxu0 0.0
    %4585 = vmatprep.subr.mxu0 0.0
    %4586 = vmatpush1.msra.mxu0 0.0
    %4587 = vmatprep.subr.mxu0 0.0
    %4588 = vmatpush1.msra.mxu0 0.0
    %4589 = vmatprep.subr.mxu0 0.0
    %4590 = vmatpush1.msra.mxu0 0.0
    %4591 = vmatprep.subr.mxu0 0.0
    %4592 = vmatpush1.msra.mxu0 0.0
    %4593 = vmatprep.subr.mxu0 0.0
    %4594 = vmatpush1.msra.mxu0 0.0
    %4595 = vmatprep.subr.mxu0 0.0
    %4596 = vmatpush1.msra.mxu0 0.0
    %4597 = vmatprep.subr.mxu0 0.0
    %4598 = vmatpush1.msra.mxu0 0.0
    %4599 = vmatprep.subr.mxu0 0.0
    %4600 = vmatpush1.msra.mxu0 0.0
    %4601 = vmatprep.subr.mxu0 0.0
    %4602 = vmatpush1.msra.mxu0 0.0
    %4603 = vmatprep.subr.mxu0 0.0
    %4604 = vmatpush1.msra.mxu0 0.0
    %4605 = vmatprep.subr.mxu0 0.0
    %4606 = vmatpush1.msra.mxu0 0.0
    %4607 = vmatprep.subr.mxu0 0.0
    %4608 = vmatpush1.msra.mxu0 0.0
    %4609 = vmatprep.subr.mxu0 0.0
    %4610 = vmatpush1.msra.mxu0 0.0
    %4611 = vmatprep.mubr.f32.mxu0 0.0
    %4612 = vmatmul.mubr.f32.gmra.mrb[0].mxu0 %v4542
    %v4613 = vpop.f32.mrb[0].mxu0
    %v4614 = vadd.f32 0.0, %v4613
    %v4615 = vpop.f32.mrb[0].mxu0
    %4616 = vmatprep.mubr.f32.mxu0 0.0
    %4617 = vmatmul.mubr.f32.gmra.mrb[0].mxu0 %v4545
    %v4618 = vpop.f32.mrb[0].mxu0
    %v4619 = vadd.f32 0.0, %v4618
    %v4620 = vpop.f32.mrb[0].mxu0
    %4621 = vdwg.mxu0
    %4630 = vrot.lane.b32.xlu0 %v4367, 64
    %v4631 = vpop.permute.xlu0 %4630
    %4632 = vrot.lane.b32.xlu0 %v4368, 64
    %v4633 = vpop.permute.xlu0 %4632
    %4634 = vrot.lane.b32.xlu0 %v4369, 64
    %v4635 = vpop.permute.xlu0 %4634
    %4636 = vrot.lane.b32.xlu0 %v4370, 64
    %v4637 = vpop.permute.xlu0 %4636
    %4638 = vrot.lane.b32.xlu0 %v4371, 64
    %v4639 = vpop.permute.xlu0 %4638
    %4640 = vrot.lane.b32.xlu0 %v4372, 64
    %v4641 = vpop.permute.xlu0 %4640
    %4642 = vrot.lane.b32.xlu0 %v4373, 64
    %v4643 = vpop.permute.xlu0 %4642
    %4644 = vrot.lane.b32.xlu0 %v4374, 64
    %v4645 = vpop.permute.xlu0 %4644
    %4654 = vmatprep.subr.mxu0 0.0
    %4655 = vmatpush1.msra.mxu0 %v4631
    %4656 = vmatprep.subr.mxu0 0.0
    %4657 = vmatpush1.msra.mxu0 %v4633
    %4658 = vmatprep.subr.mxu0 0.0
    %4659 = vmatpush1.msra.mxu0 %v4635
    %4660 = vmatprep.subr.mxu0 0.0
    %4661 = vmatpush1.msra.mxu0 %v4637
    %4662 = vmatprep.subr.mxu0 0.0
    %4663 = vmatpush1.msra.mxu0 %v4639
    %4664 = vmatprep.subr.mxu0 0.0
    %4665 = vmatpush1.msra.mxu0 %v4641
    %4666 = vmatprep.subr.mxu0 0.0
    %4667 = vmatpush1.msra.mxu0 %v4643
    %4668 = vmatprep.subr.mxu0 0.0
    %4669 = vmatpush1.msra.mxu0 %v4645
    %4670 = vmatprep.subr.mxu0 0.0
    %4671 = vmatpush1.msra.mxu0 0.0
    %4672 = vmatprep.subr.mxu0 0.0
    %4673 = vmatpush1.msra.mxu0 0.0
    %4674 = vmatprep.subr.mxu0 0.0
    %4675 = vmatpush1.msra.mxu0 0.0
    %4676 = vmatprep.subr.mxu0 0.0
    %4677 = vmatpush1.msra.mxu0 0.0
    %4678 = vmatprep.subr.mxu0 0.0
    %4679 = vmatpush1.msra.mxu0 0.0
    %4680 = vmatprep.subr.mxu0 0.0
    %4681 = vmatpush1.msra.mxu0 0.0
    %4682 = vmatprep.subr.mxu0 0.0
    %4683 = vmatpush1.msra.mxu0 0.0
    %4684 = vmatprep.subr.mxu0 0.0
    %4685 = vmatpush1.msra.mxu0 0.0
    %4686 = vmatprep.subr.mxu0 0.0
    %4687 = vmatpush1.msra.mxu0 0.0
    %4688 = vmatprep.subr.mxu0 0.0
    %4689 = vmatpush1.msra.mxu0 0.0
    %4690 = vmatprep.subr.mxu0 0.0
    %4691 = vmatpush1.msra.mxu0 0.0
    %4692 = vmatprep.subr.mxu0 0.0
    %4693 = vmatpush1.msra.mxu0 0.0
    %4694 = vmatprep.subr.mxu0 0.0
    %4695 = vmatpush1.msra.mxu0 0.0
    %4696 = vmatprep.subr.mxu0 0.0
    %4697 = vmatpush1.msra.mxu0 0.0
    %4698 = vmatprep.subr.mxu0 0.0
    %4699 = vmatpush1.msra.mxu0 0.0
    %4700 = vmatprep.subr.mxu0 0.0
    %4701 = vmatpush1.msra.mxu0 0.0
    %4702 = vmatprep.subr.mxu0 0.0
    %4703 = vmatpush1.msra.mxu0 0.0
    %4704 = vmatprep.subr.mxu0 0.0
    %4705 = vmatpush1.msra.mxu0 0.0
    %4706 = vmatprep.subr.mxu0 0.0
    %4707 = vmatpush1.msra.mxu0 0.0
    %4708 = vmatprep.subr.mxu0 0.0
    %4709 = vmatpush1.msra.mxu0 0.0
    %4710 = vmatprep.subr.mxu0 0.0
    %4711 = vmatpush1.msra.mxu0 0.0
    %4712 = vmatprep.subr.mxu0 0.0
    %4713 = vmatpush1.msra.mxu0 0.0
    %4714 = vmatprep.subr.mxu0 0.0
    %4715 = vmatpush1.msra.mxu0 0.0
    %4716 = vmatprep.subr.mxu0 0.0
    %4717 = vmatpush1.msra.mxu0 0.0
    %4718 = vmatprep.mubr.f32.mxu0 0.0
    %4719 = vmatmul.mubr.f32.gmra.mrb[0].mxu0 %v4542
    %v4720 = vpop.f32.mrb[0].mxu0
    %v4721 = vadd.f32 0.0, %v4720
    %v4722 = vpop.f32.mrb[0].mxu0
    %4723 = vdwg.mxu0
    %4732 = vrot.lane.b32.xlu0 %v4375, 64
    %v4733 = vpop.permute.xlu0 %4732
    %4734 = vrot.lane.b32.xlu0 %v4376, 64
    %v4735 = vpop.permute.xlu0 %4734
    %4736 = vrot.lane.b32.xlu0 %v4377, 64
    %v4737 = vpop.permute.xlu0 %4736
    %4738 = vrot.lane.b32.xlu0 %v4378, 64
    %v4739 = vpop.permute.xlu0 %4738
    %4740 = vrot.lane.b32.xlu0 %v4379, 64
    %v4741 = vpop.permute.xlu0 %4740
    %4742 = vrot.lane.b32.xlu0 %v4380, 64
    %v4743 = vpop.permute.xlu0 %4742
    %4744 = vrot.lane.b32.xlu0 %v4381, 64
    %v4745 = vpop.permute.xlu0 %4744
    %4746 = vrot.lane.b32.xlu0 %v4382, 64
    %v4747 = vpop.permute.xlu0 %4746
    %4756 = vmatprep.subr.mxu0 0.0
    %4757 = vmatpush1.msra.mxu0 %v4733
    %4758 = vmatprep.subr.mxu0 0.0
    %4759 = vmatpush1.msra.mxu0 %v4735
    %4760 = vmatprep.subr.mxu0 0.0
    %4761 = vmatpush1.msra.mxu0 %v4737
    %4762 = vmatprep.subr.mxu0 0.0
    %4763 = vmatpush1.msra.mxu0 %v4739
    %4764 = vmatprep.subr.mxu0 0.0
    %4765 = vmatpush1.msra.mxu0 %v4741
    %4766 = vmatprep.subr.mxu0 0.0
    %4767 = vmatpush1.msra.mxu0 %v4743
    %4768 = vmatprep.subr.mxu0 0.0
    %4769 = vmatpush1.msra.mxu0 %v4745
    %4770 = vmatprep.subr.mxu0 0.0
    %4771 = vmatpush1.msra.mxu0 %v4747
    %4772 = vmatprep.subr.mxu0 0.0
    %4773 = vmatpush1.msra.mxu0 0.0
    %4774 = vmatprep.subr.mxu0 0.0
    %4775 = vmatpush1.msra.mxu0 0.0
    %4776 = vmatprep.subr.mxu0 0.0
    %4777 = vmatpush1.msra.mxu0 0.0
    %4778 = vmatprep.subr.mxu0 0.0
    %4779 = vmatpush1.msra.mxu0 0.0
    %4780 = vmatprep.subr.mxu0 0.0
    %4781 = vmatpush1.msra.mxu0 0.0
    %4782 = vmatprep.subr.mxu0 0.0
    %4783 = vmatpush1.msra.mxu0 0.0
    %4784 = vmatprep.subr.mxu0 0.0
    %4785 = vmatpush1.msra.mxu0 0.0
    %4786 = vmatprep.subr.mxu0 0.0
    %4787 = vmatpush1.msra.mxu0 0.0
    %4788 = vmatprep.subr.mxu0 0.0
    %4789 = vmatpush1.msra.mxu0 0.0
    %4790 = vmatprep.subr.mxu0 0.0
    %4791 = vmatpush1.msra.mxu0 0.0
    %4792 = vmatprep.subr.mxu0 0.0
    %4793 = vmatpush1.msra.mxu0 0.0
    %4794 = vmatprep.subr.mxu0 0.0
    %4795 = vmatpush1.msra.mxu0 0.0
    %4796 = vmatprep.subr.mxu0 0.0
    %4797 = vmatpush1.msra.mxu0 0.0
    %4798 = vmatprep.subr.mxu0 0.0
    %4799 = vmatpush1.msra.mxu0 0.0
    %4800 = vmatprep.subr.mxu0 0.0
    %4801 = vmatpush1.msra.mxu0 0.0
    %4802 = vmatprep.subr.mxu0 0.0
    %4803 = vmatpush1.msra.mxu0 0.0
    %4804 = vmatprep.subr.mxu0 0.0
    %4805 = vmatpush1.msra.mxu0 0.0
    %4806 = vmatprep.subr.mxu0 0.0
    %4807 = vmatpush1.msra.mxu0 0.0
    %4808 = vmatprep.subr.mxu0 0.0
    %4809 = vmatpush1.msra.mxu0 0.0
    %4810 = vmatprep.subr.mxu0 0.0
    %4811 = vmatpush1.msra.mxu0 0.0
    %4812 = vmatprep.subr.mxu0 0.0
    %4813 = vmatpush1.msra.mxu0 0.0
    %4814 = vmatprep.subr.mxu0 0.0
    %4815 = vmatpush1.msra.mxu0 0.0
    %4816 = vmatprep.subr.mxu0 0.0
    %4817 = vmatpush1.msra.mxu0 0.0
    %4818 = vmatprep.subr.mxu0 0.0
    %4819 = vmatpush1.msra.mxu0 0.0
    %4820 = vmatprep.mubr.f32.mxu0 0.0
    %4821 = vmatmul.mubr.f32.gmra.mrb[0].mxu0 %v4545
    %v4822 = vpop.f32.mrb[0].mxu0
    %v4823 = vadd.f32 0.0, %v4822
    %v4824 = vpop.f32.mrb[0].mxu0
    %4825 = vdwg.mxu0
    %v4826 = vrcp.pop %v4614
    %v4827 = vrcp.pop %v4619
    %v4828 = vmul.f32 %v4721, %v4826
    %v4829 = vmul.f32 %v4823, %v4827
    %v4831 = vsel %vm238, %v4828, 0
    %v4834 = vsel %vm238, %v4829, 0
    %4836 = vmatprep.subr.mxu0 0.0
    %4837 = vmatpush1.msra.mxu0 %v2701
    %4838 = vmatprep.subr.mxu0 0.0
    %4839 = vmatpush1.msra.mxu0 %v2702
    %4840 = vmatprep.subr.mxu0 0.0
    %4841 = vmatpush1.msra.mxu0 %v2703
    %4842 = vmatprep.subr.mxu0 0.0
    %4843 = vmatpush1.msra.mxu0 %v2704
    %4844 = vmatprep.subr.mxu0 0.0
    %4845 = vmatpush1.msra.mxu0 0.0
    %4846 = vmatprep.subr.mxu0 0.0
    %4847 = vmatpush1.msra.mxu0 0.0
    %4848 = vmatprep.subr.mxu0 0.0
    %4849 = vmatpush1.msra.mxu0 0.0
    %4850 = vmatprep.subr.mxu0 0.0
    %4851 = vmatpush1.msra.mxu0 0.0
    %4852 = vmatprep.subr.mxu0 0.0
    %4853 = vmatpush1.msra.mxu0 0.0
    %4854 = vmatprep.subr.mxu0 0.0
    %4855 = vmatpush1.msra.mxu0 0.0
    %4856 = vmatprep.subr.mxu0 0.0
    %4857 = vmatpush1.msra.mxu0 0.0
    %4858 = vmatprep.subr.mxu0 0.0
    %4859 = vmatpush1.msra.mxu0 0.0
    %4860 = vmatprep.subr.mxu0 0.0
    %4861 = vmatpush1.msra.mxu0 0.0
    %4862 = vmatprep.subr.mxu0 0.0
    %4863 = vmatpush1.msra.mxu0 0.0
    %4864 = vmatprep.subr.mxu0 0.0
    %4865 = vmatpush1.msra.mxu0 0.0
    %4866 = vmatprep.subr.mxu0 0.0
    %4867 = vmatpush1.msra.mxu0 0.0
    %4868 = vmatprep.subr.mxu0 0.0
    %4869 = vmatpush1.msra.mxu0 0.0
    %4870 = vmatprep.subr.mxu0 0.0
    %4871 = vmatpush1.msra.mxu0 0.0
    %4872 = vmatprep.subr.mxu0 0.0
    %4873 = vmatpush1.msra.mxu0 0.0
    %4874 = vmatprep.subr.mxu0 0.0
    %4875 = vmatpush1.msra.mxu0 0.0
    %4876 = vmatprep.subr.mxu0 0.0
    %4877 = vmatpush1.msra.mxu0 0.0
    %4878 = vmatprep.subr.mxu0 0.0
    %4879 = vmatpush1.msra.mxu0 0.0
    %4880 = vmatprep.subr.mxu0 0.0
    %4881 = vmatpush1.msra.mxu0 0.0
    %4882 = vmatprep.subr.mxu0 0.0
    %4883 = vmatpush1.msra.mxu0 0.0
    %4884 = vmatprep.subr.mxu0 0.0
    %4885 = vmatpush1.msra.mxu0 0.0
    %4886 = vmatprep.subr.mxu0 0.0
    %4887 = vmatpush1.msra.mxu0 0.0
    %4888 = vmatprep.subr.mxu0 0.0
    %4889 = vmatpush1.msra.mxu0 0.0
    %4890 = vmatprep.subr.mxu0 0.0
    %4891 = vmatpush1.msra.mxu0 0.0
    %4892 = vmatprep.subr.mxu0 0.0
    %4893 = vmatpush1.msra.mxu0 0.0
    %4894 = vmatprep.subr.mxu0 0.0
    %4895 = vmatpush1.msra.mxu0 0.0
    %4896 = vmatprep.subr.mxu0 0.0
    %4897 = vmatpush1.msra.mxu0 0.0
    %4898 = vmatprep.subr.mxu0 0.0
    %4899 = vmatpush1.msra.mxu0 0.0
    %4900 = vmatprep.mubr.f32.mxu0 0.0
    %4901 = vmatmul.mubr.f32.gmra.mrb[0].mxu0 %v4831
    %v4902 = vpop.f32.mrb[0].mxu0
    %v4903 = vadd.f32 %v3609, %v4902
    %v4904 = vpop.f32.mrb[0].mxu0
    %4905 = vmatprep.mubr.f32.mxu0 0.0
    %4906 = vmatmul.mubr.f32.gmra.mrb[0].mxu0 %v4834
    %v4907 = vpop.f32.mrb[0].mxu0
    %v4908 = vadd.f32 %v3609, %v4907
    %v4909 = vpop.f32.mrb[0].mxu0
    %4910 = vdwg.mxu0
    %v4911 = vadd.f32 %v3962, %v4903
    %v4912 = vadd.f32 %v3963, %v4908
    %v4913 = vsel %vm238, %v4911, 0.0
    %4914 = vadd.xlane.f32.xlu0 %v4913
    %v4915 = vpop.xlane.xlu0 %4914
    %v4916 = vsel %vm238, %v4912, 0.0
    %4917 = vadd.xlane.f32.xlu0 %v4916
    %v4918 = vpop.xlane.xlu0 %4917
    %v4919 = vmul.f32 %v4915, %v1245
    %v4920 = vmul.f32 %v4918, %v1245
    %v4921 = vmul.f32 %v4911, %v4911
    %v4922 = vmul.f32 %v4912, %v4912
    %v4923 = vsel %vm238, %v4921, 0.0
    %4924 = vadd.xlane.f32.xlu0 %v4923
    %v4925 = vpop.xlane.xlu0 %4924
    %v4926 = vsel %vm238, %v4922, 0.0
    %4927 = vadd.xlane.f32.xlu0 %v4926
    %v4928 = vpop.xlane.xlu0 %4927
    %v4929 = vmul.f32 %v4925, %v1245
    %v4930 = vmul.f32 %v4928, %v1245
    %v4931 = vmul.f32 %v4919, %v4919
    %v4932 = vmul.f32 %v4920, %v4920
    %v4933 = vsub.f32 %v4929, %v4931
    %v4934 = vsub.f32 %v4930, %v4932
    %v4935 = vsub.f32 %v4911, %v4919
    %v4936 = vsub.f32 %v4912, %v4920
    %v4937 = vadd.f32 %v4933, 1e-05
    %v4938 = vadd.f32 %v4934, 1e-05
    %v4939 = vrsqrt.pop %v4937
    %v4940 = vrsqrt.pop %v4938
    %v4941 = vmul.f32 %v4935, %v4939
    %v4942 = vmul.f32 %v4936, %v4940
    %v4943 = vmul.f32 %v4941, %v3728
    %v4944 = vmul.f32 %v4942, %v3728
    %v4945 = vadd.f32 %v4943, %v3736
    %v4946 = vadd.f32 %v4944, %v3736
    %v4948 = vsel %vm238, %v4945, 0
    %v4951 = vsel %vm238, %v4946, 0
    %4953 = vmatprep.subr.mxu0 0.0
    %4954 = vmatpush1.msra.mxu0 %v2712
    %4955 = vmatprep.subr.mxu0 0.0
    %4956 = vmatpush1.msra.mxu0 %v2713
    %4957 = vmatprep.subr.mxu0 0.0
    %4958 = vmatpush1.msra.mxu0 %v2714
    %4959 = vmatprep.subr.mxu0 0.0
    %4960 = vmatpush1.msra.mxu0 %v2715
    %4961 = vmatprep.subr.mxu0 0.0
    %4962 = vmatpush1.msra.mxu0 0.0
    %4963 = vmatprep.subr.mxu0 0.0
    %4964 = vmatpush1.msra.mxu0 0.0
    %4965 = vmatprep.subr.mxu0 0.0
    %4966 = vmatpush1.msra.mxu0 0.0
    %4967 = vmatprep.subr.mxu0 0.0
    %4968 = vmatpush1.msra.mxu0 0.0
    %4969 = vmatprep.subr.mxu0 0.0
    %4970 = vmatpush1.msra.mxu0 0.0
    %4971 = vmatprep.subr.mxu0 0.0
    %4972 = vmatpush1.msra.mxu0 0.0
    %4973 = vmatprep.subr.mxu0 0.0
    %4974 = vmatpush1.msra.mxu0 0.0
    %4975 = vmatprep.subr.mxu0 0.0
    %4976 = vmatpush1.msra.mxu0 0.0
    %4977 = vmatprep.subr.mxu0 0.0
    %4978 = vmatpush1.msra.mxu0 0.0
    %4979 = vmatprep.subr.mxu0 0.0
    %4980 = vmatpush1.msra.mxu0 0.0
    %4981 = vmatprep.subr.mxu0 0.0
    %4982 = vmatpush1.msra.mxu0 0.0
    %4983 = vmatprep.subr.mxu0 0.0
    %4984 = vmatpush1.msra.mxu0 0.0
    %4985 = vmatprep.subr.mxu0 0.0
    %4986 = vmatpush1.msra.mxu0 0.0
    %4987 = vmatprep.subr.mxu0 0.0
    %4988 = vmatpush1.msra.mxu0 0.0
    %4989 = vmatprep.subr.mxu0 0.0
    %4990 = vmatpush1.msra.mxu0 0.0
    %4991 = vmatprep.subr.mxu0 0.0
    %4992 = vmatpush1.msra.mxu0 0.0
    %4993 = vmatprep.subr.mxu0 0.0
    %4994 = vmatpush1.msra.mxu0 0.0
    %4995 = vmatprep.subr.mxu0 0.0
    %4996 = vmatpush1.msra.mxu0 0.0
    %4997 = vmatprep.subr.mxu0 0.0
    %4998 = vmatpush1.msra.mxu0 0.0
    %4999 = vmatprep.subr.mxu0 0.0
    %5000 = vmatpush1.msra.mxu0 0.0
    %5001 = vmatprep.subr.mxu0 0.0
    %5002 = vmatpush1.msra.mxu0 0.0
    %5003 = vmatprep.subr.mxu0 0.0
    %5004 = vmatpush1.msra.mxu0 0.0
    %5005 = vmatprep.subr.mxu0 0.0
    %5006 = vmatpush1.msra.mxu0 0.0
    %5007 = vmatprep.subr.mxu0 0.0
    %5008 = vmatpush1.msra.mxu0 0.0
    %5009 = vmatprep.subr.mxu0 0.0
    %5010 = vmatpush1.msra.mxu0 0.0
    %5011 = vmatprep.subr.mxu0 0.0
    %5012 = vmatpush1.msra.mxu0 0.0
    %5013 = vmatprep.subr.mxu0 0.0
    %5014 = vmatpush1.msra.mxu0 0.0
    %5015 = vmatprep.subr.mxu0 0.0
    %5016 = vmatpush1.msra.mxu0 0.0
    %5017 = vmatprep.mubr.f32.mxu0 0.0
    %5018 = vmatmul.mubr.f32.gmra.mrb[0].mxu0 %v4948
    %v5019 = vpop.f32.mrb[0].mxu0
    %v5020 = vadd.f32 %v3744, %v5019
    %v5021 = vpop.f32.mrb[0].mxu0
    %5022 = vmatprep.mubr.f32.mxu0 0.0
    %5023 = vmatmul.mubr.f32.gmra.mrb[0].mxu0 %v4951
    %v5024 = vpop.f32.mrb[0].mxu0
    %v5025 = vadd.f32 %v3744, %v5024
    %v5026 = vpop.f32.mrb[0].mxu0
    %5027 = vdwg.mxu0
    %v5028 = vmax.f32 %v5020, 0.0
    %v5029 = vmax.f32 %v5025, 0.0
    %v5031 = vsel %vm848, %v5028, 0
    %v5034 = vsel %vm848, %v5029, 0
    %5036 = vmatprep.subr.mxu0 0.0
    %5037 = vmatpush1.msra.mxu0 %v2719
    %5038 = vmatprep.subr.mxu0 0.0
    %5039 = vmatpush1.msra.mxu0 %v2720
    %5040 = vmatprep.subr.mxu0 0.0
    %5041 = vmatpush1.msra.mxu0 %v2721
    %5042 = vmatprep.subr.mxu0 0.0
    %5043 = vmatpush1.msra.mxu0 %v2722
    %5044 = vmatprep.subr.mxu0 0.0
    %5045 = vmatpush1.msra.mxu0 %v2723
    %5046 = vmatprep.subr.mxu0 0.0
    %5047 = vmatpush1.msra.mxu0 %v2724
    %5048 = vmatprep.subr.mxu0 0.0
    %5049 = vmatpush1.msra.mxu0 %v2725
    %5050 = vmatprep.subr.mxu0 0.0
    %5051 = vmatpush1.msra.mxu0 %v2726
    %5052 = vmatprep.subr.mxu0 0.0
    %5053 = vmatpush1.msra.mxu0 0.0
    %5054 = vmatprep.subr.mxu0 0.0
    %5055 = vmatpush1.msra.mxu0 0.0
    %5056 = vmatprep.subr.mxu0 0.0
    %5057 = vmatpush1.msra.mxu0 0.0
    %5058 = vmatprep.subr.mxu0 0.0
    %5059 = vmatpush1.msra.mxu0 0.0
    %5060 = vmatprep.subr.mxu0 0.0
    %5061 = vmatpush1.msra.mxu0 0.0
    %5062 = vmatprep.subr.mxu0 0.0
    %5063 = vmatpush1.msra.mxu0 0.0
    %5064 = vmatprep.subr.mxu0 0.0
    %5065 = vmatpush1.msra.mxu0 0.0
    %5066 = vmatprep.subr.mxu0 0.0
    %5067 = vmatpush1.msra.mxu0 0.0
    %5068 = vmatprep.subr.mxu0 0.0
    %5069 = vmatpush1.msra.mxu0 0.0
    %5070 = vmatprep.subr.mxu0 0.0
    %5071 = vmatpush1.msra.mxu0 0.0
    %5072 = vmatprep.subr.mxu0 0.0
    %5073 = vmatpush1.msra.mxu0 0.0
    %5074 = vmatprep.subr.mxu0 0.0
    %5075 = vmatpush1.msra.mxu0 0.0
    %5076 = vmatprep.subr.mxu0 0.0
    %5077 = vmatpush1.msra.mxu0 0.0
    %5078 = vmatprep.subr.mxu0 0.0
    %5079 = vmatpush1.msra.mxu0 0.0
    %5080 = vmatprep.subr.mxu0 0.0
    %5081 = vmatpush1.msra.mxu0 0.0
    %5082 = vmatprep.subr.mxu0 0.0
    %5083 = vmatpush1.msra.mxu0 0.0
    %5084 = vmatprep.subr.mxu0 0.0
    %5085 = vmatpush1.msra.mxu0 0.0
    %5086 = vmatprep.subr.mxu0 0.0
    %5087 = vmatpush1.msra.mxu0 0.0
    %5088 = vmatprep.subr.mxu0 0.0
    %5089 = vmatpush1.msra.mxu0 0.0
    %5090 = vmatprep.subr.mxu0 0.0
    %5091 = vmatpush1.msra.mxu0 0.0
    %5092 = vmatprep.subr.mxu0 0.0
    %5093 = vmatpush1.msra.mxu0 0.0
    %5094 = vmatprep.subr.mxu0 0.0
    %5095 = vmatpush1.msra.mxu0 0.0
    %5096 = vmatprep.subr.mxu0 0.0
    %5097 = vmatpush1.msra.mxu0 0.0
    %5098 = vmatprep.subr.mxu0 0.0
    %5099 = vmatpush1.msra.mxu0 0.0
    %5100 = vmatprep.mubr.f32.mxu0 0.0
    %5101 = vmatmul.mubr.f32.gmra.mrb[0].mxu0 %v5031
    %v5102 = vpop.f32.mrb[0].mxu0
    %v5103 = vadd.f32 %v3833, %v5102
    %v5104 = vpop.f32.mrb[0].mxu0
    %5105 = vmatprep.mubr.f32.mxu0 0.0
    %5106 = vmatmul.mubr.f32.gmra.mrb[0].mxu0 %v5034
    %v5107 = vpop.f32.mrb[0].mxu0
    %v5108 = vadd.f32 %v3833, %v5107
    %v5109 = vpop.f32.mrb[0].mxu0
    %5110 = vdwg.mxu0
    %v5111 = vadd.f32 %v4945, %v5103
    %v5112 = vadd.f32 %v4946, %v5108
    %v5113 = vsel %vm238, %v5111, 0.0
    %5114 = vadd.xlane.f32.xlu0 %v5113
    %v5115 = vpop.xlane.xlu0 %5114
    %v5116 = vsel %vm238, %v5112, 0.0
    %5117 = vadd.xlane.f32.xlu0 %v5116
    %v5118 = vpop.xlane.xlu0 %5117
    %v5119 = vmul.f32 %v5115, %v1245
    %v5120 = vmul.f32 %v5118, %v1245
    %v5121 = vmul.f32 %v5111, %v5111
    %v5122 = vmul.f32 %v5112, %v5112
    %v5123 = vsel %vm238, %v5121, 0.0
    %5124 = vadd.xlane.f32.xlu0 %v5123
    %v5125 = vpop.xlane.xlu0 %5124
    %v5126 = vsel %vm238, %v5122, 0.0
    %5127 = vadd.xlane.f32.xlu0 %v5126
    %v5128 = vpop.xlane.xlu0 %5127
    %v5129 = vmul.f32 %v5125, %v1245
    %v5130 = vmul.f32 %v5128, %v1245
    %v5131 = vmul.f32 %v5119, %v5119
    %v5132 = vmul.f32 %v5120, %v5120
    %v5133 = vsub.f32 %v5129, %v5131
    %v5134 = vsub.f32 %v5130, %v5132
    %v5135 = vsub.f32 %v5111, %v5119
    %v5136 = vsub.f32 %v5112, %v5120
    %v5137 = vadd.f32 %v5133, 1e-05
    %v5138 = vadd.f32 %v5134, 1e-05
    %v5139 = vrsqrt.pop %v5137
    %v5140 = vrsqrt.pop %v5138
    %v5141 = vmul.f32 %v5135, %v5139
    %v5142 = vmul.f32 %v5136, %v5140
    %v5143 = vmul.f32 %v5141, %v3952
    %v5144 = vmul.f32 %v5142, %v3952
    %v5145 = vadd.f32 %v5143, %v3960
    %v5146 = vadd.f32 %v5144, %v3960
    %5147 = vst.msk [vmem:[#allocation17] sm:$0xff] %vm238, %v3962
    %5148 = vst.msk [vmem:[#allocation17 + $0x8] sm:$0xff] %vm238, %v3963
    %5149 = vst.msk [vmem:[#allocation18] sm:$0xff] %vm238, %v5145
    %5150 = vst.msk [vmem:[#allocation18 + $0x8] sm:$0xff] %vm238, %v5146
    // Predicated region
    $region106: #{transformer_cross_attn.1} parent=1 // pred_check
      _
    $region107: #{transformer_cross_attn.1} parent=1 // pred_check_branch
      %5152 = sbr.rel (0) target = $region109
    $region108: #{transformer_cross_attn.1} parent=1 // pred_region
      %s5154 = ssub.s32 256, 256
      %5155 = vsyncadd [#allocation4], %s5154
      %s5156 = sshll.u32 [#allocation17], 4
      %s5157 = int_to_ptr.vmem [resolvable:$true] %s5156
      %5162 = dma.vmem_to_hbm [thread:$0]  %s5157, 256, %s17, [#allocation4], 128, 128, 8
    $region109: #{transformer_cross_attn.1} parent=1 // pred_fallthru
      _
    // Predicated region
    $region110: #{transformer_cross_attn.1} parent=1 // pred_check
      _
    $region111: #{transformer_cross_attn.1} parent=1 // pred_check_branch
      %5164 = sbr.rel (0) target = $region113
    $region112: #{transformer_cross_attn.1} parent=1 // pred_region
      %s5166 = ssub.s32 256, 256
      %5167 = vsyncadd [#allocation19], %s5166
      %s5168 = sshll.u32 [#allocation18], 4
      %s5169 = int_to_ptr.vmem [resolvable:$true] %s5168
      %5174 = dma.vmem_to_hbm [thread:$0]  %s5169, 256, %s18, [#allocation19], 128, 128, 8
    $region113: #{transformer_cross_attn.1} parent=1 // pred_fallthru
      _
    // Predicated region
    $region114: #{transformer_cross_attn.1} parent=1 // pred_check
      _
    $region115: #{transformer_cross_attn.1} parent=1 // pred_check_branch
      %5176 = sbr.rel (0) target = $region117
    $region116: #{transformer_cross_attn.1} parent=1 // pred_region
      %5177 = dma.done [#allocation4], 256
    $region117: #{transformer_cross_attn.1} parent=1 // pred_fallthru
      _
    // Predicated region
    $region118: #{transformer_cross_attn.1} parent=1 // pred_check
      _
    $region119: #{transformer_cross_attn.1} parent=1 // pred_check_branch
      %5179 = sbr.rel (0) target = $region121
    $region120: #{transformer_cross_attn.1} parent=1 // pred_region
      %5180 = dma.done [#allocation19], 256
    $region121: #{transformer_cross_attn.1} parent=1 // pred_fallthru
      _
    %5181 = vsyncpa [#allocation3], 1
    %5182 = vsyncpa [#allocation6], 1
    %5183 = vsyncpa [#allocation9], 1
    %5184 = vsyncpa [#allocation12], 1
    %5185 = vsyncpa [#allocation15], 1
    %5186 = vsyncpa [#allocation4], 1
    %5187 = vsyncpa [#allocation19], 1

</llo_original>
